<compile_context>
chip_gen: v6e
topology: v6e:2x2x1
jax: 0.10.0
libtpu: 0.0.40
codegen_flags: <defaults>
</compile_context>

<pallas_src>
import functools

import jax
import jax.numpy as jnp
from jax.experimental import pallas as pl
from jax.experimental.pallas import tpu as pltpu

# ----------------------------- configuration -----------------------------
N_BATCH = 2
Z_DIM = 32
NUM_CLASSES = 5
GEN_SIZE = 16          # generator output spatial size (square)
IMG_CHANNELS = 3
GF_DIM = 8             # generator base channels
DF_DIM = 8             # discriminator / encoder / classifier base channels
IMAGE_D_SIZE = 8       # resize target for image discriminator
EDGE_D_SIZE = 8        # resize target for edge discriminator


def _round_up(x, m):
    return (x + m - 1) // m * m


def _pad_cols(n):
    """Padded lane width for an N (output-feature) dimension."""
    return _round_up(n, 128)


def _col_tile(np_):
    """N tile: 256 when it divides the padded width (>=512) so v7x/v6e can
    use the full 256-wide MXU and v7x gets >=2 parallel grid steps."""
    if np_ >= 512 and np_ % 256 == 0:
        return 256
    return np_


def _pad_rows(m):
    """Padded M and M tile (256-tiles when M is large -> megacore-splittable)."""
    if m <= 256:
        mp = _round_up(m, 8)
        return mp, mp
    mp = _round_up(m, 256)
    return mp, 256


# ----------------------------- Pallas kernel ------------------------------
def _mm_bias_act_kernel(a_ref, b_ref, bias_ref, o_ref, *, act):
    # bf16 operands, f32 MXU accumulation; bias + activation fused in epilogue.
    acc = jnp.dot(a_ref[...], b_ref[...], preferred_element_type=jnp.float32)
    acc = acc + bias_ref[...]
    if act == "relu":
        acc = jnp.maximum(acc, 0.0)
    elif act == "lrelu":
        acc = jnp.where(acc > 0.0, acc, 0.2 * acc)
    elif act == "tanh":
        acc = jnp.tanh(acc)
    o_ref[...] = acc


def pallas_matmul(a, w_p, b_p, n_out, act="none"):
    """out = act(a @ W + b).

    W (bf16) and b (f32) are PRE-padded to (Kp, Np)/(1, Np) at init; only A is
    padded here.  2-D parallel grid over (M tiles, N tiles); K kept fully
    resident (max K here is 1024 -> well under VMEM).
    TODO(synk): add a K grid axis + f32 accumulator scratch if model is scaled
    up (v7x has only 64 MiB VMEM).
    """
    m, k = a.shape
    kp, np_ = w_p.shape
    mp, tm = _pad_rows(m)
    tn = _col_tile(np_)

    a_p = a.astype(jnp.bfloat16)
    if (mp, kp) != (m, k):
        a_p = jnp.pad(a_p, ((0, mp - m), (0, kp - k)))

    out = pl.pallas_call(
        functools.partial(_mm_bias_act_kernel, act=act),
        out_shape=jax.ShapeDtypeStruct((mp, np_), jnp.float32),
        grid=(mp // tm, np_ // tn),
        in_specs=[
            pl.BlockSpec((tm, kp), lambda i, j: (i, 0)),
            pl.BlockSpec((kp, tn), lambda i, j: (0, j)),
            pl.BlockSpec((1, tn), lambda i, j: (0, j)),
        ],
        out_specs=pl.BlockSpec((tm, tn), lambda i, j: (i, j)),
        compiler_params=pltpu.CompilerParams(
            dimension_semantics=("parallel", "parallel")),
    )(a_p, w_p, b_p)
    return out[:m, :n_out]


# ----------------------- conv via single-op im2col -------------------------
def _extract_patches(x, kh, kw, stride, pad, lhs_dilation=None):
    """im2col as ONE grouped conv with a 0/1 identity kernel (replaces the
    16-slice concat and the scatter-based deconv dilation).

    Output: [N, Ho, Wo, Cin*kh*kw] with feature ordering (Cin, kh, kw),
    i.e. input channel slowest / filter position fastest — matches _pack_conv.
    """
    c = x.shape[-1]
    sp = kh * kw
    eye = jnp.eye(sp, dtype=x.dtype).reshape(kh, kw, 1, sp)
    rhs = jnp.tile(eye, (1, 1, 1, c))                       # [kh, kw, 1, c*sp]
    return jax.lax.conv_general_dilated(
        x, rhs,
        window_strides=(stride, stride),
        padding=((pad, pad), (pad, pad)),
        lhs_dilation=lhs_dilation,
        dimension_numbers=("NHWC", "HWIO", "NHWC"),
        feature_group_count=c)


def conv2d(x, w_p, b_p, cout, kh=4, kw=4, stride=2, pad=1,
           lhs_dilation=None, act="none"):
    n, _, _, c = x.shape
    patches = _extract_patches(x, kh, kw, stride, pad, lhs_dilation)
    ho, wo = patches.shape[1], patches.shape[2]
    a = patches.reshape(n * ho * wo, c * kh * kw)
    out = pallas_matmul(a, w_p, b_p, cout, act=act)
    return out.reshape(n, ho, wo, cout)


def deconv2d(x, w_p, b_p, cout, act="none"):
    """Transposed conv (k=4, s=2, p=1) as an lhs-dilated regular conv."""
    return conv2d(x, w_p, b_p, cout, kh=4, kw=4, stride=1, pad=2,
                  lhs_dilation=(2, 2), act=act)


def resize(x, size):
    """Resize NHWC images to (size, size). (glue, bilinear)."""
    n, _, _, c = x.shape
    return jax.image.resize(x, (n, size, size, c), method="bilinear")


# --------------------------- weight packing --------------------------------
def _pack_linear(w, b):
    """Pre-pad to (Kp, Np), pre-cast W to bf16 (hoisted out of the fwd path)."""
    k, n = w.shape
    kp = _round_up(k, 128)
    np_ = _pad_cols(n)
    w_p = jnp.pad(w.astype(jnp.bfloat16), ((0, kp - k), (0, np_ - n)))
    b_p = jnp.pad(b.astype(jnp.float32)[None, :], ((0, 0), (0, np_ - n)))
    return {"w": w_p, "b": b_p}


def _pack_conv(w, b):
    """w: [kh, kw, Cin, Cout] -> matmul B with (Cin, kh, kw) row ordering."""
    kh, kw, ci, co = w.shape
    mat = jnp.transpose(w, (2, 0, 1, 3)).reshape(ci * kh * kw, co)
    return _pack_linear(mat, b)


def _rand_conv(key, kh, kw, ci, co):
    w = 0.02 * jax.random.normal(key, (kh, kw, ci, co), jnp.float32)
    return _pack_conv(w, jnp.zeros((co,), jnp.float32))


def _rand_linear(key, din, dout):
    w = 0.02 * jax.random.normal(key, (din, dout), jnp.float32)
    return _pack_linear(w, jnp.zeros((dout,), jnp.float32))


# ------------------------------- params -----------------------------------
def init_generator_pair(key, z_total):
    """Two independent DCGAN-style generators packed into ONE block-diagonal
    stack.  Exact fusion: identical results to running them separately."""
    s4 = GEN_SIZE // 4
    gf4, gf2 = GF_DIM * 4, GF_DIM * 2
    ke_key, ki_key = jax.random.split(key)
    ke = jax.random.split(ke_key, 3)
    ki = jax.random.split(ki_key, 3)

    def raw(k):
        return {
            "fc_w": 0.02 * jax.random.normal(k[0], (z_total, s4 * s4 * gf4),
                                             jnp.float32),
            "fc_b": jnp.zeros((s4 * s4 * gf4,), jnp.float32),
            "d1_w": 0.02 * jax.random.normal(k[1], (4, 4, gf4, gf2), jnp.float32),
            "d1_b": jnp.zeros((gf2,), jnp.float32),
            "d2_w": 0.02 * jax.random.normal(k[2], (4, 4, gf2, IMG_CHANNELS),
                                             jnp.float32),
            "d2_b": jnp.zeros((IMG_CHANNELS,), jnp.float32),
        }

    ge, gi = raw(ke), raw(ki)

    # fc: same input z for both -> concat along output channels, interleaved so
    # the reshape yields [N, s4, s4, [edge gf4 | image gf4]].
    fc_w = jnp.concatenate(
        [ge["fc_w"].reshape(z_total, s4, s4, gf4),
         gi["fc_w"].reshape(z_total, s4, s4, gf4)], axis=-1
    ).reshape(z_total, s4 * s4 * 2 * gf4)
    fc_b = jnp.concatenate(
        [ge["fc_b"].reshape(s4, s4, gf4),
         gi["fc_b"].reshape(s4, s4, gf4)], axis=-1).reshape(-1)

    def block_diag(we, wi):
        kh, kw, ci, co = we.shape
        w = jnp.zeros((kh, kw, 2 * ci, 2 * co), jnp.float32)
        w = w.at[:, :, :ci, :co].set(we)
        w = w.at[:, :, ci:, co:].set(wi)
        return w

    d1_w = block_diag(ge["d1_w"], gi["d1_w"])
    d1_b = jnp.concatenate([ge["d1_b"], gi["d1_b"]])
    d2_w = block_diag(ge["d2_w"], gi["d2_w"])
    d2_b = jnp.concatenate([ge["d2_b"], gi["d2_b"]])

    return {"fc": _pack_linear(fc_w, fc_b),
            "d1": _pack_conv(d1_w, d1_b),
            "d2": _pack_conv(d2_w, d2_b)}


def init_discriminator(key, in_h, in_w):
    k = jax.random.split(key, 3)
    flat = (in_h // 4) * (in_w // 4) * DF_DIM * 2
    return {"c1": _rand_conv(k[0], 4, 4, IMG_CHANNELS, DF_DIM),
            "c2": _rand_conv(k[1], 4, 4, DF_DIM, DF_DIM * 2),
            "fc": _rand_linear(k[2], flat, 1)}


def init_encoder(key, in_size):
    k = jax.random.split(key, 3)
    flat = (in_size // 4) * (in_size // 4) * DF_DIM * 2
    return {"c1": _rand_conv(k[0], 4, 4, IMG_CHANNELS, DF_DIM),
            "c2": _rand_conv(k[1], 4, 4, DF_DIM, DF_DIM * 2),
            "fc": _rand_linear(k[2], flat, Z_DIM)}


def init_classifier(key, in_size):
    k = jax.random.split(key, 4)
    flat = (in_size // 4) * (in_size // 4) * DF_DIM * 2
    return {"c1": _rand_conv(k[0], 4, 4, IMG_CHANNELS, DF_DIM),
            "c2": _rand_conv(k[1], 4, 4, DF_DIM, DF_DIM * 2),
            "fc1": _rand_linear(k[2], flat, 32),
            "fc2": _rand_linear(k[3], 32, NUM_CLASSES)}


def init_edgegan(key):
    k = jax.random.split(key, 6)
    z_total = Z_DIM + NUM_CLASSES
    return {
        "gen": init_generator_pair(k[0], z_total),
        "joint_disc": init_discriminator(k[1], GEN_SIZE, 2 * GEN_SIZE),
        "edge_disc": init_discriminator(k[2], EDGE_D_SIZE, EDGE_D_SIZE),
        "image_disc": init_discriminator(k[3], IMAGE_D_SIZE, IMAGE_D_SIZE),
        "encoder": init_encoder(k[4], GEN_SIZE),
        "classifier": init_classifier(k[5], GEN_SIZE),
    }


# ------------------------------ submodules ---------------------------------
def generator_pair(p, z):
    """Fused edge+image generators -> (edge_g, image_g), both NHWC."""
    s4 = GEN_SIZE // 4
    gf4, gf2 = GF_DIM * 4, GF_DIM * 2
    h0 = pallas_matmul(z, p["fc"]["w"], p["fc"]["b"],
                       s4 * s4 * 2 * gf4, act="relu")
    h0 = h0.reshape(-1, s4, s4, 2 * gf4)
    h1 = deconv2d(h0, p["d1"]["w"], p["d1"]["b"], 2 * gf2, act="relu")
    h2 = deconv2d(h1, p["d2"]["w"], p["d2"]["b"], 2 * IMG_CHANNELS, act="tanh")
    return h2[..., :IMG_CHANNELS], h2[..., IMG_CHANNELS:]


def discriminator(p, x):
    """Returns logits only (the sigmoid 'prob' output is unused by forward)."""
    h1 = conv2d(x, p["c1"]["w"], p["c1"]["b"], DF_DIM, act="lrelu")
    h2 = conv2d(h1, p["c2"]["w"], p["c2"]["b"], DF_DIM * 2, act="lrelu")
    flat = h2.reshape(h2.shape[0], -1)
    return pallas_matmul(flat, p["fc"]["w"], p["fc"]["b"], 1, act="none")


def encoder(p, x):
    h1 = conv2d(x, p["c1"]["w"], p["c1"]["b"], DF_DIM, act="lrelu")
    h2 = conv2d(h1, p["c2"]["w"], p["c2"]["b"], DF_DIM * 2, act="lrelu")
    flat = h2.reshape(h2.shape[0], -1)
    return pallas_matmul(flat, p["fc"]["w"], p["fc"]["b"], Z_DIM, act="none")


def classifier(p, x):
    h1 = conv2d(x, p["c1"]["w"], p["c1"]["b"], DF_DIM, act="lrelu")
    h2 = conv2d(h1, p["c2"]["w"], p["c2"]["b"], DF_DIM * 2, act="lrelu")
    flat = h2.reshape(h2.shape[0], -1)
    feat = pallas_matmul(flat, p["fc1"]["w"], p["fc1"]["b"], 32, act="lrelu")
    return pallas_matmul(feat, p["fc2"]["w"], p["fc2"]["b"], NUM_CLASSES,
                         act="none")


# ------------------------------ EdgeGAN fwd ---------------------------------
def edgegan_forward(params, x_nchw, z):
    # external x is NCHW [N, 3, H, 2H]; single layout copy to NHWC
    x = jnp.transpose(x_nchw, (0, 2, 3, 1))

    edge_g, image_g = generator_pair(params["gen"], z)
    # torch.cat(..., dim=3) == width concat -> NHWC axis 2
    joint_g = jnp.concatenate([edge_g, image_g], axis=2)

    # joint discriminator: true (x) and fake (joint_g) batched into one call
    joint_d = discriminator(params["joint_disc"],
                            jnp.concatenate([x, joint_g], axis=0))
    true_joint_d, fake_joint_d = jnp.split(joint_d, 2, axis=0)

    crop = x.shape[2] // 2
    images = x[:, :, crop:, :]
    edges = x[:, :, :crop, :]

    # image discriminator: one resize + one disc call for (true | fake)
    image_pair = jnp.concatenate([images, image_g], axis=0)
    image_d = discriminator(params["image_disc"],
                            resize(image_pair, IMAGE_D_SIZE))
    true_image_d, fake_image_d = jnp.split(image_d, 2, axis=0)

    # edge discriminator: one resize + one disc call for (true | fake)
    edge_pair = jnp.concatenate([edges, edge_g], axis=0)
    edge_d = discriminator(params["edge_disc"],
                           resize(edge_pair, EDGE_D_SIZE))
    true_edge_d, fake_edge_d = jnp.split(edge_d, 2, axis=0)

    # classifier shares the (images | image_g) batch with the image disc input
    image_c = classifier(params["classifier"], image_pair)
    true_image_c, fake_image_c = jnp.split(image_c, 2, axis=0)

    e_output = encoder(params["encoder"], edge_g)

    joint_g_nchw = jnp.transpose(joint_g, (0, 3, 1, 2))   # back to NCHW
    aux = {
        "true_joint_d": true_joint_d, "fake_joint_d": fake_joint_d,
        "true_image_d": true_image_d, "fake_image_d": fake_image_d,
        "true_edge_d": true_edge_d, "fake_edge_d": fake_edge_d,
        "true_image_c": true_image_c, "fake_image_c": fake_image_c,
        "e_output": e_output,
    }
    return joint_g_nchw, aux


# --------------------------------- main -------------------------------------
if __name__ == "__main__":
    key = jax.random.PRNGKey(0)
    k_params, k_x, k_z = jax.random.split(key, 3)

    params = init_edgegan(k_params)
    # x: NCHW image pair (edge | image) concatenated along width
    x = jax.random.normal(k_x, (N_BATCH, IMG_CHANNELS, GEN_SIZE, 2 * GEN_SIZE),
                          jnp.float32)
    # z: latent (Z_DIM) + class code (NUM_CLASSES)
    z = jax.random.normal(k_z, (N_BATCH, Z_DIM + NUM_CLASSES), jnp.float32)

    fwd = jax.jit(edgegan_forward)
    joint_g, aux = fwd(params, x, z)
    jax.block_until_ready(joint_g)
    jax.block_until_ready(aux)

    assert joint_g.shape == (N_BATCH, IMG_CHANNELS, GEN_SIZE, 2 * GEN_SIZE)
    assert aux["e_output"].shape == (N_BATCH, Z_DIM)
    assert aux["true_image_c"].shape == (N_BATCH, NUM_CLASSES)
    assert aux["true_joint_d"].shape == (N_BATCH, 1)
    print("KERNEL_OK")
</pallas_src>

<mosaic_0001>
module attributes {stable_mosaic.version = 11 : i64} {
  func.func @_mm_bias_act_kernel(%arg0: i32, %arg1: i32, %arg2: memref<8x128xbf16, #tpu.memory_space<vmem>>, %arg3: memref<128x256xbf16, #tpu.memory_space<vmem>>, %arg4: memref<1x256xf32, #tpu.memory_space<vmem>>, %arg5: memref<8x256xf32, #tpu.memory_space<vmem>>) attributes {dimension_semantics = [#tpu.dimension_semantics<parallel>, #tpu.dimension_semantics<parallel>], iteration_bounds = array<i64: 1, 4>, scalar_prefetch = 0 : i64, scratch_operands = 0 : i64, tpu.core_type = #tpu.core_type<tc>, window_params = [{transform_indices = @transform_0, window_bounds = array<i64: 8, 128>}, {transform_indices = @transform_1, window_bounds = array<i64: 128, 256>}, {transform_indices = @transform_2, window_bounds = array<i64: 1, 256>}, {transform_indices = @transform_3, window_bounds = array<i64: 8, 256>}]} {
    %c0 = arith.constant 0 : index
    %c0_0 = arith.constant 0 : index
    %0 = vector.load %arg2[%c0, %c0_0] : memref<8x128xbf16, #tpu.memory_space<vmem>>, vector<8x128xbf16>
    %c0_1 = arith.constant 0 : index
    %c0_2 = arith.constant 0 : index
    %1 = vector.load %arg3[%c0_1, %c0_2] : memref<128x256xbf16, #tpu.memory_space<vmem>>, vector<128x256xbf16>
    %cst = arith.constant dense<0.000000e+00> : vector<8x256xf32>
    %2 = tpu.matmul %0, %1, %cst {dimension_numbers = #tpu.dot_dimension_numbers<[1], [0], [0], [1], [0, 0, 1, 1], [], []>} : vector<8x128xbf16>, vector<128x256xbf16>, vector<8x256xf32> -> vector<8x256xf32>
    %c0_3 = arith.constant 0 : index
    %c0_4 = arith.constant 0 : index
    %3 = vector.load %arg4[%c0_3, %c0_4] : memref<1x256xf32, #tpu.memory_space<vmem>>, vector<1x256xf32>
    %4 = vector.broadcast %3 : vector<1x256xf32> to vector<8x256xf32>
    %5 = arith.addf %2, %4 : vector<8x256xf32>
    %cst_5 = arith.constant 0.000000e+00 : f32
    %6 = vector.broadcast %cst_5 : f32 to vector<8x256xf32>
    %7 = arith.maximumf %5, %6 : vector<8x256xf32>
    %c0_6 = arith.constant 0 : index
    %c0_7 = arith.constant 0 : index
    %8 = vector.load %arg5[%c0_6, %c0_7] : memref<8x256xf32, #tpu.memory_space<vmem>>, vector<8x256xf32>
    tpu.vector_store %arg5[%c0_6, %c0_7], %7 {strides = array<i32>} : memref<8x256xf32, #tpu.memory_space<vmem>>, vector<8x256xf32>,
    return
  }
  func.func @transform_0(%arg0: i32, %arg1: i32) -> (i32, i32) {
    %c0_i32 = arith.constant 0 : i32
    %c0_i32_0 = arith.constant 0 : i32
    return %arg0, %c0_i32 : i32, i32
  }
  func.func @transform_1(%arg0: i32, %arg1: i32) -> (i32, i32) {
    %c0_i32 = arith.constant 0 : i32
    %c0_i32_0 = arith.constant 0 : i32
    return %c0_i32, %arg1 : i32, i32
  }
  func.func @transform_2(%arg0: i32, %arg1: i32) -> (i32, i32) {
    %c0_i32 = arith.constant 0 : i32
    %c0_i32_0 = arith.constant 0 : i32
    return %c0_i32, %arg1 : i32, i32
  }
  func.func @transform_3(%arg0: i32, %arg1: i32) -> (i32, i32) {
    %c0_i32 = arith.constant 0 : i32
    return %arg0, %arg1 : i32, i32
  }
}

module attributes {stable_mosaic.version = 11 : i64} {
  func.func @_mm_bias_act_kernel(%arg0: i32, %arg1: i32, %arg2: memref<128x1024xbf16, #tpu.memory_space<vmem>>, %arg3: memref<1024x128xbf16, #tpu.memory_space<vmem>>, %arg4: memref<1x128xf32, #tpu.memory_space<vmem>>, %arg5: memref<128x128xf32, #tpu.memory_space<vmem>>) attributes {dimension_semantics = [#tpu.dimension_semantics<parallel>, #tpu.dimension_semantics<parallel>], iteration_bounds = array<i64: 1, 1>, scalar_prefetch = 0 : i64, scratch_operands = 0 : i64, tpu.core_type = #tpu.core_type<tc>, window_params = [{transform_indices = @transform_0, window_bounds = array<i64: 128, 1024>}, {transform_indices = @transform_1, window_bounds = array<i64: 1024, 128>}, {transform_indices = @transform_2, window_bounds = array<i64: 1, 128>}, {transform_indices = @transform_3, window_bounds = array<i64: 128, 128>}]} {
    %c0 = arith.constant 0 : index
    %c0_0 = arith.constant 0 : index
    %0 = vector.load %arg2[%c0, %c0_0] : memref<128x1024xbf16, #tpu.memory_space<vmem>>, vector<128x1024xbf16>
    %c0_1 = arith.constant 0 : index
    %c0_2 = arith.constant 0 : index
    %1 = vector.load %arg3[%c0_1, %c0_2] : memref<1024x128xbf16, #tpu.memory_space<vmem>>, vector<1024x128xbf16>
    %cst = arith.constant dense<0.000000e+00> : vector<128x128xf32>
    %2 = tpu.matmul %0, %1, %cst {dimension_numbers = #tpu.dot_dimension_numbers<[1], [0], [0], [1], [0, 0, 1, 1], [], []>} : vector<128x1024xbf16>, vector<1024x128xbf16>, vector<128x128xf32> -> vector<128x128xf32>
    %c0_3 = arith.constant 0 : index
    %c0_4 = arith.constant 0 : index
    %3 = vector.load %arg4[%c0_3, %c0_4] : memref<1x128xf32, #tpu.memory_space<vmem>>, vector<1x128xf32>
    %4 = vector.broadcast %3 : vector<1x128xf32> to vector<128x128xf32>
    %5 = arith.addf %2, %4 : vector<128x128xf32>
    %cst_5 = arith.constant 0.000000e+00 : f32
    %6 = vector.broadcast %cst_5 : f32 to vector<128x128xf32>
    %7 = arith.maximumf %5, %6 : vector<128x128xf32>
    %c0_6 = arith.constant 0 : index
    %c0_7 = arith.constant 0 : index
    %8 = vector.load %arg5[%c0_6, %c0_7] : memref<128x128xf32, #tpu.memory_space<vmem>>, vector<128x128xf32>
    tpu.vector_store %arg5[%c0_6, %c0_7], %7 {strides = array<i32>} : memref<128x128xf32, #tpu.memory_space<vmem>>, vector<128x128xf32>,
    return
  }
  func.func @transform_0(%arg0: i32, %arg1: i32) -> (i32, i32) {
    %c0_i32 = arith.constant 0 : i32
    %c0_i32_0 = arith.constant 0 : i32
    return %arg0, %c0_i32 : i32, i32
  }
  func.func @transform_1(%arg0: i32, %arg1: i32) -> (i32, i32) {
    %c0_i32 = arith.constant 0 : i32
    %c0_i32_0 = arith.constant 0 : i32
    return %c0_i32, %arg1 : i32, i32
  }
  func.func @transform_2(%arg0: i32, %arg1: i32) -> (i32, i32) {
    %c0_i32 = arith.constant 0 : i32
    %c0_i32_0 = arith.constant 0 : i32
    return %c0_i32, %arg1 : i32, i32
  }
  func.func @transform_3(%arg0: i32, %arg1: i32) -> (i32, i32) {
    %c0_i32 = arith.constant 0 : i32
    return %arg0, %arg1 : i32, i32
  }
}

module attributes {stable_mosaic.version = 11 : i64} {
  func.func @_mm_bias_act_kernel(%arg0: i32, %arg1: i32, %arg2: memref<256x512xbf16, #tpu.memory_space<vmem>>, %arg3: memref<512x128xbf16, #tpu.memory_space<vmem>>, %arg4: memref<1x128xf32, #tpu.memory_space<vmem>>, %arg5: memref<256x128xf32, #tpu.memory_space<vmem>>) attributes {dimension_semantics = [#tpu.dimension_semantics<parallel>, #tpu.dimension_semantics<parallel>], iteration_bounds = array<i64: 2, 1>, scalar_prefetch = 0 : i64, scratch_operands = 0 : i64, tpu.core_type = #tpu.core_type<tc>, window_params = [{transform_indices = @transform_0, window_bounds = array<i64: 256, 512>}, {transform_indices = @transform_1, window_bounds = array<i64: 512, 128>}, {transform_indices = @transform_2, window_bounds = array<i64: 1, 128>}, {transform_indices = @transform_3, window_bounds = array<i64: 256, 128>}]} {
    %c0 = arith.constant 0 : index
    %c0_0 = arith.constant 0 : index
    %0 = vector.load %arg2[%c0, %c0_0] : memref<256x512xbf16, #tpu.memory_space<vmem>>, vector<256x512xbf16>
    %c0_1 = arith.constant 0 : index
    %c0_2 = arith.constant 0 : index
    %1 = vector.load %arg3[%c0_1, %c0_2] : memref<512x128xbf16, #tpu.memory_space<vmem>>, vector<512x128xbf16>
    %cst = arith.constant dense<0.000000e+00> : vector<256x128xf32>
    %2 = tpu.matmul %0, %1, %cst {dimension_numbers = #tpu.dot_dimension_numbers<[1], [0], [0], [1], [0, 0, 1, 1], [], []>} : vector<256x512xbf16>, vector<512x128xbf16>, vector<256x128xf32> -> vector<256x128xf32>
    %c0_3 = arith.constant 0 : index
    %c0_4 = arith.constant 0 : index
    %3 = vector.load %arg4[%c0_3, %c0_4] : memref<1x128xf32, #tpu.memory_space<vmem>>, vector<1x128xf32>
    %4 = vector.broadcast %3 : vector<1x128xf32> to vector<256x128xf32>
    %5 = arith.addf %2, %4 : vector<256x128xf32>
    %6 = math.tanh %5 : vector<256x128xf32>
    %c0_5 = arith.constant 0 : index
    %c0_6 = arith.constant 0 : index
    %7 = vector.load %arg5[%c0_5, %c0_6] : memref<256x128xf32, #tpu.memory_space<vmem>>, vector<256x128xf32>
    tpu.vector_store %arg5[%c0_5, %c0_6], %6 {strides = array<i32>} : memref<256x128xf32, #tpu.memory_space<vmem>>, vector<256x128xf32>,
    return
  }
  func.func @transform_0(%arg0: i32, %arg1: i32) -> (i32, i32) {
    %c0_i32 = arith.constant 0 : i32
    %c0_i32_0 = arith.constant 0 : i32
    return %arg0, %c0_i32 : i32, i32
  }
  func.func @transform_1(%arg0: i32, %arg1: i32) -> (i32, i32) {
    %c0_i32 = arith.constant 0 : i32
    %c0_i32_0 = arith.constant 0 : i32
    return %c0_i32, %arg1 : i32, i32
  }
  func.func @transform_2(%arg0: i32, %arg1: i32) -> (i32, i32) {
    %c0_i32 = arith.constant 0 : i32
    %c0_i32_0 = arith.constant 0 : i32
    return %c0_i32, %arg1 : i32, i32
  }
  func.func @transform_3(%arg0: i32, %arg1: i32) -> (i32, i32) {
    %c0_i32 = arith.constant 0 : i32
    return %arg0, %arg1 : i32, i32
  }
}

module attributes {stable_mosaic.version = 11 : i64} {
  func.func @_mm_bias_act_kernel(%arg0: i32, %arg1: i32, %arg2: memref<128x128xbf16, #tpu.memory_space<vmem>>, %arg3: memref<128x128xbf16, #tpu.memory_space<vmem>>, %arg4: memref<1x128xf32, #tpu.memory_space<vmem>>, %arg5: memref<128x128xf32, #tpu.memory_space<vmem>>) attributes {dimension_semantics = [#tpu.dimension_semantics<parallel>, #tpu.dimension_semantics<parallel>], iteration_bounds = array<i64: 1, 1>, scalar_prefetch = 0 : i64, scratch_operands = 0 : i64, tpu.core_type = #tpu.core_type<tc>, window_params = [{transform_indices = @transform_0, window_bounds = array<i64: 128, 128>}, {transform_indices = @transform_1, window_bounds = array<i64: 128, 128>}, {transform_indices = @transform_2, window_bounds = array<i64: 1, 128>}, {transform_indices = @transform_3, window_bounds = array<i64: 128, 128>}]} {
    %c0 = arith.constant 0 : index
    %c0_0 = arith.constant 0 : index
    %0 = vector.load %arg2[%c0, %c0_0] : memref<128x128xbf16, #tpu.memory_space<vmem>>, vector<128x128xbf16>
    %c0_1 = arith.constant 0 : index
    %c0_2 = arith.constant 0 : index
    %1 = vector.load %arg3[%c0_1, %c0_2] : memref<128x128xbf16, #tpu.memory_space<vmem>>, vector<128x128xbf16>
    %cst = arith.constant dense<0.000000e+00> : vector<128x128xf32>
    %2 = tpu.matmul %0, %1, %cst {dimension_numbers = #tpu.dot_dimension_numbers<[1], [0], [0], [1], [0, 0, 1, 1], [], []>} : vector<128x128xbf16>, vector<128x128xbf16>, vector<128x128xf32> -> vector<128x128xf32>
    %c0_3 = arith.constant 0 : index
    %c0_4 = arith.constant 0 : index
    %3 = vector.load %arg4[%c0_3, %c0_4] : memref<1x128xf32, #tpu.memory_space<vmem>>, vector<1x128xf32>
    %4 = vector.broadcast %3 : vector<1x128xf32> to vector<128x128xf32>
    %5 = arith.addf %2, %4 : vector<128x128xf32>
    %cst_5 = arith.constant 0.000000e+00 : f32
    %6 = vector.broadcast %cst_5 : f32 to vector<128x128xf32>
    %7 = arith.cmpf ogt, %5, %6 : vector<128x128xf32>
    %cst_6 = arith.constant 2.000000e-01 : f32
    %8 = vector.broadcast %cst_6 : f32 to vector<128x128xf32>
    %9 = arith.mulf %8, %5 : vector<128x128xf32>
    %10 = arith.select %7, %5, %9 : vector<128x128xi1>, vector<128x128xf32>
    %c0_7 = arith.constant 0 : index
    %c0_8 = arith.constant 0 : index
    %11 = vector.load %arg5[%c0_7, %c0_8] : memref<128x128xf32, #tpu.memory_space<vmem>>, vector<128x128xf32>
    tpu.vector_store %arg5[%c0_7, %c0_8], %10 {strides = array<i32>} : memref<128x128xf32, #tpu.memory_space<vmem>>, vector<128x128xf32>,
    return
  }
  func.func @transform_0(%arg0: i32, %arg1: i32) -> (i32, i32) {
    %c0_i32 = arith.constant 0 : i32
    %c0_i32_0 = arith.constant 0 : i32
    return %arg0, %c0_i32 : i32, i32
  }
  func.func @transform_1(%arg0: i32, %arg1: i32) -> (i32, i32) {
    %c0_i32 = arith.constant 0 : i32
    %c0_i32_0 = arith.constant 0 : i32
    return %c0_i32, %arg1 : i32, i32
  }
  func.func @transform_2(%arg0: i32, %arg1: i32) -> (i32, i32) {
    %c0_i32 = arith.constant 0 : i32
    %c0_i32_0 = arith.constant 0 : i32
    return %c0_i32, %arg1 : i32, i32
  }
  func.func @transform_3(%arg0: i32, %arg1: i32) -> (i32, i32) {
    %c0_i32 = arith.constant 0 : i32
    return %arg0, %arg1 : i32, i32
  }
}

module attributes {stable_mosaic.version = 11 : i64} {
  func.func @_mm_bias_act_kernel(%arg0: i32, %arg1: i32, %arg2: memref<32x128xbf16, #tpu.memory_space<vmem>>, %arg3: memref<128x128xbf16, #tpu.memory_space<vmem>>, %arg4: memref<1x128xf32, #tpu.memory_space<vmem>>, %arg5: memref<32x128xf32, #tpu.memory_space<vmem>>) attributes {dimension_semantics = [#tpu.dimension_semantics<parallel>, #tpu.dimension_semantics<parallel>], iteration_bounds = array<i64: 1, 1>, scalar_prefetch = 0 : i64, scratch_operands = 0 : i64, tpu.core_type = #tpu.core_type<tc>, window_params = [{transform_indices = @transform_0, window_bounds = array<i64: 32, 128>}, {transform_indices = @transform_1, window_bounds = array<i64: 128, 128>}, {transform_indices = @transform_2, window_bounds = array<i64: 1, 128>}, {transform_indices = @transform_3, window_bounds = array<i64: 32, 128>}]} {
    %c0 = arith.constant 0 : index
    %c0_0 = arith.constant 0 : index
    %0 = vector.load %arg2[%c0, %c0_0] : memref<32x128xbf16, #tpu.memory_space<vmem>>, vector<32x128xbf16>
    %c0_1 = arith.constant 0 : index
    %c0_2 = arith.constant 0 : index
    %1 = vector.load %arg3[%c0_1, %c0_2] : memref<128x128xbf16, #tpu.memory_space<vmem>>, vector<128x128xbf16>
    %cst = arith.constant dense<0.000000e+00> : vector<32x128xf32>
    %2 = tpu.matmul %0, %1, %cst {dimension_numbers = #tpu.dot_dimension_numbers<[1], [0], [0], [1], [0, 0, 1, 1], [], []>} : vector<32x128xbf16>, vector<128x128xbf16>, vector<32x128xf32> -> vector<32x128xf32>
    %c0_3 = arith.constant 0 : index
    %c0_4 = arith.constant 0 : index
    %3 = vector.load %arg4[%c0_3, %c0_4] : memref<1x128xf32, #tpu.memory_space<vmem>>, vector<1x128xf32>
    %4 = vector.broadcast %3 : vector<1x128xf32> to vector<32x128xf32>
    %5 = arith.addf %2, %4 : vector<32x128xf32>
    %cst_5 = arith.constant 0.000000e+00 : f32
    %6 = vector.broadcast %cst_5 : f32 to vector<32x128xf32>
    %7 = arith.cmpf ogt, %5, %6 : vector<32x128xf32>
    %cst_6 = arith.constant 2.000000e-01 : f32
    %8 = vector.broadcast %cst_6 : f32 to vector<32x128xf32>
    %9 = arith.mulf %8, %5 : vector<32x128xf32>
    %10 = arith.select %7, %5, %9 : vector<32x128xi1>, vector<32x128xf32>
    %c0_7 = arith.constant 0 : index
    %c0_8 = arith.constant 0 : index
    %11 = vector.load %arg5[%c0_7, %c0_8] : memref<32x128xf32, #tpu.memory_space<vmem>>, vector<32x128xf32>
    tpu.vector_store %arg5[%c0_7, %c0_8], %10 {strides = array<i32>} : memref<32x128xf32, #tpu.memory_space<vmem>>, vector<32x128xf32>,
    return
  }
  func.func @transform_0(%arg0: i32, %arg1: i32) -> (i32, i32) {
    %c0_i32 = arith.constant 0 : i32
    %c0_i32_0 = arith.constant 0 : i32
    return %arg0, %c0_i32 : i32, i32
  }
  func.func @transform_1(%arg0: i32, %arg1: i32) -> (i32, i32) {
    %c0_i32 = arith.constant 0 : i32
    %c0_i32_0 = arith.constant 0 : i32
    return %c0_i32, %arg1 : i32, i32
  }
  func.func @transform_2(%arg0: i32, %arg1: i32) -> (i32, i32) {
    %c0_i32 = arith.constant 0 : i32
    %c0_i32_0 = arith.constant 0 : i32
    return %c0_i32, %arg1 : i32, i32
  }
  func.func @transform_3(%arg0: i32, %arg1: i32) -> (i32, i32) {
    %c0_i32 = arith.constant 0 : i32
    return %arg0, %arg1 : i32, i32
  }
}

module attributes {stable_mosaic.version = 11 : i64} {
  func.func @_mm_bias_act_kernel(%arg0: i32, %arg1: i32, %arg2: memref<8x256xbf16, #tpu.memory_space<vmem>>, %arg3: memref<256x128xbf16, #tpu.memory_space<vmem>>, %arg4: memref<1x128xf32, #tpu.memory_space<vmem>>, %arg5: memref<8x128xf32, #tpu.memory_space<vmem>>) attributes {dimension_semantics = [#tpu.dimension_semantics<parallel>, #tpu.dimension_semantics<parallel>], iteration_bounds = array<i64: 1, 1>, scalar_prefetch = 0 : i64, scratch_operands = 0 : i64, tpu.core_type = #tpu.core_type<tc>, window_params = [{transform_indices = @transform_0, window_bounds = array<i64: 8, 256>}, {transform_indices = @transform_1, window_bounds = array<i64: 256, 128>}, {transform_indices = @transform_2, window_bounds = array<i64: 1, 128>}, {transform_indices = @transform_3, window_bounds = array<i64: 8, 128>}]} {
    %c0 = arith.constant 0 : index
    %c0_0 = arith.constant 0 : index
    %0 = vector.load %arg2[%c0, %c0_0] : memref<8x256xbf16, #tpu.memory_space<vmem>>, vector<8x256xbf16>
    %c0_1 = arith.constant 0 : index
    %c0_2 = arith.constant 0 : index
    %1 = vector.load %arg3[%c0_1, %c0_2] : memref<256x128xbf16, #tpu.memory_space<vmem>>, vector<256x128xbf16>
    %cst = arith.constant dense<0.000000e+00> : vector<8x128xf32>
    %2 = tpu.matmul %0, %1, %cst {dimension_numbers = #tpu.dot_dimension_numbers<[1], [0], [0], [1], [0, 0, 1, 1], [], []>} : vector<8x256xbf16>, vector<256x128xbf16>, vector<8x128xf32> -> vector<8x128xf32>
    %c0_3 = arith.constant 0 : index
    %c0_4 = arith.constant 0 : index
    %3 = vector.load %arg4[%c0_3, %c0_4] : memref<1x128xf32, #tpu.memory_space<vmem>>, vector<1x128xf32>
    %4 = vector.broadcast %3 : vector<1x128xf32> to vector<8x128xf32>
    %5 = arith.addf %2, %4 : vector<8x128xf32>
    %c0_5 = arith.constant 0 : index
    %c0_6 = arith.constant 0 : index
    %6 = vector.load %arg5[%c0_5, %c0_6] : memref<8x128xf32, #tpu.memory_space<vmem>>, vector<8x128xf32>
    tpu.vector_store %arg5[%c0_5, %c0_6], %5 {strides = array<i32>} : memref<8x128xf32, #tpu.memory_space<vmem>>, vector<8x128xf32>,
    return
  }
  func.func @transform_0(%arg0: i32, %arg1: i32) -> (i32, i32) {
    %c0_i32 = arith.constant 0 : i32
    %c0_i32_0 = arith.constant 0 : i32
    return %arg0, %c0_i32 : i32, i32
  }
  func.func @transform_1(%arg0: i32, %arg1: i32) -> (i32, i32) {
    %c0_i32 = arith.constant 0 : i32
    %c0_i32_0 = arith.constant 0 : i32
    return %c0_i32, %arg1 : i32, i32
  }
  func.func @transform_2(%arg0: i32, %arg1: i32) -> (i32, i32) {
    %c0_i32 = arith.constant 0 : i32
    %c0_i32_0 = arith.constant 0 : i32
    return %c0_i32, %arg1 : i32, i32
  }
  func.func @transform_3(%arg0: i32, %arg1: i32) -> (i32, i32) {
    %c0_i32 = arith.constant 0 : i32
    return %arg0, %arg1 : i32, i32
  }
}

module attributes {stable_mosaic.version = 11 : i64} {
  func.func @_mm_bias_act_kernel(%arg0: i32, %arg1: i32, %arg2: memref<64x128xbf16, #tpu.memory_space<vmem>>, %arg3: memref<128x128xbf16, #tpu.memory_space<vmem>>, %arg4: memref<1x128xf32, #tpu.memory_space<vmem>>, %arg5: memref<64x128xf32, #tpu.memory_space<vmem>>) attributes {dimension_semantics = [#tpu.dimension_semantics<parallel>, #tpu.dimension_semantics<parallel>], iteration_bounds = array<i64: 1, 1>, scalar_prefetch = 0 : i64, scratch_operands = 0 : i64, tpu.core_type = #tpu.core_type<tc>, window_params = [{transform_indices = @transform_0, window_bounds = array<i64: 64, 128>}, {transform_indices = @transform_1, window_bounds = array<i64: 128, 128>}, {transform_indices = @transform_2, window_bounds = array<i64: 1, 128>}, {transform_indices = @transform_3, window_bounds = array<i64: 64, 128>}]} {
    %c0 = arith.constant 0 : index
    %c0_0 = arith.constant 0 : index
    %0 = vector.load %arg2[%c0, %c0_0] : memref<64x128xbf16, #tpu.memory_space<vmem>>, vector<64x128xbf16>
    %c0_1 = arith.constant 0 : index
    %c0_2 = arith.constant 0 : index
    %1 = vector.load %arg3[%c0_1, %c0_2] : memref<128x128xbf16, #tpu.memory_space<vmem>>, vector<128x128xbf16>
    %cst = arith.constant dense<0.000000e+00> : vector<64x128xf32>
    %2 = tpu.matmul %0, %1, %cst {dimension_numbers = #tpu.dot_dimension_numbers<[1], [0], [0], [1], [0, 0, 1, 1], [], []>} : vector<64x128xbf16>, vector<128x128xbf16>, vector<64x128xf32> -> vector<64x128xf32>
    %c0_3 = arith.constant 0 : index
    %c0_4 = arith.constant 0 : index
    %3 = vector.load %arg4[%c0_3, %c0_4] : memref<1x128xf32, #tpu.memory_space<vmem>>, vector<1x128xf32>
    %4 = vector.broadcast %3 : vector<1x128xf32> to vector<64x128xf32>
    %5 = arith.addf %2, %4 : vector<64x128xf32>
    %cst_5 = arith.constant 0.000000e+00 : f32
    %6 = vector.broadcast %cst_5 : f32 to vector<64x128xf32>
    %7 = arith.cmpf ogt, %5, %6 : vector<64x128xf32>
    %cst_6 = arith.constant 2.000000e-01 : f32
    %8 = vector.broadcast %cst_6 : f32 to vector<64x128xf32>
    %9 = arith.mulf %8, %5 : vector<64x128xf32>
    %10 = arith.select %7, %5, %9 : vector<64x128xi1>, vector<64x128xf32>
    %c0_7 = arith.constant 0 : index
    %c0_8 = arith.constant 0 : index
    %11 = vector.load %arg5[%c0_7, %c0_8] : memref<64x128xf32, #tpu.memory_space<vmem>>, vector<64x128xf32>
    tpu.vector_store %arg5[%c0_7, %c0_8], %10 {strides = array<i32>} : memref<64x128xf32, #tpu.memory_space<vmem>>, vector<64x128xf32>,
    return
  }
  func.func @transform_0(%arg0: i32, %arg1: i32) -> (i32, i32) {
    %c0_i32 = arith.constant 0 : i32
    %c0_i32_0 = arith.constant 0 : i32
    return %arg0, %c0_i32 : i32, i32
  }
  func.func @transform_1(%arg0: i32, %arg1: i32) -> (i32, i32) {
    %c0_i32 = arith.constant 0 : i32
    %c0_i32_0 = arith.constant 0 : i32
    return %c0_i32, %arg1 : i32, i32
  }
  func.func @transform_2(%arg0: i32, %arg1: i32) -> (i32, i32) {
    %c0_i32 = arith.constant 0 : i32
    %c0_i32_0 = arith.constant 0 : i32
    return %c0_i32, %arg1 : i32, i32
  }
  func.func @transform_3(%arg0: i32, %arg1: i32) -> (i32, i32) {
    %c0_i32 = arith.constant 0 : i32
    return %arg0, %arg1 : i32, i32
  }
}

module attributes {stable_mosaic.version = 11 : i64} {
  func.func @_mm_bias_act_kernel(%arg0: i32, %arg1: i32, %arg2: memref<16x128xbf16, #tpu.memory_space<vmem>>, %arg3: memref<128x128xbf16, #tpu.memory_space<vmem>>, %arg4: memref<1x128xf32, #tpu.memory_space<vmem>>, %arg5: memref<16x128xf32, #tpu.memory_space<vmem>>) attributes {dimension_semantics = [#tpu.dimension_semantics<parallel>, #tpu.dimension_semantics<parallel>], iteration_bounds = array<i64: 1, 1>, scalar_prefetch = 0 : i64, scratch_operands = 0 : i64, tpu.core_type = #tpu.core_type<tc>, window_params = [{transform_indices = @transform_0, window_bounds = array<i64: 16, 128>}, {transform_indices = @transform_1, window_bounds = array<i64: 128, 128>}, {transform_indices = @transform_2, window_bounds = array<i64: 1, 128>}, {transform_indices = @transform_3, window_bounds = array<i64: 16, 128>}]} {
    %c0 = arith.constant 0 : index
    %c0_0 = arith.constant 0 : index
    %0 = vector.load %arg2[%c0, %c0_0] : memref<16x128xbf16, #tpu.memory_space<vmem>>, vector<16x128xbf16>
    %c0_1 = arith.constant 0 : index
    %c0_2 = arith.constant 0 : index
    %1 = vector.load %arg3[%c0_1, %c0_2] : memref<128x128xbf16, #tpu.memory_space<vmem>>, vector<128x128xbf16>
    %cst = arith.constant dense<0.000000e+00> : vector<16x128xf32>
    %2 = tpu.matmul %0, %1, %cst {dimension_numbers = #tpu.dot_dimension_numbers<[1], [0], [0], [1], [0, 0, 1, 1], [], []>} : vector<16x128xbf16>, vector<128x128xbf16>, vector<16x128xf32> -> vector<16x128xf32>
    %c0_3 = arith.constant 0 : index
    %c0_4 = arith.constant 0 : index
    %3 = vector.load %arg4[%c0_3, %c0_4] : memref<1x128xf32, #tpu.memory_space<vmem>>, vector<1x128xf32>
    %4 = vector.broadcast %3 : vector<1x128xf32> to vector<16x128xf32>
    %5 = arith.addf %2, %4 : vector<16x128xf32>
    %cst_5 = arith.constant 0.000000e+00 : f32
    %6 = vector.broadcast %cst_5 : f32 to vector<16x128xf32>
    %7 = arith.cmpf ogt, %5, %6 : vector<16x128xf32>
    %cst_6 = arith.constant 2.000000e-01 : f32
    %8 = vector.broadcast %cst_6 : f32 to vector<16x128xf32>
    %9 = arith.mulf %8, %5 : vector<16x128xf32>
    %10 = arith.select %7, %5, %9 : vector<16x128xi1>, vector<16x128xf32>
    %c0_7 = arith.constant 0 : index
    %c0_8 = arith.constant 0 : index
    %11 = vector.load %arg5[%c0_7, %c0_8] : memref<16x128xf32, #tpu.memory_space<vmem>>, vector<16x128xf32>
    tpu.vector_store %arg5[%c0_7, %c0_8], %10 {strides = array<i32>} : memref<16x128xf32, #tpu.memory_space<vmem>>, vector<16x128xf32>,
    return
  }
  func.func @transform_0(%arg0: i32, %arg1: i32) -> (i32, i32) {
    %c0_i32 = arith.constant 0 : i32
    %c0_i32_0 = arith.constant 0 : i32
    return %arg0, %c0_i32 : i32, i32
  }
  func.func @transform_1(%arg0: i32, %arg1: i32) -> (i32, i32) {
    %c0_i32 = arith.constant 0 : i32
    %c0_i32_0 = arith.constant 0 : i32
    return %c0_i32, %arg1 : i32, i32
  }
  func.func @transform_2(%arg0: i32, %arg1: i32) -> (i32, i32) {
    %c0_i32 = arith.constant 0 : i32
    %c0_i32_0 = arith.constant 0 : i32
    return %c0_i32, %arg1 : i32, i32
  }
  func.func @transform_3(%arg0: i32, %arg1: i32) -> (i32, i32) {
    %c0_i32 = arith.constant 0 : i32
    return %arg0, %arg1 : i32, i32
  }
}

module attributes {stable_mosaic.version = 11 : i64} {
  func.func @_mm_bias_act_kernel(%arg0: i32, %arg1: i32, %arg2: memref<8x128xbf16, #tpu.memory_space<vmem>>, %arg3: memref<128x128xbf16, #tpu.memory_space<vmem>>, %arg4: memref<1x128xf32, #tpu.memory_space<vmem>>, %arg5: memref<8x128xf32, #tpu.memory_space<vmem>>) attributes {dimension_semantics = [#tpu.dimension_semantics<parallel>, #tpu.dimension_semantics<parallel>], iteration_bounds = array<i64: 1, 1>, scalar_prefetch = 0 : i64, scratch_operands = 0 : i64, tpu.core_type = #tpu.core_type<tc>, window_params = [{transform_indices = @transform_0, window_bounds = array<i64: 8, 128>}, {transform_indices = @transform_1, window_bounds = array<i64: 128, 128>}, {transform_indices = @transform_2, window_bounds = array<i64: 1, 128>}, {transform_indices = @transform_3, window_bounds = array<i64: 8, 128>}]} {
    %c0 = arith.constant 0 : index
    %c0_0 = arith.constant 0 : index
    %0 = vector.load %arg2[%c0, %c0_0] : memref<8x128xbf16, #tpu.memory_space<vmem>>, vector<8x128xbf16>
    %c0_1 = arith.constant 0 : index
    %c0_2 = arith.constant 0 : index
    %1 = vector.load %arg3[%c0_1, %c0_2] : memref<128x128xbf16, #tpu.memory_space<vmem>>, vector<128x128xbf16>
    %cst = arith.constant dense<0.000000e+00> : vector<8x128xf32>
    %2 = tpu.matmul %0, %1, %cst {dimension_numbers = #tpu.dot_dimension_numbers<[1], [0], [0], [1], [0, 0, 1, 1], [], []>} : vector<8x128xbf16>, vector<128x128xbf16>, vector<8x128xf32> -> vector<8x128xf32>
    %c0_3 = arith.constant 0 : index
    %c0_4 = arith.constant 0 : index
    %3 = vector.load %arg4[%c0_3, %c0_4] : memref<1x128xf32, #tpu.memory_space<vmem>>, vector<1x128xf32>
    %4 = vector.broadcast %3 : vector<1x128xf32> to vector<8x128xf32>
    %5 = arith.addf %2, %4 : vector<8x128xf32>
    %c0_5 = arith.constant 0 : index
    %c0_6 = arith.constant 0 : index
    %6 = vector.load %arg5[%c0_5, %c0_6] : memref<8x128xf32, #tpu.memory_space<vmem>>, vector<8x128xf32>
    tpu.vector_store %arg5[%c0_5, %c0_6], %5 {strides = array<i32>} : memref<8x128xf32, #tpu.memory_space<vmem>>, vector<8x128xf32>,
    return
  }
  func.func @transform_0(%arg0: i32, %arg1: i32) -> (i32, i32) {
    %c0_i32 = arith.constant 0 : i32
    %c0_i32_0 = arith.constant 0 : i32
    return %arg0, %c0_i32 : i32, i32
  }
  func.func @transform_1(%arg0: i32, %arg1: i32) -> (i32, i32) {
    %c0_i32 = arith.constant 0 : i32
    %c0_i32_0 = arith.constant 0 : i32
    return %c0_i32, %arg1 : i32, i32
  }
  func.func @transform_2(%arg0: i32, %arg1: i32) -> (i32, i32) {
    %c0_i32 = arith.constant 0 : i32
    %c0_i32_0 = arith.constant 0 : i32
    return %c0_i32, %arg1 : i32, i32
  }
  func.func @transform_3(%arg0: i32, %arg1: i32) -> (i32, i32) {
    %c0_i32 = arith.constant 0 : i32
    return %arg0, %arg1 : i32, i32
  }
}

module attributes {stable_mosaic.version = 11 : i64} {
  func.func @_mm_bias_act_kernel(%arg0: i32, %arg1: i32, %arg2: memref<256x128xbf16, #tpu.memory_space<vmem>>, %arg3: memref<128x128xbf16, #tpu.memory_space<vmem>>, %arg4: memref<1x128xf32, #tpu.memory_space<vmem>>, %arg5: memref<256x128xf32, #tpu.memory_space<vmem>>) attributes {dimension_semantics = [#tpu.dimension_semantics<parallel>, #tpu.dimension_semantics<parallel>], iteration_bounds = array<i64: 1, 1>, scalar_prefetch = 0 : i64, scratch_operands = 0 : i64, tpu.core_type = #tpu.core_type<tc>, window_params = [{transform_indices = @transform_0, window_bounds = array<i64: 256, 128>}, {transform_indices = @transform_1, window_bounds = array<i64: 128, 128>}, {transform_indices = @transform_2, window_bounds = array<i64: 1, 128>}, {transform_indices = @transform_3, window_bounds = array<i64: 256, 128>}]} {
    %c0 = arith.constant 0 : index
    %c0_0 = arith.constant 0 : index
    %0 = vector.load %arg2[%c0, %c0_0] : memref<256x128xbf16, #tpu.memory_space<vmem>>, vector<256x128xbf16>
    %c0_1 = arith.constant 0 : index
    %c0_2 = arith.constant 0 : index
    %1 = vector.load %arg3[%c0_1, %c0_2] : memref<128x128xbf16, #tpu.memory_space<vmem>>, vector<128x128xbf16>
    %cst = arith.constant dense<0.000000e+00> : vector<256x128xf32>
    %2 = tpu.matmul %0, %1, %cst {dimension_numbers = #tpu.dot_dimension_numbers<[1], [0], [0], [1], [0, 0, 1, 1], [], []>} : vector<256x128xbf16>, vector<128x128xbf16>, vector<256x128xf32> -> vector<256x128xf32>
    %c0_3 = arith.constant 0 : index
    %c0_4 = arith.constant 0 : index
    %3 = vector.load %arg4[%c0_3, %c0_4] : memref<1x128xf32, #tpu.memory_space<vmem>>, vector<1x128xf32>
    %4 = vector.broadcast %3 : vector<1x128xf32> to vector<256x128xf32>
    %5 = arith.addf %2, %4 : vector<256x128xf32>
    %cst_5 = arith.constant 0.000000e+00 : f32
    %6 = vector.broadcast %cst_5 : f32 to vector<256x128xf32>
    %7 = arith.cmpf ogt, %5, %6 : vector<256x128xf32>
    %cst_6 = arith.constant 2.000000e-01 : f32
    %8 = vector.broadcast %cst_6 : f32 to vector<256x128xf32>
    %9 = arith.mulf %8, %5 : vector<256x128xf32>
    %10 = arith.select %7, %5, %9 : vector<256x128xi1>, vector<256x128xf32>
    %c0_7 = arith.constant 0 : index
    %c0_8 = arith.constant 0 : index
    %11 = vector.load %arg5[%c0_7, %c0_8] : memref<256x128xf32, #tpu.memory_space<vmem>>, vector<256x128xf32>
    tpu.vector_store %arg5[%c0_7, %c0_8], %10 {strides = array<i32>} : memref<256x128xf32, #tpu.memory_space<vmem>>, vector<256x128xf32>,
    return
  }
  func.func @transform_0(%arg0: i32, %arg1: i32) -> (i32, i32) {
    %c0_i32 = arith.constant 0 : i32
    %c0_i32_0 = arith.constant 0 : i32
    return %arg0, %c0_i32 : i32, i32
  }
  func.func @transform_1(%arg0: i32, %arg1: i32) -> (i32, i32) {
    %c0_i32 = arith.constant 0 : i32
    %c0_i32_0 = arith.constant 0 : i32
    return %c0_i32, %arg1 : i32, i32
  }
  func.func @transform_2(%arg0: i32, %arg1: i32) -> (i32, i32) {
    %c0_i32 = arith.constant 0 : i32
    %c0_i32_0 = arith.constant 0 : i32
    return %c0_i32, %arg1 : i32, i32
  }
  func.func @transform_3(%arg0: i32, %arg1: i32) -> (i32, i32) {
    %c0_i32 = arith.constant 0 : i32
    return %arg0, %arg1 : i32, i32
  }
}

module attributes {stable_mosaic.version = 11 : i64} {
  func.func @_mm_bias_act_kernel(%arg0: i32, %arg1: i32, %arg2: memref<8x256xbf16, #tpu.memory_space<vmem>>, %arg3: memref<256x128xbf16, #tpu.memory_space<vmem>>, %arg4: memref<1x128xf32, #tpu.memory_space<vmem>>, %arg5: memref<8x128xf32, #tpu.memory_space<vmem>>) attributes {dimension_semantics = [#tpu.dimension_semantics<parallel>, #tpu.dimension_semantics<parallel>], iteration_bounds = array<i64: 1, 1>, scalar_prefetch = 0 : i64, scratch_operands = 0 : i64, tpu.core_type = #tpu.core_type<tc>, window_params = [{transform_indices = @transform_0, window_bounds = array<i64: 8, 256>}, {transform_indices = @transform_1, window_bounds = array<i64: 256, 128>}, {transform_indices = @transform_2, window_bounds = array<i64: 1, 128>}, {transform_indices = @transform_3, window_bounds = array<i64: 8, 128>}]} {
    %c0 = arith.constant 0 : index
    %c0_0 = arith.constant 0 : index
    %0 = vector.load %arg2[%c0, %c0_0] : memref<8x256xbf16, #tpu.memory_space<vmem>>, vector<8x256xbf16>
    %c0_1 = arith.constant 0 : index
    %c0_2 = arith.constant 0 : index
    %1 = vector.load %arg3[%c0_1, %c0_2] : memref<256x128xbf16, #tpu.memory_space<vmem>>, vector<256x128xbf16>
    %cst = arith.constant dense<0.000000e+00> : vector<8x128xf32>
    %2 = tpu.matmul %0, %1, %cst {dimension_numbers = #tpu.dot_dimension_numbers<[1], [0], [0], [1], [0, 0, 1, 1], [], []>} : vector<8x256xbf16>, vector<256x128xbf16>, vector<8x128xf32> -> vector<8x128xf32>
    %c0_3 = arith.constant 0 : index
    %c0_4 = arith.constant 0 : index
    %3 = vector.load %arg4[%c0_3, %c0_4] : memref<1x128xf32, #tpu.memory_space<vmem>>, vector<1x128xf32>
    %4 = vector.broadcast %3 : vector<1x128xf32> to vector<8x128xf32>
    %5 = arith.addf %2, %4 : vector<8x128xf32>
    %cst_5 = arith.constant 0.000000e+00 : f32
    %6 = vector.broadcast %cst_5 : f32 to vector<8x128xf32>
    %7 = arith.cmpf ogt, %5, %6 : vector<8x128xf32>
    %cst_6 = arith.constant 2.000000e-01 : f32
    %8 = vector.broadcast %cst_6 : f32 to vector<8x128xf32>
    %9 = arith.mulf %8, %5 : vector<8x128xf32>
    %10 = arith.select %7, %5, %9 : vector<8x128xi1>, vector<8x128xf32>
    %c0_7 = arith.constant 0 : index
    %c0_8 = arith.constant 0 : index
    %11 = vector.load %arg5[%c0_7, %c0_8] : memref<8x128xf32, #tpu.memory_space<vmem>>, vector<8x128xf32>
    tpu.vector_store %arg5[%c0_7, %c0_8], %10 {strides = array<i32>} : memref<8x128xf32, #tpu.memory_space<vmem>>, vector<8x128xf32>,
    return
  }
  func.func @transform_0(%arg0: i32, %arg1: i32) -> (i32, i32) {
    %c0_i32 = arith.constant 0 : i32
    %c0_i32_0 = arith.constant 0 : i32
    return %arg0, %c0_i32 : i32, i32
  }
  func.func @transform_1(%arg0: i32, %arg1: i32) -> (i32, i32) {
    %c0_i32 = arith.constant 0 : i32
    %c0_i32_0 = arith.constant 0 : i32
    return %c0_i32, %arg1 : i32, i32
  }
  func.func @transform_2(%arg0: i32, %arg1: i32) -> (i32, i32) {
    %c0_i32 = arith.constant 0 : i32
    %c0_i32_0 = arith.constant 0 : i32
    return %c0_i32, %arg1 : i32, i32
  }
  func.func @transform_3(%arg0: i32, %arg1: i32) -> (i32, i32) {
    %c0_i32 = arith.constant 0 : i32
    return %arg0, %arg1 : i32, i32
  }
}

module attributes {stable_mosaic.version = 11 : i64} {
  func.func @_mm_bias_act_kernel(%arg0: i32, %arg1: i32, %arg2: memref<256x128xbf16, #tpu.memory_space<vmem>>, %arg3: memref<128x128xbf16, #tpu.memory_space<vmem>>, %arg4: memref<1x128xf32, #tpu.memory_space<vmem>>, %arg5: memref<256x128xf32, #tpu.memory_space<vmem>>) attributes {dimension_semantics = [#tpu.dimension_semantics<parallel>, #tpu.dimension_semantics<parallel>], iteration_bounds = array<i64: 2, 1>, scalar_prefetch = 0 : i64, scratch_operands = 0 : i64, tpu.core_type = #tpu.core_type<tc>, window_params = [{transform_indices = @transform_0, window_bounds = array<i64: 256, 128>}, {transform_indices = @transform_1, window_bounds = array<i64: 128, 128>}, {transform_indices = @transform_2, window_bounds = array<i64: 1, 128>}, {transform_indices = @transform_3, window_bounds = array<i64: 256, 128>}]} {
    %c0 = arith.constant 0 : index
    %c0_0 = arith.constant 0 : index
    %0 = vector.load %arg2[%c0, %c0_0] : memref<256x128xbf16, #tpu.memory_space<vmem>>, vector<256x128xbf16>
    %c0_1 = arith.constant 0 : index
    %c0_2 = arith.constant 0 : index
    %1 = vector.load %arg3[%c0_1, %c0_2] : memref<128x128xbf16, #tpu.memory_space<vmem>>, vector<128x128xbf16>
    %cst = arith.constant dense<0.000000e+00> : vector<256x128xf32>
    %2 = tpu.matmul %0, %1, %cst {dimension_numbers = #tpu.dot_dimension_numbers<[1], [0], [0], [1], [0, 0, 1, 1], [], []>} : vector<256x128xbf16>, vector<128x128xbf16>, vector<256x128xf32> -> vector<256x128xf32>
    %c0_3 = arith.constant 0 : index
    %c0_4 = arith.constant 0 : index
    %3 = vector.load %arg4[%c0_3, %c0_4] : memref<1x128xf32, #tpu.memory_space<vmem>>, vector<1x128xf32>
    %4 = vector.broadcast %3 : vector<1x128xf32> to vector<256x128xf32>
    %5 = arith.addf %2, %4 : vector<256x128xf32>
    %cst_5 = arith.constant 0.000000e+00 : f32
    %6 = vector.broadcast %cst_5 : f32 to vector<256x128xf32>
    %7 = arith.cmpf ogt, %5, %6 : vector<256x128xf32>
    %cst_6 = arith.constant 2.000000e-01 : f32
    %8 = vector.broadcast %cst_6 : f32 to vector<256x128xf32>
    %9 = arith.mulf %8, %5 : vector<256x128xf32>
    %10 = arith.select %7, %5, %9 : vector<256x128xi1>, vector<256x128xf32>
    %c0_7 = arith.constant 0 : index
    %c0_8 = arith.constant 0 : index
    %11 = vector.load %arg5[%c0_7, %c0_8] : memref<256x128xf32, #tpu.memory_space<vmem>>, vector<256x128xf32>
    tpu.vector_store %arg5[%c0_7, %c0_8], %10 {strides = array<i32>} : memref<256x128xf32, #tpu.memory_space<vmem>>, vector<256x128xf32>,
    return
  }
  func.func @transform_0(%arg0: i32, %arg1: i32) -> (i32, i32) {
    %c0_i32 = arith.constant 0 : i32
    %c0_i32_0 = arith.constant 0 : i32
    return %arg0, %c0_i32 : i32, i32
  }
  func.func @transform_1(%arg0: i32, %arg1: i32) -> (i32, i32) {
    %c0_i32 = arith.constant 0 : i32
    %c0_i32_0 = arith.constant 0 : i32
    return %c0_i32, %arg1 : i32, i32
  }
  func.func @transform_2(%arg0: i32, %arg1: i32) -> (i32, i32) {
    %c0_i32 = arith.constant 0 : i32
    %c0_i32_0 = arith.constant 0 : i32
    return %c0_i32, %arg1 : i32, i32
  }
  func.func @transform_3(%arg0: i32, %arg1: i32) -> (i32, i32) {
    %c0_i32 = arith.constant 0 : i32
    return %arg0, %arg1 : i32, i32
  }
}

module attributes {stable_mosaic.version = 11 : i64} {
  func.func @_mm_bias_act_kernel(%arg0: i32, %arg1: i32, %arg2: memref<8x512xbf16, #tpu.memory_space<vmem>>, %arg3: memref<512x128xbf16, #tpu.memory_space<vmem>>, %arg4: memref<1x128xf32, #tpu.memory_space<vmem>>, %arg5: memref<8x128xf32, #tpu.memory_space<vmem>>) attributes {dimension_semantics = [#tpu.dimension_semantics<parallel>, #tpu.dimension_semantics<parallel>], iteration_bounds = array<i64: 1, 1>, scalar_prefetch = 0 : i64, scratch_operands = 0 : i64, tpu.core_type = #tpu.core_type<tc>, window_params = [{transform_indices = @transform_0, window_bounds = array<i64: 8, 512>}, {transform_indices = @transform_1, window_bounds = array<i64: 512, 128>}, {transform_indices = @transform_2, window_bounds = array<i64: 1, 128>}, {transform_indices = @transform_3, window_bounds = array<i64: 8, 128>}]} {
    %c0 = arith.constant 0 : index
    %c0_0 = arith.constant 0 : index
    %0 = vector.load %arg2[%c0, %c0_0] : memref<8x512xbf16, #tpu.memory_space<vmem>>, vector<8x512xbf16>
    %c0_1 = arith.constant 0 : index
    %c0_2 = arith.constant 0 : index
    %1 = vector.load %arg3[%c0_1, %c0_2] : memref<512x128xbf16, #tpu.memory_space<vmem>>, vector<512x128xbf16>
    %cst = arith.constant dense<0.000000e+00> : vector<8x128xf32>
    %2 = tpu.matmul %0, %1, %cst {dimension_numbers = #tpu.dot_dimension_numbers<[1], [0], [0], [1], [0, 0, 1, 1], [], []>} : vector<8x512xbf16>, vector<512x128xbf16>, vector<8x128xf32> -> vector<8x128xf32>
    %c0_3 = arith.constant 0 : index
    %c0_4 = arith.constant 0 : index
    %3 = vector.load %arg4[%c0_3, %c0_4] : memref<1x128xf32, #tpu.memory_space<vmem>>, vector<1x128xf32>
    %4 = vector.broadcast %3 : vector<1x128xf32> to vector<8x128xf32>
    %5 = arith.addf %2, %4 : vector<8x128xf32>
    %c0_5 = arith.constant 0 : index
    %c0_6 = arith.constant 0 : index
    %6 = vector.load %arg5[%c0_5, %c0_6] : memref<8x128xf32, #tpu.memory_space<vmem>>, vector<8x128xf32>
    tpu.vector_store %arg5[%c0_5, %c0_6], %5 {strides = array<i32>} : memref<8x128xf32, #tpu.memory_space<vmem>>, vector<8x128xf32>,
    return
  }
  func.func @transform_0(%arg0: i32, %arg1: i32) -> (i32, i32) {
    %c0_i32 = arith.constant 0 : i32
    %c0_i32_0 = arith.constant 0 : i32
    return %arg0, %c0_i32 : i32, i32
  }
  func.func @transform_1(%arg0: i32, %arg1: i32) -> (i32, i32) {
    %c0_i32 = arith.constant 0 : i32
    %c0_i32_0 = arith.constant 0 : i32
    return %c0_i32, %arg1 : i32, i32
  }
  func.func @transform_2(%arg0: i32, %arg1: i32) -> (i32, i32) {
    %c0_i32 = arith.constant 0 : i32
    %c0_i32_0 = arith.constant 0 : i32
    return %c0_i32, %arg1 : i32, i32
  }
  func.func @transform_3(%arg0: i32, %arg1: i32) -> (i32, i32) {
    %c0_i32 = arith.constant 0 : i32
    return %arg0, %arg1 : i32, i32
  }
}

</mosaic_0001>

<llo_original>
// kernel: edgegan_forward.19
$region0: #{edgegan_forward.19}
  #allocation0 [shape = 'u32[]', space=smem, size = 0x4, offset = 0x4, fixed_abs, tag = 'smem constant byte address 0x4 - core index']
  #allocation1 [shape = 'u32[144,128]{1,0:T(1,128)}', space=vmem, size = 0x12000, scoped, tag = 'internal scratch']
  %s0 = inlined_call_operand.vmem [shape: bf16[8,128], index: 0, kind: input, shape index: {}]
  %s1 = inlined_call_operand.vmem [shape: bf16[128,1024], index: 1, kind: input, shape index: {}]
  %s2 = inlined_call_operand.vmem [shape: f32[1,1024], index: 2, kind: input, shape index: {}]
  %s3 = inlined_call_operand.vmem [shape: f32[8,1024], index: 3, kind: output, shape index: {}]
  %s4 = sld [smem:[#allocation0]]
  $region83: #{edgegan_forward.19} parent=0
    _
  %s6 = ssub.s32 1, %s4
  %s7 = scalar_select 0, %s6, %s4
  $region1: #{edgegan_forward.19} parent=0
    #allocation2 [shape = 'u8[131072]{0}', space=vmem, size = 0x20000, scoped, tag = 'input window, operand 1']
    loop: start=0, step=1, limit=6
    $region2: #{edgegan_forward.19} parent=1 // loop_pre_header
      _
    $region3: #{edgegan_forward.19} parent=1 // loop_header
      %s9 = sphi 0, %s13
      %p10 = scmp.ge.s32.totalorder %s9, 6
      %s16 = sphi 0, %s28
      %s17 = sphi 0, %s24
      %s18 = sphi 0, %s16
      %s19 = sphi 0, %s17
      %s20 = sphi 0, %s18
      %s21 = sphi 0, %s19
      %s31 = sphi 0, %s33
      %s34 = sphi 0, %s31
      %s35 = sphi 0, %s34
      %s51 = sphi 0, %s35
      %s57 = sphi 0, %s59
      %s60 = sphi 0, %s57
      %s61 = sphi 0, %s60
      %s77 = sphi 0, %s61
      %s83 = sphi 0, %s85
      %s86 = sphi 0, %s83
      %s87 = sphi 0, %s86
      %s103 = sphi 0, %s87
      %s111 = sphi 0, %s113
      %s114 = sphi 0, %s111
      %s115 = sphi 0, %s114
      %s131 = sphi 0, %s115
    $region4: #{edgegan_forward.19} parent=1 // loop_header_branch
      %12 = sbr.rel (%p10) target = $region8
    $region5: #{edgegan_forward.19} parent=1 // loop_body
      %s14 = ssub.s32 %s9, 1
      %s15 = ssub.s32 %s9, 2
      %s22 = sadd.s32 1, %s17
      %p23 = scmp.ge.s32.totalorder %s22, 4
      %s24 = scalar_select %p23, 0, %s22
      %s25 = sadd.s32 1, %s16
      %s26 = scalar_select %p23, %s25, %s16
      %p27 = scmp.ge.s32.totalorder %s26, 1
      %s28 = scalar_select %p27, 0, %s26
      %s29 = ssub.s32 %s16, %s28
      %p30 = scmp.eq.s32.totalorder %s29, 0
      %s32 = sadd.s32 %s31, 1
      %s33 = scalar_select %p30, %s31, %s32
      %p36 = pneg %p30
      %p37 = scmp.eq.s32.totalorder %s9, 3
      %p38 = por %p36, %p37
      %p39 = scmp.ne.s32.totalorder %s31, %s34
      %p40 = scmp.eq.s32.totalorder %s9, 0
      %p41 = por %p39, %p40
      %p42 = scmp.ne.s32.totalorder %s31, %s34
      %p43 = scmp.eq.s32.totalorder %s14, 3
      %p44 = por %p42, %p43
      %p45 = scmp.ne.s32.totalorder %s34, %s35
      %p46 = scmp.eq.s32.totalorder %s14, 0
      %p47 = por %p45, %p46
      %p48 = scmp.ne.s32.totalorder %s34, %s35
      %p49 = scmp.eq.s32.totalorder %s15, 3
      %p50 = por %p48, %p49
      %p52 = scmp.ne.s32.totalorder %s35, %s51
      %p53 = scmp.eq.s32.totalorder %s15, 0
      %p54 = por %p52, %p53
      %s55 = ssub.s32 %s17, %s24
      %p56 = scmp.eq.s32.totalorder %s55, 0
      %s58 = sadd.s32 %s57, 1
      %s59 = scalar_select %p56, %s57, %s58
      %p62 = pneg %p56
      %p63 = scmp.eq.s32.totalorder %s9, 3
      %p64 = por %p62, %p63
      %p65 = scmp.ne.s32.totalorder %s57, %s60
      %p66 = scmp.eq.s32.totalorder %s9, 0
      %p67 = por %p65, %p66
      %p68 = scmp.ne.s32.totalorder %s57, %s60
      %p69 = scmp.eq.s32.totalorder %s14, 3
      %p70 = por %p68, %p69
      %p71 = scmp.ne.s32.totalorder %s60, %s61
      %p72 = scmp.eq.s32.totalorder %s14, 0
      %p73 = por %p71, %p72
      %p74 = scmp.ne.s32.totalorder %s60, %s61
      %p75 = scmp.eq.s32.totalorder %s15, 3
      %p76 = por %p74, %p75
      %p78 = scmp.ne.s32.totalorder %s61, %s77
      %p79 = scmp.eq.s32.totalorder %s15, 0
      %p80 = por %p78, %p79
      %s81 = ssub.s32 %s17, %s24
      %p82 = scmp.eq.s32.totalorder %s81, 0
      %s84 = sadd.s32 %s83, 1
      %s85 = scalar_select %p82, %s83, %s84
      %p88 = pneg %p82
      %p89 = scmp.eq.s32.totalorder %s9, 3
      %p90 = por %p88, %p89
      %p91 = scmp.ne.s32.totalorder %s83, %s86
      %p92 = scmp.eq.s32.totalorder %s9, 0
      %p93 = por %p91, %p92
      %p94 = scmp.ne.s32.totalorder %s83, %s86
      %p95 = scmp.eq.s32.totalorder %s14, 3
      %p96 = por %p94, %p95
      %p97 = scmp.ne.s32.totalorder %s86, %s87
      %p98 = scmp.eq.s32.totalorder %s14, 0
      %p99 = por %p97, %p98
      %p100 = scmp.ne.s32.totalorder %s86, %s87
      %p101 = scmp.eq.s32.totalorder %s15, 3
      %p102 = por %p100, %p101
      %p104 = scmp.ne.s32.totalorder %s87, %s103
      %p105 = scmp.eq.s32.totalorder %s15, 0
      %p106 = por %p104, %p105
      %s107 = ssub.s32 %s16, %s28
      %s108 = ssub.s32 %s17, %s24
      %s109 = sor.u32 %s107, %s108
      %p110 = scmp.eq.s32.totalorder %s109, 0
      %s112 = sadd.s32 %s111, 1
      %s113 = scalar_select %p110, %s111, %s112
      %p116 = pneg %p110
      %p117 = scmp.eq.s32.totalorder %s9, 3
      %p118 = por %p116, %p117
      %p119 = scmp.ne.s32.totalorder %s111, %s114
      %p120 = scmp.eq.s32.totalorder %s9, 0
      %p121 = por %p119, %p120
      %p122 = scmp.ne.s32.totalorder %s111, %s114
      %p123 = scmp.eq.s32.totalorder %s14, 3
      %p124 = por %p122, %p123
      %p125 = scmp.ne.s32.totalorder %s114, %s115
      %p126 = scmp.eq.s32.totalorder %s14, 0
      %p127 = por %p125, %p126
      %p128 = scmp.ne.s32.totalorder %s114, %s115
      %p129 = scmp.eq.s32.totalorder %s15, 3
      %p130 = por %p128, %p129
      %p132 = scmp.ne.s32.totalorder %s115, %s131
      %p133 = scmp.eq.s32.totalorder %s15, 0
      %p134 = por %p132, %p133
      %p135 = scmp.le.s32.totalorder 1, %s9
      %p136 = scmp.lt.s32.totalorder %s9, 5
      %p137 = pnand %p135, %p136
      %p138 = pneg %p137
      // Predicated region
      $region9: #{edgegan_forward.19} parent=5 // pred_check
        _
      $region10: #{edgegan_forward.19} parent=5 // pred_check_branch
        %140 = sbr.rel (%p137) target = $region12
      $region11: #{edgegan_forward.19} parent=5 // pred_region
        %s141 = ssub.s32 %s9, 1
        // Predicated region
        $region13: #{edgegan_forward.19} parent=11 // pred_check
          %p142 = pneg %p47
        $region14: #{edgegan_forward.19} parent=11 // pred_check_branch
          %144 = sbr.rel (%p142) target = $region16
        $region15: #{edgegan_forward.19} parent=11 // pred_region
          %p145 = scmp.lt.s32.totalorder %s18, 0
          %s146 = scalar_select %p145, %s18, 0
          %s147 = smul.addr %s146, 4
          %s148 = scalar_lea.vmem %s0, %s147
        $region16: #{edgegan_forward.19} parent=11 // pred_fallthru
          _
      $region12: #{edgegan_forward.19} parent=5 // pred_fallthru
        _
      %p149 = scmp.lt.s32.totalorder %s9, 4
      // Predicated region
      $region17: #{edgegan_forward.19} parent=5 // pred_check
        %p150 = pneg %p149
      $region18: #{edgegan_forward.19} parent=5 // pred_check_branch
        %152 = sbr.rel (%p150) target = $region20
      $region19: #{edgegan_forward.19} parent=5 // pred_region
        // Predicated region
        $region21: #{edgegan_forward.19} parent=19 // pred_check
          %p153 = pneg %p67
        $region22: #{edgegan_forward.19} parent=19 // pred_check_branch
          %155 = sbr.rel (%p153) target = $region24
        $region23: #{edgegan_forward.19} parent=19 // pred_region
          %s156 = sand.u32 %s57, 1
          %s157 = sand.u32 %s57, 1
          %s158 = smul.addr %s157, 128
          %s159 = scalar_lea.vmem [#allocation2], %s158
          %s160 = smul.u32 2, %s17
          %s161 = smul.addr %s160, 4
          %s162 = scalar_lea.vmem %s1, %s161
          // Predicated region
          $region25: #{edgegan_forward.19} parent=23 // pred_check
            _
          $region26: #{edgegan_forward.19} parent=23 // pred_check_branch
            %164 = sbr.rel (0) target = $region28
          $region27: #{edgegan_forward.19} parent=23 // pred_region
            // Predicated region
            $region29: #{edgegan_forward.19} parent=27 // pred_check
              _
            $region30: #{edgegan_forward.19} parent=27 // pred_check_branch
              %166 = sbr.rel (0) target = $region32
            $region31: #{edgegan_forward.19} parent=27 // pred_region
              // Predicated region
              $region44: #{edgegan_forward.19} parent=31 // pred_check
                _
              $region45: #{edgegan_forward.19} parent=31 // pred_check_branch
                %212 = sbr.rel (0) target = $region47
              $region46: #{edgegan_forward.19} parent=31 // pred_region
                loop: start=0, step=1, limit=1
                $region48: #{edgegan_forward.19} parent=46 // loop_pre_header
                  _
                $region49: #{edgegan_forward.19} parent=46 // loop_header
                  %s214 = sphi 0, %s218
                  %p215 = scmp.ge.s32.totalorder %s214, 1
                  %s219 = sphi %s162, %s162
                  %s220 = sphi %s159, %s159
                $region50: #{edgegan_forward.19} parent=46 // loop_header_branch
                  %217 = sbr.rel (%p215) target = $region54
                $region51: #{edgegan_forward.19} parent=46 // loop_body
                  %v221 = vld [vmem:[%s219] sm:$0xff]
                  %222 = vst [vmem:[%s220] sm:$0xff] %v221
                  %v223 = vld [vmem:[%s219 + $0x20] sm:$0xff]
                  %224 = vst [vmem:[%s220 + $0x8] sm:$0xff] %v223
                  %v225 = vld [vmem:[%s219 + $0x40] sm:$0xff]
                  %226 = vst [vmem:[%s220 + $0x10] sm:$0xff] %v225
                  %v227 = vld [vmem:[%s219 + $0x60] sm:$0xff]
                  %228 = vst [vmem:[%s220 + $0x18] sm:$0xff] %v227
                  %v229 = vld [vmem:[%s219 + $0x80] sm:$0xff]
                  %230 = vst [vmem:[%s220 + $0x20] sm:$0xff] %v229
                  %v231 = vld [vmem:[%s219 + $0xa0] sm:$0xff]
                  %232 = vst [vmem:[%s220 + $0x28] sm:$0xff] %v231
                  %v233 = vld [vmem:[%s219 + $0xc0] sm:$0xff]
                  %234 = vst [vmem:[%s220 + $0x30] sm:$0xff] %v233
                  %v235 = vld [vmem:[%s219 + $0xe0] sm:$0xff]
                  %236 = vst [vmem:[%s220 + $0x38] sm:$0xff] %v235
                  %v237 = vld [vmem:[%s219 + $0x100] sm:$0xff]
                  %238 = vst [vmem:[%s220 + $0x40] sm:$0xff] %v237
                  %v239 = vld [vmem:[%s219 + $0x120] sm:$0xff]
                  %240 = vst [vmem:[%s220 + $0x48] sm:$0xff] %v239
                  %v241 = vld [vmem:[%s219 + $0x140] sm:$0xff]
                  %242 = vst [vmem:[%s220 + $0x50] sm:$0xff] %v241
                  %v243 = vld [vmem:[%s219 + $0x160] sm:$0xff]
                  %244 = vst [vmem:[%s220 + $0x58] sm:$0xff] %v243
                  %v245 = vld [vmem:[%s219 + $0x180] sm:$0xff]
                  %246 = vst [vmem:[%s220 + $0x60] sm:$0xff] %v245
                  %v247 = vld [vmem:[%s219 + $0x1a0] sm:$0xff]
                  %248 = vst [vmem:[%s220 + $0x68] sm:$0xff] %v247
                  %v249 = vld [vmem:[%s219 + $0x1c0] sm:$0xff]
                  %250 = vst [vmem:[%s220 + $0x70] sm:$0xff] %v249
                  %v251 = vld [vmem:[%s219 + $0x1e0] sm:$0xff]
                  %252 = vst [vmem:[%s220 + $0x78] sm:$0xff] %v251
                $region52: #{edgegan_forward.19} parent=46 // loop_footer
                  %s218 = sadd.s32 1, %s214
                $region53: #{edgegan_forward.19} parent=46 // loop_footer_branch
                  %213 = sbr.rel target = $region49
                $region54: #{edgegan_forward.19} parent=46 // loop_exit
                  _
              $region47: #{edgegan_forward.19} parent=31 // pred_fallthru
                _
              // Predicated region
              $region55: #{edgegan_forward.19} parent=31 // pred_check
                _
              $region56: #{edgegan_forward.19} parent=31 // pred_check_branch
                %254 = sbr.rel target = $region58
              $region57: #{edgegan_forward.19} parent=31 // pred_region
                _
              $region58: #{edgegan_forward.19} parent=31 // pred_fallthru
                _
            $region32: #{edgegan_forward.19} parent=27 // pred_fallthru
              _
            // Predicated region
            $region33: #{edgegan_forward.19} parent=27 // pred_check
              _
            $region34: #{edgegan_forward.19} parent=27 // pred_check_branch
              %168 = sbr.rel target = $region36
            $region35: #{edgegan_forward.19} parent=27 // pred_region
              %s170 = ssub.s32 256, 1
              loop: start=0, step=1, limit=1
              $region37: #{edgegan_forward.19} parent=35 // loop_pre_header
                _
              $region38: #{edgegan_forward.19} parent=35 // loop_header
                %s172 = sphi 0, %s176
                %p173 = scmp.ge.s32.totalorder %s172, 1
                %s177 = sphi %s162, %s162
                %s178 = sphi %s159, %s159
              $region39: #{edgegan_forward.19} parent=35 // loop_header_branch
                %175 = sbr.rel (%p173) target = $region43
              $region40: #{edgegan_forward.19} parent=35 // loop_body
                %v179 = vld [vmem:[%s177] sm:%s170]
                %180 = vst [vmem:[%s178] sm:%s170] %v179
                %v181 = vld [vmem:[%s177 + $0x20] sm:%s170]
                %182 = vst [vmem:[%s178 + $0x8] sm:%s170] %v181
                %v183 = vld [vmem:[%s177 + $0x40] sm:%s170]
                %184 = vst [vmem:[%s178 + $0x10] sm:%s170] %v183
                %v185 = vld [vmem:[%s177 + $0x60] sm:%s170]
                %186 = vst [vmem:[%s178 + $0x18] sm:%s170] %v185
                %v187 = vld [vmem:[%s177 + $0x80] sm:%s170]
                %188 = vst [vmem:[%s178 + $0x20] sm:%s170] %v187
                %v189 = vld [vmem:[%s177 + $0xa0] sm:%s170]
                %190 = vst [vmem:[%s178 + $0x28] sm:%s170] %v189
                %v191 = vld [vmem:[%s177 + $0xc0] sm:%s170]
                %192 = vst [vmem:[%s178 + $0x30] sm:%s170] %v191
                %v193 = vld [vmem:[%s177 + $0xe0] sm:%s170]
                %194 = vst [vmem:[%s178 + $0x38] sm:%s170] %v193
                %v195 = vld [vmem:[%s177 + $0x100] sm:%s170]
                %196 = vst [vmem:[%s178 + $0x40] sm:%s170] %v195
                %v197 = vld [vmem:[%s177 + $0x120] sm:%s170]
                %198 = vst [vmem:[%s178 + $0x48] sm:%s170] %v197
                %v199 = vld [vmem:[%s177 + $0x140] sm:%s170]
                %200 = vst [vmem:[%s178 + $0x50] sm:%s170] %v199
                %v201 = vld [vmem:[%s177 + $0x160] sm:%s170]
                %202 = vst [vmem:[%s178 + $0x58] sm:%s170] %v201
                %v203 = vld [vmem:[%s177 + $0x180] sm:%s170]
                %204 = vst [vmem:[%s178 + $0x60] sm:%s170] %v203
                %v205 = vld [vmem:[%s177 + $0x1a0] sm:%s170]
                %206 = vst [vmem:[%s178 + $0x68] sm:%s170] %v205
                %v207 = vld [vmem:[%s177 + $0x1c0] sm:%s170]
                %208 = vst [vmem:[%s178 + $0x70] sm:%s170] %v207
                %v209 = vld [vmem:[%s177 + $0x1e0] sm:%s170]
                %210 = vst [vmem:[%s178 + $0x78] sm:%s170] %v209
              $region41: #{edgegan_forward.19} parent=35 // loop_footer
                %s176 = sadd.s32 1, %s172
              $region42: #{edgegan_forward.19} parent=35 // loop_footer_branch
                %171 = sbr.rel target = $region38
              $region43: #{edgegan_forward.19} parent=35 // loop_exit
                _
            $region36: #{edgegan_forward.19} parent=27 // pred_fallthru
              _
          $region28: #{edgegan_forward.19} parent=23 // pred_fallthru
            _
          %255 = vnop
        $region24: #{edgegan_forward.19} parent=19 // pred_fallthru
          _
        // Predicated region
        $region59: #{edgegan_forward.19} parent=19 // pred_check
          %p256 = pneg %p93
        $region60: #{edgegan_forward.19} parent=19 // pred_check_branch
          %258 = sbr.rel (%p256) target = $region62
        $region61: #{edgegan_forward.19} parent=19 // pred_region
          %s259 = smul.u32 2, %s17
          %p260 = scmp.lt.s32.totalorder %s259, 7
          %s261 = scalar_select %p260, %s259, 7
          %s262 = scalar_lea.vmem %s2, %s261
          %s263 = smul.u32 2, %s17
        $region62: #{edgegan_forward.19} parent=19 // pred_fallthru
          _
      $region20: #{edgegan_forward.19} parent=5 // pred_fallthru
        _
      %p264 = scmp.le.s32.totalorder 1, %s9
      %p265 = scmp.lt.s32.totalorder %s9, 5
      %p266 = pnand %p264, %p265
      %p267 = pneg %p266
      // Predicated region
      $region63: #{edgegan_forward.19} parent=5 // pred_check
        _
      $region64: #{edgegan_forward.19} parent=5 // pred_check_branch
        %269 = sbr.rel (%p266) target = $region66
      $region65: #{edgegan_forward.19} parent=5 // pred_region
        %s270 = ssub.s32 %s9, 1
        %s271 = sand.u32 %s60, 1
        %s272 = sand.u32 %s60, 1
        %s273 = smul.addr %s272, 128
        %s274 = scalar_lea.vmem [#allocation2], %s273
        // Predicated region
        $region67: #{edgegan_forward.19} parent=65 // pred_check
          %p275 = pneg %p73
        $region68: #{edgegan_forward.19} parent=65 // pred_check_branch
          %277 = sbr.rel (%p275) target = $region70
        $region69: #{edgegan_forward.19} parent=65 // pred_region
          _
        $region70: #{edgegan_forward.19} parent=65 // pred_fallthru
          _
        %p278 = scmp.lt.s32.totalorder %s18, 0
        %s279 = scalar_select %p278, %s18, 0
        %s280 = smul.addr %s279, 4
        %s281 = scalar_lea.vmem %s0, %s280
        %p282 = pneg %p47
        %p283 = pneg %p44
        %s284 = sand.u32 %s60, 1
        %s285 = sand.u32 %s60, 1
        %s286 = smul.addr %s285, 128
        %s287 = scalar_lea.vmem [#allocation2], %s286
        %p288 = pneg %p73
        %p289 = pneg %p70
        %s290 = smul.u32 2, %s19
        %p291 = scmp.lt.s32.totalorder %s290, 7
        %s292 = scalar_select %p291, %s290, 7
        %s293 = scalar_lea.vmem %s2, %s292
        %p294 = pneg %p99
        %p295 = pneg %p96
        %p296 = pneg %p127
        %p297 = pneg %p124
        %s298 = smul.u32 2, %s19
        %p299 = scmp.lt.s32.totalorder %s18, 0
        %s300 = scalar_select %p299, %s18, 0
        %p301 = scmp.lt.s32.totalorder %s298, 7
        %s302 = scalar_select %p301, %s298, 7
        %s303 = smul.addr %s300, 8
        %s304 = sadd.s32 %s302, %s303
        %s305 = smul.addr %s304, 8
        %s306 = scalar_lea.vmem %s3, %s305
        %p307 = scmp.lt.s32.totalorder %s18, 0
        %s308 = scalar_select %p307, %s18, 0
        %s309 = smul.addr %s308, 4
        %s310 = scalar_lea.vmem %s0, %s309
        %s311 = smul.u32 2, %s19
        %s312 = smul.u32 2, %s19
        %p313 = scmp.lt.s32.totalorder %s312, 7
        %s314 = scalar_select %p313, %s312, 7
        %s315 = scalar_lea.vmem %s2, %s314
        %s316 = smul.u32 2, %s19
        %s317 = smul.u32 2, %s19
        %p318 = scmp.lt.s32.totalorder %s18, 0
        %s319 = scalar_select %p318, %s18, 0
        %p320 = scmp.lt.s32.totalorder %s317, 7
        %s321 = scalar_select %p320, %s317, 7
        %s322 = smul.addr %s319, 8
        %s323 = sadd.s32 %s321, %s322
        %s324 = smul.addr %s323, 8
        %s325 = scalar_lea.vmem %s3, %s324
        %s326 = smul.u32 2, %s19
        %v328 = vld [vmem:[%s310] sm:$0xf]
        %v329 = vld [vmem:[%s274] sm:$0xff]
        %v330 = vld [vmem:[%s274 + $0x8] sm:$0xff]
        %v331 = vld [vmem:[%s274 + $0x10] sm:$0xff]
        %v332 = vld [vmem:[%s274 + $0x18] sm:$0xff]
        %v333 = vld [vmem:[%s274 + $0x20] sm:$0xff]
        %v334 = vld [vmem:[%s274 + $0x28] sm:$0xff]
        %v335 = vld [vmem:[%s274 + $0x30] sm:$0xff]
        %v336 = vld [vmem:[%s274 + $0x38] sm:$0xff]
        %v337 = vld [vmem:[%s274 + $0x40] sm:$0xff]
        %v338 = vld [vmem:[%s274 + $0x48] sm:$0xff]
        %v339 = vld [vmem:[%s274 + $0x50] sm:$0xff]
        %v340 = vld [vmem:[%s274 + $0x58] sm:$0xff]
        %v341 = vld [vmem:[%s274 + $0x60] sm:$0xff]
        %v342 = vld [vmem:[%s274 + $0x68] sm:$0xff]
        %v343 = vld [vmem:[%s274 + $0x70] sm:$0xff]
        %v344 = vld [vmem:[%s274 + $0x78] sm:$0xff]
        %v345 = vld [vmem:[%s315] sm:$0x3]
        %v347 = vlaneseq
        %v348 = vshrl.u32 %v347, 7
        %v349 = vsub.s32 0, %v348
        %v350 = vrot.slane %v345, %v349
        %v351 = vlaneseq
        %v352 = vshrl.u32 %v351, 7
        %v353 = vsub.s32 1, %v352
        %v354 = vrot.slane %v345, %v353
        %v373 = vunpack.c.l.b16 %v329
        %v374 = vunpack.c.h.b16 %v329
        %v375 = vunpack.c.l.b16 %v330
        %v376 = vunpack.c.h.b16 %v330
        %v377 = vunpack.c.l.b16 %v331
        %v378 = vunpack.c.h.b16 %v331
        %v379 = vunpack.c.l.b16 %v332
        %v380 = vunpack.c.h.b16 %v332
        %v381 = vunpack.c.l.b16 %v333
        %v382 = vunpack.c.h.b16 %v333
        %v383 = vunpack.c.l.b16 %v334
        %v384 = vunpack.c.h.b16 %v334
        %v385 = vunpack.c.l.b16 %v335
        %v386 = vunpack.c.h.b16 %v335
        %v387 = vunpack.c.l.b16 %v336
        %v388 = vunpack.c.h.b16 %v336
        %v389 = vunpack.c.l.b16 %v337
        %v390 = vunpack.c.h.b16 %v337
        %v391 = vunpack.c.l.b16 %v338
        %v392 = vunpack.c.h.b16 %v338
        %v393 = vunpack.c.l.b16 %v339
        %v394 = vunpack.c.h.b16 %v339
        %v395 = vunpack.c.l.b16 %v340
        %v396 = vunpack.c.h.b16 %v340
        %v397 = vunpack.c.l.b16 %v341
        %v398 = vunpack.c.h.b16 %v341
        %v399 = vunpack.c.l.b16 %v342
        %v400 = vunpack.c.h.b16 %v342
        %v401 = vunpack.c.l.b16 %v343
        %v402 = vunpack.c.h.b16 %v343
        %v403 = vunpack.c.l.b16 %v344
        %v404 = vunpack.c.h.b16 %v344
        %v405 = vpack.c.b16 %v375, %v373
        %v406 = vpack.c.b16 %v376, %v374
        %v407 = vpack.c.b16 %v379, %v377
        %v408 = vpack.c.b16 %v380, %v378
        %v409 = vpack.c.b16 %v383, %v381
        %v410 = vpack.c.b16 %v384, %v382
        %v411 = vpack.c.b16 %v387, %v385
        %v412 = vpack.c.b16 %v388, %v386
        %v413 = vpack.c.b16 %v391, %v389
        %v414 = vpack.c.b16 %v392, %v390
        %v415 = vpack.c.b16 %v395, %v393
        %v416 = vpack.c.b16 %v396, %v394
        %v417 = vpack.c.b16 %v399, %v397
        %v418 = vpack.c.b16 %v400, %v398
        %v419 = vpack.c.b16 %v403, %v401
        %v420 = vpack.c.b16 %v404, %v402
        %437 = vmatprep.subr.bf16.mxu0 %v420
        %438 = vmatpush1.bf16.msra.mxu0 %v419
        %439 = vmatprep.subr.bf16.mxu0 %v418
        %440 = vmatpush1.bf16.msra.mxu0 %v417
        %441 = vmatprep.subr.bf16.mxu0 %v416
        %442 = vmatpush1.bf16.msra.mxu0 %v415
        %443 = vmatprep.subr.bf16.mxu0 %v414
        %444 = vmatpush1.bf16.msra.mxu0 %v413
        %445 = vmatprep.subr.bf16.mxu0 %v412
        %446 = vmatpush1.bf16.msra.mxu0 %v411
        %447 = vmatprep.subr.bf16.mxu0 %v410
        %448 = vmatpush1.bf16.msra.mxu0 %v409
        %449 = vmatprep.subr.bf16.mxu0 %v408
        %450 = vmatpush1.bf16.msra.mxu0 %v407
        %451 = vmatprep.subr.bf16.mxu0 %v406
        %452 = vmatpush1.bf16.msra.mxu0 %v405
        %453 = vmatprep.subr.bf16.mxu0 0
        %454 = vmatpush2.bf16.msra.mxu0 0
        %455 = vmatprep.subr.bf16.mxu0 0
        %456 = vmatpush2.bf16.msra.mxu0 0
        %457 = vmatprep.subr.bf16.mxu0 0
        %458 = vmatpush2.bf16.msra.mxu0 0
        %459 = vmatprep.subr.bf16.mxu0 0
        %460 = vmatpush2.bf16.msra.mxu0 0
        %461 = vmatprep.subr.bf16.mxu0 0
        %462 = vmatpush2.bf16.msra.mxu0 0
        %463 = vmatprep.subr.bf16.mxu0 0
        %464 = vmatpush2.bf16.msra.mxu0 0
        %465 = vmatprep.subr.bf16.mxu0 0
        %466 = vmatpush2.bf16.msra.mxu0 0
        %467 = vmatprep.subr.bf16.mxu0 0
        %468 = vmatpush2.bf16.msra.mxu0 0
        %469 = vmatprep.mubr.bf16.mxu0 0
        %470 = vmatmul.mubr.bf16.gmra.mxu0 %v328
        %v471 = vpop.f32.mrf.mxu0
        %v472 = vadd.f32 %v350, %v471
        %v473 = vpop.f32.mrf.mxu0
        %v474 = vadd.f32 %v354, %v473
        %v475 = vpop.f32.mrf.mxu0
        %v476 = vpop.f32.mrf.mxu0
        %477 = vdwg.mxu0
        %v478 = vmax.f32 %v472, 0.0
        %v479 = vmax.f32 %v474, 0.0
        %480 = vst [vmem:[%s325] sm:$0xff] %v478
        %481 = vst [vmem:[%s325 + $0x8] sm:$0xff] %v479
        %s482 = smul.u32 2, %s19
        %p483 = scmp.lt.s32.totalorder %s18, 0
        %s484 = scalar_select %p483, %s18, 0
        %p485 = scmp.lt.s32.totalorder %s482, 7
        %s486 = scalar_select %p485, %s482, 7
        %s487 = smul.addr %s484, 8
        %s488 = sadd.s32 %s486, %s487
        %s489 = smul.addr %s488, 8
        %s490 = scalar_lea.vmem %s3, %s489
        // Predicated region
        $region71: #{edgegan_forward.19} parent=65 // pred_check
          %p491 = pneg %p124
        $region72: #{edgegan_forward.19} parent=65 // pred_check_branch
          %493 = sbr.rel (%p491) target = $region74
        $region73: #{edgegan_forward.19} parent=65 // pred_region
          %s494 = smul.u32 2, %s19
        $region74: #{edgegan_forward.19} parent=65 // pred_fallthru
          _
      $region66: #{edgegan_forward.19} parent=5 // pred_fallthru
        _
      %p495 = scmp.le.s32.totalorder 2, %s9
      // Predicated region
      $region75: #{edgegan_forward.19} parent=5 // pred_check
        %p496 = pneg %p495
      $region76: #{edgegan_forward.19} parent=5 // pred_check_branch
        %498 = sbr.rel (%p496) target = $region78
      $region77: #{edgegan_forward.19} parent=5 // pred_region
        %s499 = ssub.s32 %s9, 2
        // Predicated region
        $region79: #{edgegan_forward.19} parent=77 // pred_check
          %p500 = pneg %p130
        $region80: #{edgegan_forward.19} parent=77 // pred_check_branch
          %502 = sbr.rel (%p500) target = $region82
        $region81: #{edgegan_forward.19} parent=77 // pred_region
          %s503 = smul.u32 2, %s21
          %p504 = scmp.lt.s32.totalorder %s20, 0
          %s505 = scalar_select %p504, %s20, 0
          %p506 = scmp.lt.s32.totalorder %s503, 7
          %s507 = scalar_select %p506, %s503, 7
          %s508 = smul.addr %s505, 8
          %s509 = sadd.s32 %s507, %s508
          %s510 = smul.addr %s509, 8
          %s511 = scalar_lea.vmem %s3, %s510
        $region82: #{edgegan_forward.19} parent=77 // pred_fallthru
          _
      $region78: #{edgegan_forward.19} parent=5 // pred_fallthru
        _
    $region6: #{edgegan_forward.19} parent=1 // loop_footer
      %s13 = sadd.s32 1, %s9
    $region7: #{edgegan_forward.19} parent=1 // loop_footer_branch
      %8 = sbr.rel target = $region3
    $region8: #{edgegan_forward.19} parent=1 // loop_exit
      _

// kernel: edgegan_forward.20
$region0: #{edgegan_forward.20}
  #allocation0 [shape = 'u32[]', space=smem, size = 0x4, offset = 0x4, fixed_abs, tag = 'smem constant byte address 0x4 - core index']
  #allocation1 [shape = 'u32[144,128]{1,0:T(1,128)}', space=vmem, size = 0x12000, scoped, tag = 'internal scratch']
  %s0 = inlined_call_operand.vmem [shape: bf16[128,1024], index: 0, kind: input, shape index: {}]
  %s1 = inlined_call_operand.vmem [shape: bf16[1024,128], index: 1, kind: input, shape index: {}]
  %s2 = inlined_call_operand.vmem [shape: f32[1,128], index: 2, kind: input, shape index: {}]
  %s3 = inlined_call_operand.vmem [shape: f32[128,128], index: 3, kind: output, shape index: {}]
  %s4 = sld [smem:[#allocation0]]
  $region22: #{edgegan_forward.20} parent=0
    _
  %s6 = ssub.s32 1, %s4
  %s7 = scalar_select 0, %s6, %s4
  // Predicated region
  $region2: #{edgegan_forward.20} parent=0 // pred_check
    _
  $region3: #{edgegan_forward.20} parent=0 // pred_check_branch
    %9 = sbr.rel (0) target = $region5
  $region4: #{edgegan_forward.20} parent=0 // pred_region
    _
  $region5: #{edgegan_forward.20} parent=0 // pred_fallthru
    _
  // Predicated region
  $region6: #{edgegan_forward.20} parent=0 // pred_check
    _
  $region7: #{edgegan_forward.20} parent=0 // pred_check_branch
    %11 = sbr.rel (0) target = $region9
  $region8: #{edgegan_forward.20} parent=0 // pred_region
    _
  $region9: #{edgegan_forward.20} parent=0 // pred_fallthru
    _
  // Predicated region
  $region10: #{edgegan_forward.20} parent=0 // pred_check
    _
  $region11: #{edgegan_forward.20} parent=0 // pred_check_branch
    %13 = sbr.rel (0) target = $region13
  $region12: #{edgegan_forward.20} parent=0 // pred_region
    _
  $region13: #{edgegan_forward.20} parent=0 // pred_fallthru
    _
  %v15 = vld [vmem:[%s0] sm:$0xff]
  %v16 = vld [vmem:[%s0 + $0x8] sm:$0xff]
  %v17 = vld [vmem:[%s0 + $0x10] sm:$0xff]
  %v18 = vld [vmem:[%s0 + $0x18] sm:$0xff]
  %v19 = vld [vmem:[%s0 + $0x20] sm:$0xff]
  %v20 = vld [vmem:[%s0 + $0x28] sm:$0xff]
  %v21 = vld [vmem:[%s0 + $0x30] sm:$0xff]
  %v22 = vld [vmem:[%s0 + $0x38] sm:$0xff]
  %v23 = vld [vmem:[%s0 + $0x40] sm:$0xff]
  %v24 = vld [vmem:[%s0 + $0x48] sm:$0xff]
  %v25 = vld [vmem:[%s0 + $0x50] sm:$0xff]
  %v26 = vld [vmem:[%s0 + $0x58] sm:$0xff]
  %v27 = vld [vmem:[%s0 + $0x60] sm:$0xff]
  %v28 = vld [vmem:[%s0 + $0x68] sm:$0xff]
  %v29 = vld [vmem:[%s0 + $0x70] sm:$0xff]
  %v30 = vld [vmem:[%s0 + $0x78] sm:$0xff]
  %v31 = vld [vmem:[%s0 + $0x80] sm:$0xff]
  %v32 = vld [vmem:[%s0 + $0x88] sm:$0xff]
  %v33 = vld [vmem:[%s0 + $0x90] sm:$0xff]
  %v34 = vld [vmem:[%s0 + $0x98] sm:$0xff]
  %v35 = vld [vmem:[%s0 + $0xa0] sm:$0xff]
  %v36 = vld [vmem:[%s0 + $0xa8] sm:$0xff]
  %v37 = vld [vmem:[%s0 + $0xb0] sm:$0xff]
  %v38 = vld [vmem:[%s0 + $0xb8] sm:$0xff]
  %v39 = vld [vmem:[%s0 + $0xc0] sm:$0xff]
  %v40 = vld [vmem:[%s0 + $0xc8] sm:$0xff]
  %v41 = vld [vmem:[%s0 + $0xd0] sm:$0xff]
  %v42 = vld [vmem:[%s0 + $0xd8] sm:$0xff]
  %v43 = vld [vmem:[%s0 + $0xe0] sm:$0xff]
  %v44 = vld [vmem:[%s0 + $0xe8] sm:$0xff]
  %v45 = vld [vmem:[%s0 + $0xf0] sm:$0xff]
  %v46 = vld [vmem:[%s0 + $0xf8] sm:$0xff]
  %v47 = vld [vmem:[%s0 + $0x100] sm:$0xff]
  %v48 = vld [vmem:[%s0 + $0x108] sm:$0xff]
  %v49 = vld [vmem:[%s0 + $0x110] sm:$0xff]
  %v50 = vld [vmem:[%s0 + $0x118] sm:$0xff]
  %v51 = vld [vmem:[%s0 + $0x120] sm:$0xff]
  %v52 = vld [vmem:[%s0 + $0x128] sm:$0xff]
  %v53 = vld [vmem:[%s0 + $0x130] sm:$0xff]
  %v54 = vld [vmem:[%s0 + $0x138] sm:$0xff]
  %v55 = vld [vmem:[%s0 + $0x140] sm:$0xff]
  %v56 = vld [vmem:[%s0 + $0x148] sm:$0xff]
  %v57 = vld [vmem:[%s0 + $0x150] sm:$0xff]
  %v58 = vld [vmem:[%s0 + $0x158] sm:$0xff]
  %v59 = vld [vmem:[%s0 + $0x160] sm:$0xff]
  %v60 = vld [vmem:[%s0 + $0x168] sm:$0xff]
  %v61 = vld [vmem:[%s0 + $0x170] sm:$0xff]
  %v62 = vld [vmem:[%s0 + $0x178] sm:$0xff]
  %v63 = vld [vmem:[%s0 + $0x180] sm:$0xff]
  %v64 = vld [vmem:[%s0 + $0x188] sm:$0xff]
  %v65 = vld [vmem:[%s0 + $0x190] sm:$0xff]
  %v66 = vld [vmem:[%s0 + $0x198] sm:$0xff]
  %v67 = vld [vmem:[%s0 + $0x1a0] sm:$0xff]
  %v68 = vld [vmem:[%s0 + $0x1a8] sm:$0xff]
  %v69 = vld [vmem:[%s0 + $0x1b0] sm:$0xff]
  %v70 = vld [vmem:[%s0 + $0x1b8] sm:$0xff]
  %v71 = vld [vmem:[%s0 + $0x1c0] sm:$0xff]
  %v72 = vld [vmem:[%s0 + $0x1c8] sm:$0xff]
  %v73 = vld [vmem:[%s0 + $0x1d0] sm:$0xff]
  %v74 = vld [vmem:[%s0 + $0x1d8] sm:$0xff]
  %v75 = vld [vmem:[%s0 + $0x1e0] sm:$0xff]
  %v76 = vld [vmem:[%s0 + $0x1e8] sm:$0xff]
  %v77 = vld [vmem:[%s0 + $0x1f0] sm:$0xff]
  %v78 = vld [vmem:[%s0 + $0x1f8] sm:$0xff]
  %v79 = vld [vmem:[%s1] sm:$0xf]
  %v80 = vld [vmem:[%s1 + $0x4] sm:$0xf]
  %v81 = vld [vmem:[%s1 + $0x8] sm:$0xf]
  %v82 = vld [vmem:[%s1 + $0xc] sm:$0xf]
  %v83 = vld [vmem:[%s1 + $0x10] sm:$0xf]
  %v84 = vld [vmem:[%s1 + $0x14] sm:$0xf]
  %v85 = vld [vmem:[%s1 + $0x18] sm:$0xf]
  %v86 = vld [vmem:[%s1 + $0x1c] sm:$0xf]
  %v87 = vld [vmem:[%s1 + $0x20] sm:$0xf]
  %v88 = vld [vmem:[%s1 + $0x24] sm:$0xf]
  %v89 = vld [vmem:[%s1 + $0x28] sm:$0xf]
  %v90 = vld [vmem:[%s1 + $0x2c] sm:$0xf]
  %v91 = vld [vmem:[%s1 + $0x30] sm:$0xf]
  %v92 = vld [vmem:[%s1 + $0x34] sm:$0xf]
  %v93 = vld [vmem:[%s1 + $0x38] sm:$0xf]
  %v94 = vld [vmem:[%s1 + $0x3c] sm:$0xf]
  %v95 = vld [vmem:[%s1 + $0x40] sm:$0xf]
  %v96 = vld [vmem:[%s1 + $0x44] sm:$0xf]
  %v97 = vld [vmem:[%s1 + $0x48] sm:$0xf]
  %v98 = vld [vmem:[%s1 + $0x4c] sm:$0xf]
  %v99 = vld [vmem:[%s1 + $0x50] sm:$0xf]
  %v100 = vld [vmem:[%s1 + $0x54] sm:$0xf]
  %v101 = vld [vmem:[%s1 + $0x58] sm:$0xf]
  %v102 = vld [vmem:[%s1 + $0x5c] sm:$0xf]
  %v103 = vld [vmem:[%s1 + $0x60] sm:$0xf]
  %v104 = vld [vmem:[%s1 + $0x64] sm:$0xf]
  %v105 = vld [vmem:[%s1 + $0x68] sm:$0xf]
  %v106 = vld [vmem:[%s1 + $0x6c] sm:$0xf]
  %v107 = vld [vmem:[%s1 + $0x70] sm:$0xf]
  %v108 = vld [vmem:[%s1 + $0x74] sm:$0xf]
  %v109 = vld [vmem:[%s1 + $0x78] sm:$0xf]
  %v110 = vld [vmem:[%s1 + $0x7c] sm:$0xf]
  %v111 = vld [vmem:[%s1 + $0x80] sm:$0xf]
  %v112 = vld [vmem:[%s1 + $0x84] sm:$0xf]
  %v113 = vld [vmem:[%s1 + $0x88] sm:$0xf]
  %v114 = vld [vmem:[%s1 + $0x8c] sm:$0xf]
  %v115 = vld [vmem:[%s1 + $0x90] sm:$0xf]
  %v116 = vld [vmem:[%s1 + $0x94] sm:$0xf]
  %v117 = vld [vmem:[%s1 + $0x98] sm:$0xf]
  %v118 = vld [vmem:[%s1 + $0x9c] sm:$0xf]
  %v119 = vld [vmem:[%s1 + $0xa0] sm:$0xf]
  %v120 = vld [vmem:[%s1 + $0xa4] sm:$0xf]
  %v121 = vld [vmem:[%s1 + $0xa8] sm:$0xf]
  %v122 = vld [vmem:[%s1 + $0xac] sm:$0xf]
  %v123 = vld [vmem:[%s1 + $0xb0] sm:$0xf]
  %v124 = vld [vmem:[%s1 + $0xb4] sm:$0xf]
  %v125 = vld [vmem:[%s1 + $0xb8] sm:$0xf]
  %v126 = vld [vmem:[%s1 + $0xbc] sm:$0xf]
  %v127 = vld [vmem:[%s1 + $0xc0] sm:$0xf]
  %v128 = vld [vmem:[%s1 + $0xc4] sm:$0xf]
  %v129 = vld [vmem:[%s1 + $0xc8] sm:$0xf]
  %v130 = vld [vmem:[%s1 + $0xcc] sm:$0xf]
  %v131 = vld [vmem:[%s1 + $0xd0] sm:$0xf]
  %v132 = vld [vmem:[%s1 + $0xd4] sm:$0xf]
  %v133 = vld [vmem:[%s1 + $0xd8] sm:$0xf]
  %v134 = vld [vmem:[%s1 + $0xdc] sm:$0xf]
  %v135 = vld [vmem:[%s1 + $0xe0] sm:$0xf]
  %v136 = vld [vmem:[%s1 + $0xe4] sm:$0xf]
  %v137 = vld [vmem:[%s1 + $0xe8] sm:$0xf]
  %v138 = vld [vmem:[%s1 + $0xec] sm:$0xf]
  %v139 = vld [vmem:[%s1 + $0xf0] sm:$0xf]
  %v140 = vld [vmem:[%s1 + $0xf4] sm:$0xf]
  %v141 = vld [vmem:[%s1 + $0xf8] sm:$0xf]
  %v142 = vld [vmem:[%s1 + $0xfc] sm:$0xf]
  %v143 = vld [vmem:[%s1 + $0x100] sm:$0xf]
  %v144 = vld [vmem:[%s1 + $0x104] sm:$0xf]
  %v145 = vld [vmem:[%s1 + $0x108] sm:$0xf]
  %v146 = vld [vmem:[%s1 + $0x10c] sm:$0xf]
  %v147 = vld [vmem:[%s1 + $0x110] sm:$0xf]
  %v148 = vld [vmem:[%s1 + $0x114] sm:$0xf]
  %v149 = vld [vmem:[%s1 + $0x118] sm:$0xf]
  %v150 = vld [vmem:[%s1 + $0x11c] sm:$0xf]
  %v151 = vld [vmem:[%s1 + $0x120] sm:$0xf]
  %v152 = vld [vmem:[%s1 + $0x124] sm:$0xf]
  %v153 = vld [vmem:[%s1 + $0x128] sm:$0xf]
  %v154 = vld [vmem:[%s1 + $0x12c] sm:$0xf]
  %v155 = vld [vmem:[%s1 + $0x130] sm:$0xf]
  %v156 = vld [vmem:[%s1 + $0x134] sm:$0xf]
  %v157 = vld [vmem:[%s1 + $0x138] sm:$0xf]
  %v158 = vld [vmem:[%s1 + $0x13c] sm:$0xf]
  %v159 = vld [vmem:[%s1 + $0x140] sm:$0xf]
  %v160 = vld [vmem:[%s1 + $0x144] sm:$0xf]
  %v161 = vld [vmem:[%s1 + $0x148] sm:$0xf]
  %v162 = vld [vmem:[%s1 + $0x14c] sm:$0xf]
  %v163 = vld [vmem:[%s1 + $0x150] sm:$0xf]
  %v164 = vld [vmem:[%s1 + $0x154] sm:$0xf]
  %v165 = vld [vmem:[%s1 + $0x158] sm:$0xf]
  %v166 = vld [vmem:[%s1 + $0x15c] sm:$0xf]
  %v167 = vld [vmem:[%s1 + $0x160] sm:$0xf]
  %v168 = vld [vmem:[%s1 + $0x164] sm:$0xf]
  %v169 = vld [vmem:[%s1 + $0x168] sm:$0xf]
  %v170 = vld [vmem:[%s1 + $0x16c] sm:$0xf]
  %v171 = vld [vmem:[%s1 + $0x170] sm:$0xf]
  %v172 = vld [vmem:[%s1 + $0x174] sm:$0xf]
  %v173 = vld [vmem:[%s1 + $0x178] sm:$0xf]
  %v174 = vld [vmem:[%s1 + $0x17c] sm:$0xf]
  %v175 = vld [vmem:[%s1 + $0x180] sm:$0xf]
  %v176 = vld [vmem:[%s1 + $0x184] sm:$0xf]
  %v177 = vld [vmem:[%s1 + $0x188] sm:$0xf]
  %v178 = vld [vmem:[%s1 + $0x18c] sm:$0xf]
  %v179 = vld [vmem:[%s1 + $0x190] sm:$0xf]
  %v180 = vld [vmem:[%s1 + $0x194] sm:$0xf]
  %v181 = vld [vmem:[%s1 + $0x198] sm:$0xf]
  %v182 = vld [vmem:[%s1 + $0x19c] sm:$0xf]
  %v183 = vld [vmem:[%s1 + $0x1a0] sm:$0xf]
  %v184 = vld [vmem:[%s1 + $0x1a4] sm:$0xf]
  %v185 = vld [vmem:[%s1 + $0x1a8] sm:$0xf]
  %v186 = vld [vmem:[%s1 + $0x1ac] sm:$0xf]
  %v187 = vld [vmem:[%s1 + $0x1b0] sm:$0xf]
  %v188 = vld [vmem:[%s1 + $0x1b4] sm:$0xf]
  %v189 = vld [vmem:[%s1 + $0x1b8] sm:$0xf]
  %v190 = vld [vmem:[%s1 + $0x1bc] sm:$0xf]
  %v191 = vld [vmem:[%s1 + $0x1c0] sm:$0xf]
  %v192 = vld [vmem:[%s1 + $0x1c4] sm:$0xf]
  %v193 = vld [vmem:[%s1 + $0x1c8] sm:$0xf]
  %v194 = vld [vmem:[%s1 + $0x1cc] sm:$0xf]
  %v195 = vld [vmem:[%s1 + $0x1d0] sm:$0xf]
  %v196 = vld [vmem:[%s1 + $0x1d4] sm:$0xf]
  %v197 = vld [vmem:[%s1 + $0x1d8] sm:$0xf]
  %v198 = vld [vmem:[%s1 + $0x1dc] sm:$0xf]
  %v199 = vld [vmem:[%s1 + $0x1e0] sm:$0xf]
  %v200 = vld [vmem:[%s1 + $0x1e4] sm:$0xf]
  %v201 = vld [vmem:[%s1 + $0x1e8] sm:$0xf]
  %v202 = vld [vmem:[%s1 + $0x1ec] sm:$0xf]
  %v203 = vld [vmem:[%s1 + $0x1f0] sm:$0xf]
  %v204 = vld [vmem:[%s1 + $0x1f4] sm:$0xf]
  %v205 = vld [vmem:[%s1 + $0x1f8] sm:$0xf]
  %v206 = vld [vmem:[%s1 + $0x1fc] sm:$0xf]
  %v207 = vld [vmem:[%s2] sm:$0x1]
  %v209 = vlaneseq
  %v210 = vshrl.u32 %v209, 7
  %v211 = vsub.s32 0, %v210
  %v212 = vrot.slane %v207, %v211
  %v278 = vunpack.c.l.b16 %v15
  %v279 = vunpack.c.h.b16 %v15
  %v280 = vunpack.c.l.b16 %v16
  %v281 = vunpack.c.h.b16 %v16
  %v282 = vunpack.c.l.b16 %v17
  %v283 = vunpack.c.h.b16 %v17
  %v284 = vunpack.c.l.b16 %v18
  %v285 = vunpack.c.h.b16 %v18
  %v286 = vunpack.c.l.b16 %v19
  %v287 = vunpack.c.h.b16 %v19
  %v288 = vunpack.c.l.b16 %v20
  %v289 = vunpack.c.h.b16 %v20
  %v290 = vunpack.c.l.b16 %v21
  %v291 = vunpack.c.h.b16 %v21
  %v292 = vunpack.c.l.b16 %v22
  %v293 = vunpack.c.h.b16 %v22
  %v294 = vunpack.c.l.b16 %v23
  %v295 = vunpack.c.h.b16 %v23
  %v296 = vunpack.c.l.b16 %v24
  %v297 = vunpack.c.h.b16 %v24
  %v298 = vunpack.c.l.b16 %v25
  %v299 = vunpack.c.h.b16 %v25
  %v300 = vunpack.c.l.b16 %v26
  %v301 = vunpack.c.h.b16 %v26
  %v302 = vunpack.c.l.b16 %v27
  %v303 = vunpack.c.h.b16 %v27
  %v304 = vunpack.c.l.b16 %v28
  %v305 = vunpack.c.h.b16 %v28
  %v306 = vunpack.c.l.b16 %v29
  %v307 = vunpack.c.h.b16 %v29
  %v308 = vunpack.c.l.b16 %v30
  %v309 = vunpack.c.h.b16 %v30
  %v310 = vunpack.c.l.b16 %v31
  %v311 = vunpack.c.h.b16 %v31
  %v312 = vunpack.c.l.b16 %v32
  %v313 = vunpack.c.h.b16 %v32
  %v314 = vunpack.c.l.b16 %v33
  %v315 = vunpack.c.h.b16 %v33
  %v316 = vunpack.c.l.b16 %v34
  %v317 = vunpack.c.h.b16 %v34
  %v318 = vunpack.c.l.b16 %v35
  %v319 = vunpack.c.h.b16 %v35
  %v320 = vunpack.c.l.b16 %v36
  %v321 = vunpack.c.h.b16 %v36
  %v322 = vunpack.c.l.b16 %v37
  %v323 = vunpack.c.h.b16 %v37
  %v324 = vunpack.c.l.b16 %v38
  %v325 = vunpack.c.h.b16 %v38
  %v326 = vunpack.c.l.b16 %v39
  %v327 = vunpack.c.h.b16 %v39
  %v328 = vunpack.c.l.b16 %v40
  %v329 = vunpack.c.h.b16 %v40
  %v330 = vunpack.c.l.b16 %v41
  %v331 = vunpack.c.h.b16 %v41
  %v332 = vunpack.c.l.b16 %v42
  %v333 = vunpack.c.h.b16 %v42
  %v334 = vunpack.c.l.b16 %v43
  %v335 = vunpack.c.h.b16 %v43
  %v336 = vunpack.c.l.b16 %v44
  %v337 = vunpack.c.h.b16 %v44
  %v338 = vunpack.c.l.b16 %v45
  %v339 = vunpack.c.h.b16 %v45
  %v340 = vunpack.c.l.b16 %v46
  %v341 = vunpack.c.h.b16 %v46
  %v342 = vunpack.c.l.b16 %v47
  %v343 = vunpack.c.h.b16 %v47
  %v344 = vunpack.c.l.b16 %v48
  %v345 = vunpack.c.h.b16 %v48
  %v346 = vunpack.c.l.b16 %v49
  %v347 = vunpack.c.h.b16 %v49
  %v348 = vunpack.c.l.b16 %v50
  %v349 = vunpack.c.h.b16 %v50
  %v350 = vunpack.c.l.b16 %v51
  %v351 = vunpack.c.h.b16 %v51
  %v352 = vunpack.c.l.b16 %v52
  %v353 = vunpack.c.h.b16 %v52
  %v354 = vunpack.c.l.b16 %v53
  %v355 = vunpack.c.h.b16 %v53
  %v356 = vunpack.c.l.b16 %v54
  %v357 = vunpack.c.h.b16 %v54
  %v358 = vunpack.c.l.b16 %v55
  %v359 = vunpack.c.h.b16 %v55
  %v360 = vunpack.c.l.b16 %v56
  %v361 = vunpack.c.h.b16 %v56
  %v362 = vunpack.c.l.b16 %v57
  %v363 = vunpack.c.h.b16 %v57
  %v364 = vunpack.c.l.b16 %v58
  %v365 = vunpack.c.h.b16 %v58
  %v366 = vunpack.c.l.b16 %v59
  %v367 = vunpack.c.h.b16 %v59
  %v368 = vunpack.c.l.b16 %v60
  %v369 = vunpack.c.h.b16 %v60
  %v370 = vunpack.c.l.b16 %v61
  %v371 = vunpack.c.h.b16 %v61
  %v372 = vunpack.c.l.b16 %v62
  %v373 = vunpack.c.h.b16 %v62
  %v374 = vunpack.c.l.b16 %v63
  %v375 = vunpack.c.h.b16 %v63
  %v376 = vunpack.c.l.b16 %v64
  %v377 = vunpack.c.h.b16 %v64
  %v378 = vunpack.c.l.b16 %v65
  %v379 = vunpack.c.h.b16 %v65
  %v380 = vunpack.c.l.b16 %v66
  %v381 = vunpack.c.h.b16 %v66
  %v382 = vunpack.c.l.b16 %v67
  %v383 = vunpack.c.h.b16 %v67
  %v384 = vunpack.c.l.b16 %v68
  %v385 = vunpack.c.h.b16 %v68
  %v386 = vunpack.c.l.b16 %v69
  %v387 = vunpack.c.h.b16 %v69
  %v388 = vunpack.c.l.b16 %v70
  %v389 = vunpack.c.h.b16 %v70
  %v390 = vunpack.c.l.b16 %v71
  %v391 = vunpack.c.h.b16 %v71
  %v392 = vunpack.c.l.b16 %v72
  %v393 = vunpack.c.h.b16 %v72
  %v394 = vunpack.c.l.b16 %v73
  %v395 = vunpack.c.h.b16 %v73
  %v396 = vunpack.c.l.b16 %v74
  %v397 = vunpack.c.h.b16 %v74
  %v398 = vunpack.c.l.b16 %v75
  %v399 = vunpack.c.h.b16 %v75
  %v400 = vunpack.c.l.b16 %v76
  %v401 = vunpack.c.h.b16 %v76
  %v402 = vunpack.c.l.b16 %v77
  %v403 = vunpack.c.h.b16 %v77
  %v404 = vunpack.c.l.b16 %v78
  %v405 = vunpack.c.h.b16 %v78
  %v406 = vpack.c.b16 %v286, %v278
  %v407 = vpack.c.b16 %v287, %v279
  %v408 = vpack.c.b16 %v288, %v280
  %v409 = vpack.c.b16 %v289, %v281
  %v410 = vpack.c.b16 %v290, %v282
  %v411 = vpack.c.b16 %v291, %v283
  %v412 = vpack.c.b16 %v292, %v284
  %v413 = vpack.c.b16 %v293, %v285
  %v414 = vpack.c.b16 %v302, %v294
  %v415 = vpack.c.b16 %v303, %v295
  %v416 = vpack.c.b16 %v304, %v296
  %v417 = vpack.c.b16 %v305, %v297
  %v418 = vpack.c.b16 %v306, %v298
  %v419 = vpack.c.b16 %v307, %v299
  %v420 = vpack.c.b16 %v308, %v300
  %v421 = vpack.c.b16 %v309, %v301
  %v422 = vpack.c.b16 %v318, %v310
  %v423 = vpack.c.b16 %v319, %v311
  %v424 = vpack.c.b16 %v320, %v312
  %v425 = vpack.c.b16 %v321, %v313
  %v426 = vpack.c.b16 %v322, %v314
  %v427 = vpack.c.b16 %v323, %v315
  %v428 = vpack.c.b16 %v324, %v316
  %v429 = vpack.c.b16 %v325, %v317
  %v430 = vpack.c.b16 %v334, %v326
  %v431 = vpack.c.b16 %v335, %v327
  %v432 = vpack.c.b16 %v336, %v328
  %v433 = vpack.c.b16 %v337, %v329
  %v434 = vpack.c.b16 %v338, %v330
  %v435 = vpack.c.b16 %v339, %v331
  %v436 = vpack.c.b16 %v340, %v332
  %v437 = vpack.c.b16 %v341, %v333
  %v438 = vpack.c.b16 %v350, %v342
  %v439 = vpack.c.b16 %v351, %v343
  %v440 = vpack.c.b16 %v352, %v344
  %v441 = vpack.c.b16 %v353, %v345
  %v442 = vpack.c.b16 %v354, %v346
  %v443 = vpack.c.b16 %v355, %v347
  %v444 = vpack.c.b16 %v356, %v348
  %v445 = vpack.c.b16 %v357, %v349
  %v446 = vpack.c.b16 %v366, %v358
  %v447 = vpack.c.b16 %v367, %v359
  %v448 = vpack.c.b16 %v368, %v360
  %v449 = vpack.c.b16 %v369, %v361
  %v450 = vpack.c.b16 %v370, %v362
  %v451 = vpack.c.b16 %v371, %v363
  %v452 = vpack.c.b16 %v372, %v364
  %v453 = vpack.c.b16 %v373, %v365
  %v454 = vpack.c.b16 %v382, %v374
  %v455 = vpack.c.b16 %v383, %v375
  %v456 = vpack.c.b16 %v384, %v376
  %v457 = vpack.c.b16 %v385, %v377
  %v458 = vpack.c.b16 %v386, %v378
  %v459 = vpack.c.b16 %v387, %v379
  %v460 = vpack.c.b16 %v388, %v380
  %v461 = vpack.c.b16 %v389, %v381
  %v462 = vpack.c.b16 %v398, %v390
  %v463 = vpack.c.b16 %v399, %v391
  %v464 = vpack.c.b16 %v400, %v392
  %v465 = vpack.c.b16 %v401, %v393
  %v466 = vpack.c.b16 %v402, %v394
  %v467 = vpack.c.b16 %v403, %v395
  %v468 = vpack.c.b16 %v404, %v396
  %v469 = vpack.c.b16 %v405, %v397
  %v662 = vunpack.c.l.b16 %v79
  %v663 = vunpack.c.l.b16 %v80
  %v664 = vunpack.c.l.b16 %v81
  %v665 = vunpack.c.l.b16 %v82
  %v666 = vunpack.c.l.b16 %v83
  %v667 = vunpack.c.l.b16 %v84
  %v668 = vunpack.c.l.b16 %v85
  %v669 = vunpack.c.l.b16 %v86
  %v670 = vunpack.c.l.b16 %v87
  %v671 = vunpack.c.l.b16 %v88
  %v672 = vunpack.c.l.b16 %v89
  %v673 = vunpack.c.l.b16 %v90
  %v674 = vunpack.c.l.b16 %v91
  %v675 = vunpack.c.l.b16 %v92
  %v676 = vunpack.c.l.b16 %v93
  %v677 = vunpack.c.l.b16 %v94
  %v678 = vunpack.c.l.b16 %v95
  %v679 = vunpack.c.l.b16 %v96
  %v680 = vunpack.c.l.b16 %v97
  %v681 = vunpack.c.l.b16 %v98
  %v682 = vunpack.c.l.b16 %v99
  %v683 = vunpack.c.l.b16 %v100
  %v684 = vunpack.c.l.b16 %v101
  %v685 = vunpack.c.l.b16 %v102
  %v686 = vunpack.c.l.b16 %v103
  %v687 = vunpack.c.l.b16 %v104
  %v688 = vunpack.c.l.b16 %v105
  %v689 = vunpack.c.l.b16 %v106
  %v690 = vunpack.c.l.b16 %v107
  %v691 = vunpack.c.l.b16 %v108
  %v692 = vunpack.c.l.b16 %v109
  %v693 = vunpack.c.l.b16 %v110
  %v694 = vunpack.c.l.b16 %v111
  %v695 = vunpack.c.l.b16 %v112
  %v696 = vunpack.c.l.b16 %v113
  %v697 = vunpack.c.l.b16 %v114
  %v698 = vunpack.c.l.b16 %v115
  %v699 = vunpack.c.l.b16 %v116
  %v700 = vunpack.c.l.b16 %v117
  %v701 = vunpack.c.l.b16 %v118
  %v702 = vunpack.c.l.b16 %v119
  %v703 = vunpack.c.l.b16 %v120
  %v704 = vunpack.c.l.b16 %v121
  %v705 = vunpack.c.l.b16 %v122
  %v706 = vunpack.c.l.b16 %v123
  %v707 = vunpack.c.l.b16 %v124
  %v708 = vunpack.c.l.b16 %v125
  %v709 = vunpack.c.l.b16 %v126
  %v710 = vunpack.c.l.b16 %v127
  %v711 = vunpack.c.l.b16 %v128
  %v712 = vunpack.c.l.b16 %v129
  %v713 = vunpack.c.l.b16 %v130
  %v714 = vunpack.c.l.b16 %v131
  %v715 = vunpack.c.l.b16 %v132
  %v716 = vunpack.c.l.b16 %v133
  %v717 = vunpack.c.l.b16 %v134
  %v718 = vunpack.c.l.b16 %v135
  %v719 = vunpack.c.l.b16 %v136
  %v720 = vunpack.c.l.b16 %v137
  %v721 = vunpack.c.l.b16 %v138
  %v722 = vunpack.c.l.b16 %v139
  %v723 = vunpack.c.l.b16 %v140
  %v724 = vunpack.c.l.b16 %v141
  %v725 = vunpack.c.l.b16 %v142
  %v726 = vunpack.c.l.b16 %v143
  %v727 = vunpack.c.l.b16 %v144
  %v728 = vunpack.c.l.b16 %v145
  %v729 = vunpack.c.l.b16 %v146
  %v730 = vunpack.c.l.b16 %v147
  %v731 = vunpack.c.l.b16 %v148
  %v732 = vunpack.c.l.b16 %v149
  %v733 = vunpack.c.l.b16 %v150
  %v734 = vunpack.c.l.b16 %v151
  %v735 = vunpack.c.l.b16 %v152
  %v736 = vunpack.c.l.b16 %v153
  %v737 = vunpack.c.l.b16 %v154
  %v738 = vunpack.c.l.b16 %v155
  %v739 = vunpack.c.l.b16 %v156
  %v740 = vunpack.c.l.b16 %v157
  %v741 = vunpack.c.l.b16 %v158
  %v742 = vunpack.c.l.b16 %v159
  %v743 = vunpack.c.l.b16 %v160
  %v744 = vunpack.c.l.b16 %v161
  %v745 = vunpack.c.l.b16 %v162
  %v746 = vunpack.c.l.b16 %v163
  %v747 = vunpack.c.l.b16 %v164
  %v748 = vunpack.c.l.b16 %v165
  %v749 = vunpack.c.l.b16 %v166
  %v750 = vunpack.c.l.b16 %v167
  %v751 = vunpack.c.l.b16 %v168
  %v752 = vunpack.c.l.b16 %v169
  %v753 = vunpack.c.l.b16 %v170
  %v754 = vunpack.c.l.b16 %v171
  %v755 = vunpack.c.l.b16 %v172
  %v756 = vunpack.c.l.b16 %v173
  %v757 = vunpack.c.l.b16 %v174
  %v758 = vunpack.c.l.b16 %v175
  %v759 = vunpack.c.l.b16 %v176
  %v760 = vunpack.c.l.b16 %v177
  %v761 = vunpack.c.l.b16 %v178
  %v762 = vunpack.c.l.b16 %v179
  %v763 = vunpack.c.l.b16 %v180
  %v764 = vunpack.c.l.b16 %v181
  %v765 = vunpack.c.l.b16 %v182
  %v766 = vunpack.c.l.b16 %v183
  %v767 = vunpack.c.l.b16 %v184
  %v768 = vunpack.c.l.b16 %v185
  %v769 = vunpack.c.l.b16 %v186
  %v770 = vunpack.c.l.b16 %v187
  %v771 = vunpack.c.l.b16 %v188
  %v772 = vunpack.c.l.b16 %v189
  %v773 = vunpack.c.l.b16 %v190
  %v774 = vunpack.c.l.b16 %v191
  %v775 = vunpack.c.l.b16 %v192
  %v776 = vunpack.c.l.b16 %v193
  %v777 = vunpack.c.l.b16 %v194
  %v778 = vunpack.c.l.b16 %v195
  %v779 = vunpack.c.l.b16 %v196
  %v780 = vunpack.c.l.b16 %v197
  %v781 = vunpack.c.l.b16 %v198
  %v782 = vunpack.c.l.b16 %v199
  %v783 = vunpack.c.l.b16 %v200
  %v784 = vunpack.c.l.b16 %v201
  %v785 = vunpack.c.l.b16 %v202
  %v786 = vunpack.c.l.b16 %v203
  %v787 = vunpack.c.l.b16 %v204
  %v788 = vunpack.c.l.b16 %v205
  %v789 = vunpack.c.l.b16 %v206
  %v790 = vpack.c.b16 %v663, %v662
  %v791 = vpack.c.b16 %v665, %v664
  %v792 = vpack.c.b16 %v667, %v666
  %v793 = vpack.c.b16 %v669, %v668
  %v794 = vpack.c.b16 %v671, %v670
  %v795 = vpack.c.b16 %v673, %v672
  %v796 = vpack.c.b16 %v675, %v674
  %v797 = vpack.c.b16 %v677, %v676
  %v798 = vpack.c.b16 %v679, %v678
  %v799 = vpack.c.b16 %v681, %v680
  %v800 = vpack.c.b16 %v683, %v682
  %v801 = vpack.c.b16 %v685, %v684
  %v802 = vpack.c.b16 %v687, %v686
  %v803 = vpack.c.b16 %v689, %v688
  %v804 = vpack.c.b16 %v691, %v690
  %v805 = vpack.c.b16 %v693, %v692
  %v806 = vpack.c.b16 %v695, %v694
  %v807 = vpack.c.b16 %v697, %v696
  %v808 = vpack.c.b16 %v699, %v698
  %v809 = vpack.c.b16 %v701, %v700
  %v810 = vpack.c.b16 %v703, %v702
  %v811 = vpack.c.b16 %v705, %v704
  %v812 = vpack.c.b16 %v707, %v706
  %v813 = vpack.c.b16 %v709, %v708
  %v814 = vpack.c.b16 %v711, %v710
  %v815 = vpack.c.b16 %v713, %v712
  %v816 = vpack.c.b16 %v715, %v714
  %v817 = vpack.c.b16 %v717, %v716
  %v818 = vpack.c.b16 %v719, %v718
  %v819 = vpack.c.b16 %v721, %v720
  %v820 = vpack.c.b16 %v723, %v722
  %v821 = vpack.c.b16 %v725, %v724
  %v822 = vpack.c.b16 %v727, %v726
  %v823 = vpack.c.b16 %v729, %v728
  %v824 = vpack.c.b16 %v731, %v730
  %v825 = vpack.c.b16 %v733, %v732
  %v826 = vpack.c.b16 %v735, %v734
  %v827 = vpack.c.b16 %v737, %v736
  %v828 = vpack.c.b16 %v739, %v738
  %v829 = vpack.c.b16 %v741, %v740
  %v830 = vpack.c.b16 %v743, %v742
  %v831 = vpack.c.b16 %v745, %v744
  %v832 = vpack.c.b16 %v747, %v746
  %v833 = vpack.c.b16 %v749, %v748
  %v834 = vpack.c.b16 %v751, %v750
  %v835 = vpack.c.b16 %v753, %v752
  %v836 = vpack.c.b16 %v755, %v754
  %v837 = vpack.c.b16 %v757, %v756
  %v838 = vpack.c.b16 %v759, %v758
  %v839 = vpack.c.b16 %v761, %v760
  %v840 = vpack.c.b16 %v763, %v762
  %v841 = vpack.c.b16 %v765, %v764
  %v842 = vpack.c.b16 %v767, %v766
  %v843 = vpack.c.b16 %v769, %v768
  %v844 = vpack.c.b16 %v771, %v770
  %v845 = vpack.c.b16 %v773, %v772
  %v846 = vpack.c.b16 %v775, %v774
  %v847 = vpack.c.b16 %v777, %v776
  %v848 = vpack.c.b16 %v779, %v778
  %v849 = vpack.c.b16 %v781, %v780
  %v850 = vpack.c.b16 %v783, %v782
  %v851 = vpack.c.b16 %v785, %v784
  %v852 = vpack.c.b16 %v787, %v786
  %v853 = vpack.c.b16 %v789, %v788
  %918 = vmatprep.subr.bf16.mxu0 0
  %919 = vmatpush1.bf16.msra.mxu0 %v797
  %920 = vmatprep.subr.bf16.mxu0 0
  %921 = vmatpush1.bf16.msra.mxu0 %v796
  %922 = vmatprep.subr.bf16.mxu0 0
  %923 = vmatpush1.bf16.msra.mxu0 %v795
  %924 = vmatprep.subr.bf16.mxu0 0
  %925 = vmatpush1.bf16.msra.mxu0 %v794
  %926 = vmatprep.subr.bf16.mxu0 0
  %927 = vmatpush1.bf16.msra.mxu0 %v793
  %928 = vmatprep.subr.bf16.mxu0 0
  %929 = vmatpush1.bf16.msra.mxu0 %v792
  %930 = vmatprep.subr.bf16.mxu0 0
  %931 = vmatpush1.bf16.msra.mxu0 %v791
  %932 = vmatprep.subr.bf16.mxu0 0
  %933 = vmatpush1.bf16.msra.mxu0 %v790
  %934 = vmatprep.subr.bf16.mxu0 0
  %935 = vmatpush2.bf16.msra.mxu0 %v805
  %936 = vmatprep.subr.bf16.mxu0 0
  %937 = vmatpush2.bf16.msra.mxu0 %v804
  %938 = vmatprep.subr.bf16.mxu0 0
  %939 = vmatpush2.bf16.msra.mxu0 %v803
  %940 = vmatprep.subr.bf16.mxu0 0
  %941 = vmatpush2.bf16.msra.mxu0 %v802
  %942 = vmatprep.subr.bf16.mxu0 0
  %943 = vmatpush2.bf16.msra.mxu0 %v801
  %944 = vmatprep.subr.bf16.mxu0 0
  %945 = vmatpush2.bf16.msra.mxu0 %v800
  %946 = vmatprep.subr.bf16.mxu0 0
  %947 = vmatpush2.bf16.msra.mxu0 %v799
  %948 = vmatprep.subr.bf16.mxu0 0
  %949 = vmatpush2.bf16.msra.mxu0 %v798
  %950 = vmatprep.mubr.bf16.mxu0 %v407
  %951 = vmatmul.mubr.bf16.gmra.mxu0 %v406
  %v952 = vpop.f32.mrf.mxu0
  %v953 = vadd.f32 %v212, %v952
  %v954 = vpop.f32.mrf.mxu0
  %v955 = vpop.f32.mrf.mxu0
  %v956 = vadd.f32 %v212, %v955
  %v957 = vpop.f32.mrf.mxu0
  %958 = vmatprep.mubr.bf16.mxu0 %v415
  %959 = vmatmul.mubr.bf16.gmra.mxu0 %v414
  %v960 = vpop.f32.mrf.mxu0
  %v961 = vadd.f32 %v212, %v960
  %v962 = vpop.f32.mrf.mxu0
  %v963 = vpop.f32.mrf.mxu0
  %v964 = vadd.f32 %v212, %v963
  %v965 = vpop.f32.mrf.mxu0
  %966 = vmatprep.mubr.bf16.mxu0 %v423
  %967 = vmatmul.mubr.bf16.gmra.mxu0 %v422
  %v968 = vpop.f32.mrf.mxu0
  %v969 = vadd.f32 %v212, %v968
  %v970 = vpop.f32.mrf.mxu0
  %v971 = vpop.f32.mrf.mxu0
  %v972 = vadd.f32 %v212, %v971
  %v973 = vpop.f32.mrf.mxu0
  %974 = vmatprep.mubr.bf16.mxu0 %v431
  %975 = vmatmul.mubr.bf16.gmra.mxu0 %v430
  %v976 = vpop.f32.mrf.mxu0
  %v977 = vadd.f32 %v212, %v976
  %v978 = vpop.f32.mrf.mxu0
  %v979 = vpop.f32.mrf.mxu0
  %v980 = vadd.f32 %v212, %v979
  %v981 = vpop.f32.mrf.mxu0
  %982 = vmatprep.mubr.bf16.mxu0 %v439
  %983 = vmatmul.mubr.bf16.gmra.mxu0 %v438
  %v984 = vpop.f32.mrf.mxu0
  %v985 = vadd.f32 %v212, %v984
  %v986 = vpop.f32.mrf.mxu0
  %v987 = vpop.f32.mrf.mxu0
  %v988 = vadd.f32 %v212, %v987
  %v989 = vpop.f32.mrf.mxu0
  %990 = vmatprep.mubr.bf16.mxu0 %v447
  %991 = vmatmul.mubr.bf16.gmra.mxu0 %v446
  %v992 = vpop.f32.mrf.mxu0
  %v993 = vadd.f32 %v212, %v992
  %v994 = vpop.f32.mrf.mxu0
  %v995 = vpop.f32.mrf.mxu0
  %v996 = vadd.f32 %v212, %v995
  %v997 = vpop.f32.mrf.mxu0
  %998 = vmatprep.mubr.bf16.mxu0 %v455
  %999 = vmatmul.mubr.bf16.gmra.mxu0 %v454
  %v1000 = vpop.f32.mrf.mxu0
  %v1001 = vadd.f32 %v212, %v1000
  %v1002 = vpop.f32.mrf.mxu0
  %v1003 = vpop.f32.mrf.mxu0
  %v1004 = vadd.f32 %v212, %v1003
  %v1005 = vpop.f32.mrf.mxu0
  %1006 = vmatprep.mubr.bf16.mxu0 %v463
  %1007 = vmatmul.mubr.bf16.gmra.mxu0 %v462
  %v1008 = vpop.f32.mrf.mxu0
  %v1009 = vadd.f32 %v212, %v1008
  %v1010 = vpop.f32.mrf.mxu0
  %v1011 = vpop.f32.mrf.mxu0
  %v1012 = vadd.f32 %v212, %v1011
  %v1013 = vpop.f32.mrf.mxu0
  %1014 = vdwg.mxu0
  %1015 = vmatprep.subr.bf16.mxu0 0
  %1016 = vmatpush1.bf16.msra.mxu0 %v813
  %1017 = vmatprep.subr.bf16.mxu0 0
  %1018 = vmatpush1.bf16.msra.mxu0 %v812
  %1019 = vmatprep.subr.bf16.mxu0 0
  %1020 = vmatpush1.bf16.msra.mxu0 %v811
  %1021 = vmatprep.subr.bf16.mxu0 0
  %1022 = vmatpush1.bf16.msra.mxu0 %v810
  %1023 = vmatprep.subr.bf16.mxu0 0
  %1024 = vmatpush1.bf16.msra.mxu0 %v809
  %1025 = vmatprep.subr.bf16.mxu0 0
  %1026 = vmatpush1.bf16.msra.mxu0 %v808
  %1027 = vmatprep.subr.bf16.mxu0 0
  %1028 = vmatpush1.bf16.msra.mxu0 %v807
  %1029 = vmatprep.subr.bf16.mxu0 0
  %1030 = vmatpush1.bf16.msra.mxu0 %v806
  %1031 = vmatprep.subr.bf16.mxu0 0
  %1032 = vmatpush2.bf16.msra.mxu0 %v821
  %1033 = vmatprep.subr.bf16.mxu0 0
  %1034 = vmatpush2.bf16.msra.mxu0 %v820
  %1035 = vmatprep.subr.bf16.mxu0 0
  %1036 = vmatpush2.bf16.msra.mxu0 %v819
  %1037 = vmatprep.subr.bf16.mxu0 0
  %1038 = vmatpush2.bf16.msra.mxu0 %v818
  %1039 = vmatprep.subr.bf16.mxu0 0
  %1040 = vmatpush2.bf16.msra.mxu0 %v817
  %1041 = vmatprep.subr.bf16.mxu0 0
  %1042 = vmatpush2.bf16.msra.mxu0 %v816
  %1043 = vmatprep.subr.bf16.mxu0 0
  %1044 = vmatpush2.bf16.msra.mxu0 %v815
  %1045 = vmatprep.subr.bf16.mxu0 0
  %1046 = vmatpush2.bf16.msra.mxu0 %v814
  %1047 = vmatprep.mubr.bf16.mxu0 %v409
  %1048 = vmatmul.mubr.bf16.gmra.mxu0 %v408
  %v1049 = vpop.f32.mrf.mxu0
  %v1050 = vadd.f32 %v953, %v1049
  %v1051 = vpop.f32.mrf.mxu0
  %v1052 = vpop.f32.mrf.mxu0
  %v1053 = vadd.f32 %v956, %v1052
  %v1054 = vpop.f32.mrf.mxu0
  %1055 = vmatprep.mubr.bf16.mxu0 %v417
  %1056 = vmatmul.mubr.bf16.gmra.mxu0 %v416
  %v1057 = vpop.f32.mrf.mxu0
  %v1058 = vadd.f32 %v961, %v1057
  %v1059 = vpop.f32.mrf.mxu0
  %v1060 = vpop.f32.mrf.mxu0
  %v1061 = vadd.f32 %v964, %v1060
  %v1062 = vpop.f32.mrf.mxu0
  %1063 = vmatprep.mubr.bf16.mxu0 %v425
  %1064 = vmatmul.mubr.bf16.gmra.mxu0 %v424
  %v1065 = vpop.f32.mrf.mxu0
  %v1066 = vadd.f32 %v969, %v1065
  %v1067 = vpop.f32.mrf.mxu0
  %v1068 = vpop.f32.mrf.mxu0
  %v1069 = vadd.f32 %v972, %v1068
  %v1070 = vpop.f32.mrf.mxu0
  %1071 = vmatprep.mubr.bf16.mxu0 %v433
  %1072 = vmatmul.mubr.bf16.gmra.mxu0 %v432
  %v1073 = vpop.f32.mrf.mxu0
  %v1074 = vadd.f32 %v977, %v1073
  %v1075 = vpop.f32.mrf.mxu0
  %v1076 = vpop.f32.mrf.mxu0
  %v1077 = vadd.f32 %v980, %v1076
  %v1078 = vpop.f32.mrf.mxu0
  %1079 = vmatprep.mubr.bf16.mxu0 %v441
  %1080 = vmatmul.mubr.bf16.gmra.mxu0 %v440
  %v1081 = vpop.f32.mrf.mxu0
  %v1082 = vadd.f32 %v985, %v1081
  %v1083 = vpop.f32.mrf.mxu0
  %v1084 = vpop.f32.mrf.mxu0
  %v1085 = vadd.f32 %v988, %v1084
  %v1086 = vpop.f32.mrf.mxu0
  %1087 = vmatprep.mubr.bf16.mxu0 %v449
  %1088 = vmatmul.mubr.bf16.gmra.mxu0 %v448
  %v1089 = vpop.f32.mrf.mxu0
  %v1090 = vadd.f32 %v993, %v1089
  %v1091 = vpop.f32.mrf.mxu0
  %v1092 = vpop.f32.mrf.mxu0
  %v1093 = vadd.f32 %v996, %v1092
  %v1094 = vpop.f32.mrf.mxu0
  %1095 = vmatprep.mubr.bf16.mxu0 %v457
  %1096 = vmatmul.mubr.bf16.gmra.mxu0 %v456
  %v1097 = vpop.f32.mrf.mxu0
  %v1098 = vadd.f32 %v1001, %v1097
  %v1099 = vpop.f32.mrf.mxu0
  %v1100 = vpop.f32.mrf.mxu0
  %v1101 = vadd.f32 %v1004, %v1100
  %v1102 = vpop.f32.mrf.mxu0
  %1103 = vmatprep.mubr.bf16.mxu0 %v465
  %1104 = vmatmul.mubr.bf16.gmra.mxu0 %v464
  %v1105 = vpop.f32.mrf.mxu0
  %v1106 = vadd.f32 %v1009, %v1105
  %v1107 = vpop.f32.mrf.mxu0
  %v1108 = vpop.f32.mrf.mxu0
  %v1109 = vadd.f32 %v1012, %v1108
  %v1110 = vpop.f32.mrf.mxu0
  %1111 = vdwg.mxu0
  %1112 = vmatprep.subr.bf16.mxu0 0
  %1113 = vmatpush1.bf16.msra.mxu0 %v829
  %1114 = vmatprep.subr.bf16.mxu0 0
  %1115 = vmatpush1.bf16.msra.mxu0 %v828
  %1116 = vmatprep.subr.bf16.mxu0 0
  %1117 = vmatpush1.bf16.msra.mxu0 %v827
  %1118 = vmatprep.subr.bf16.mxu0 0
  %1119 = vmatpush1.bf16.msra.mxu0 %v826
  %1120 = vmatprep.subr.bf16.mxu0 0
  %1121 = vmatpush1.bf16.msra.mxu0 %v825
  %1122 = vmatprep.subr.bf16.mxu0 0
  %1123 = vmatpush1.bf16.msra.mxu0 %v824
  %1124 = vmatprep.subr.bf16.mxu0 0
  %1125 = vmatpush1.bf16.msra.mxu0 %v823
  %1126 = vmatprep.subr.bf16.mxu0 0
  %1127 = vmatpush1.bf16.msra.mxu0 %v822
  %1128 = vmatprep.subr.bf16.mxu0 0
  %1129 = vmatpush2.bf16.msra.mxu0 %v837
  %1130 = vmatprep.subr.bf16.mxu0 0
  %1131 = vmatpush2.bf16.msra.mxu0 %v836
  %1132 = vmatprep.subr.bf16.mxu0 0
  %1133 = vmatpush2.bf16.msra.mxu0 %v835
  %1134 = vmatprep.subr.bf16.mxu0 0
  %1135 = vmatpush2.bf16.msra.mxu0 %v834
  %1136 = vmatprep.subr.bf16.mxu0 0
  %1137 = vmatpush2.bf16.msra.mxu0 %v833
  %1138 = vmatprep.subr.bf16.mxu0 0
  %1139 = vmatpush2.bf16.msra.mxu0 %v832
  %1140 = vmatprep.subr.bf16.mxu0 0
  %1141 = vmatpush2.bf16.msra.mxu0 %v831
  %1142 = vmatprep.subr.bf16.mxu0 0
  %1143 = vmatpush2.bf16.msra.mxu0 %v830
  %1144 = vmatprep.mubr.bf16.mxu0 %v411
  %1145 = vmatmul.mubr.bf16.gmra.mxu0 %v410
  %v1146 = vpop.f32.mrf.mxu0
  %v1147 = vadd.f32 %v1050, %v1146
  %v1148 = vpop.f32.mrf.mxu0
  %v1149 = vpop.f32.mrf.mxu0
  %v1150 = vadd.f32 %v1053, %v1149
  %v1151 = vpop.f32.mrf.mxu0
  %1152 = vmatprep.mubr.bf16.mxu0 %v419
  %1153 = vmatmul.mubr.bf16.gmra.mxu0 %v418
  %v1154 = vpop.f32.mrf.mxu0
  %v1155 = vadd.f32 %v1058, %v1154
  %v1156 = vpop.f32.mrf.mxu0
  %v1157 = vpop.f32.mrf.mxu0
  %v1158 = vadd.f32 %v1061, %v1157
  %v1159 = vpop.f32.mrf.mxu0
  %1160 = vmatprep.mubr.bf16.mxu0 %v427
  %1161 = vmatmul.mubr.bf16.gmra.mxu0 %v426
  %v1162 = vpop.f32.mrf.mxu0
  %v1163 = vadd.f32 %v1066, %v1162
  %v1164 = vpop.f32.mrf.mxu0
  %v1165 = vpop.f32.mrf.mxu0
  %v1166 = vadd.f32 %v1069, %v1165
  %v1167 = vpop.f32.mrf.mxu0
  %1168 = vmatprep.mubr.bf16.mxu0 %v435
  %1169 = vmatmul.mubr.bf16.gmra.mxu0 %v434
  %v1170 = vpop.f32.mrf.mxu0
  %v1171 = vadd.f32 %v1074, %v1170
  %v1172 = vpop.f32.mrf.mxu0
  %v1173 = vpop.f32.mrf.mxu0
  %v1174 = vadd.f32 %v1077, %v1173
  %v1175 = vpop.f32.mrf.mxu0
  %1176 = vmatprep.mubr.bf16.mxu0 %v443
  %1177 = vmatmul.mubr.bf16.gmra.mxu0 %v442
  %v1178 = vpop.f32.mrf.mxu0
  %v1179 = vadd.f32 %v1082, %v1178
  %v1180 = vpop.f32.mrf.mxu0
  %v1181 = vpop.f32.mrf.mxu0
  %v1182 = vadd.f32 %v1085, %v1181
  %v1183 = vpop.f32.mrf.mxu0
  %1184 = vmatprep.mubr.bf16.mxu0 %v451
  %1185 = vmatmul.mubr.bf16.gmra.mxu0 %v450
  %v1186 = vpop.f32.mrf.mxu0
  %v1187 = vadd.f32 %v1090, %v1186
  %v1188 = vpop.f32.mrf.mxu0
  %v1189 = vpop.f32.mrf.mxu0
  %v1190 = vadd.f32 %v1093, %v1189
  %v1191 = vpop.f32.mrf.mxu0
  %1192 = vmatprep.mubr.bf16.mxu0 %v459
  %1193 = vmatmul.mubr.bf16.gmra.mxu0 %v458
  %v1194 = vpop.f32.mrf.mxu0
  %v1195 = vadd.f32 %v1098, %v1194
  %v1196 = vpop.f32.mrf.mxu0
  %v1197 = vpop.f32.mrf.mxu0
  %v1198 = vadd.f32 %v1101, %v1197
  %v1199 = vpop.f32.mrf.mxu0
  %1200 = vmatprep.mubr.bf16.mxu0 %v467
  %1201 = vmatmul.mubr.bf16.gmra.mxu0 %v466
  %v1202 = vpop.f32.mrf.mxu0
  %v1203 = vadd.f32 %v1106, %v1202
  %v1204 = vpop.f32.mrf.mxu0
  %v1205 = vpop.f32.mrf.mxu0
  %v1206 = vadd.f32 %v1109, %v1205
  %v1207 = vpop.f32.mrf.mxu0
  %1208 = vdwg.mxu0
  %1209 = vmatprep.subr.bf16.mxu0 0
  %1210 = vmatpush1.bf16.msra.mxu0 %v845
  %1211 = vmatprep.subr.bf16.mxu0 0
  %1212 = vmatpush1.bf16.msra.mxu0 %v844
  %1213 = vmatprep.subr.bf16.mxu0 0
  %1214 = vmatpush1.bf16.msra.mxu0 %v843
  %1215 = vmatprep.subr.bf16.mxu0 0
  %1216 = vmatpush1.bf16.msra.mxu0 %v842
  %1217 = vmatprep.subr.bf16.mxu0 0
  %1218 = vmatpush1.bf16.msra.mxu0 %v841
  %1219 = vmatprep.subr.bf16.mxu0 0
  %1220 = vmatpush1.bf16.msra.mxu0 %v840
  %1221 = vmatprep.subr.bf16.mxu0 0
  %1222 = vmatpush1.bf16.msra.mxu0 %v839
  %1223 = vmatprep.subr.bf16.mxu0 0
  %1224 = vmatpush1.bf16.msra.mxu0 %v838
  %1225 = vmatprep.subr.bf16.mxu0 0
  %1226 = vmatpush2.bf16.msra.mxu0 %v853
  %1227 = vmatprep.subr.bf16.mxu0 0
  %1228 = vmatpush2.bf16.msra.mxu0 %v852
  %1229 = vmatprep.subr.bf16.mxu0 0
  %1230 = vmatpush2.bf16.msra.mxu0 %v851
  %1231 = vmatprep.subr.bf16.mxu0 0
  %1232 = vmatpush2.bf16.msra.mxu0 %v850
  %1233 = vmatprep.subr.bf16.mxu0 0
  %1234 = vmatpush2.bf16.msra.mxu0 %v849
  %1235 = vmatprep.subr.bf16.mxu0 0
  %1236 = vmatpush2.bf16.msra.mxu0 %v848
  %1237 = vmatprep.subr.bf16.mxu0 0
  %1238 = vmatpush2.bf16.msra.mxu0 %v847
  %1239 = vmatprep.subr.bf16.mxu0 0
  %1240 = vmatpush2.bf16.msra.mxu0 %v846
  %1241 = vmatprep.mubr.bf16.mxu0 %v413
  %1242 = vmatmul.mubr.bf16.gmra.mxu0 %v412
  %v1243 = vpop.f32.mrf.mxu0
  %v1244 = vadd.f32 %v1147, %v1243
  %v1245 = vpop.f32.mrf.mxu0
  %v1246 = vpop.f32.mrf.mxu0
  %v1247 = vadd.f32 %v1150, %v1246
  %v1248 = vpop.f32.mrf.mxu0
  %1249 = vmatprep.mubr.bf16.mxu0 %v421
  %1250 = vmatmul.mubr.bf16.gmra.mxu0 %v420
  %v1251 = vpop.f32.mrf.mxu0
  %v1252 = vadd.f32 %v1155, %v1251
  %v1253 = vpop.f32.mrf.mxu0
  %v1254 = vpop.f32.mrf.mxu0
  %v1255 = vadd.f32 %v1158, %v1254
  %v1256 = vpop.f32.mrf.mxu0
  %1257 = vmatprep.mubr.bf16.mxu0 %v429
  %1258 = vmatmul.mubr.bf16.gmra.mxu0 %v428
  %v1259 = vpop.f32.mrf.mxu0
  %v1260 = vadd.f32 %v1163, %v1259
  %v1261 = vpop.f32.mrf.mxu0
  %v1262 = vpop.f32.mrf.mxu0
  %v1263 = vadd.f32 %v1166, %v1262
  %v1264 = vpop.f32.mrf.mxu0
  %1265 = vmatprep.mubr.bf16.mxu0 %v437
  %1266 = vmatmul.mubr.bf16.gmra.mxu0 %v436
  %v1267 = vpop.f32.mrf.mxu0
  %v1268 = vadd.f32 %v1171, %v1267
  %v1269 = vpop.f32.mrf.mxu0
  %v1270 = vpop.f32.mrf.mxu0
  %v1271 = vadd.f32 %v1174, %v1270
  %v1272 = vpop.f32.mrf.mxu0
  %1273 = vmatprep.mubr.bf16.mxu0 %v445
  %1274 = vmatmul.mubr.bf16.gmra.mxu0 %v444
  %v1275 = vpop.f32.mrf.mxu0
  %v1276 = vadd.f32 %v1179, %v1275
  %v1277 = vpop.f32.mrf.mxu0
  %v1278 = vpop.f32.mrf.mxu0
  %v1279 = vadd.f32 %v1182, %v1278
  %v1280 = vpop.f32.mrf.mxu0
  %1281 = vmatprep.mubr.bf16.mxu0 %v453
  %1282 = vmatmul.mubr.bf16.gmra.mxu0 %v452
  %v1283 = vpop.f32.mrf.mxu0
  %v1284 = vadd.f32 %v1187, %v1283
  %v1285 = vpop.f32.mrf.mxu0
  %v1286 = vpop.f32.mrf.mxu0
  %v1287 = vadd.f32 %v1190, %v1286
  %v1288 = vpop.f32.mrf.mxu0
  %1289 = vmatprep.mubr.bf16.mxu0 %v461
  %1290 = vmatmul.mubr.bf16.gmra.mxu0 %v460
  %v1291 = vpop.f32.mrf.mxu0
  %v1292 = vadd.f32 %v1195, %v1291
  %v1293 = vpop.f32.mrf.mxu0
  %v1294 = vpop.f32.mrf.mxu0
  %v1295 = vadd.f32 %v1198, %v1294
  %v1296 = vpop.f32.mrf.mxu0
  %1297 = vmatprep.mubr.bf16.mxu0 %v469
  %1298 = vmatmul.mubr.bf16.gmra.mxu0 %v468
  %v1299 = vpop.f32.mrf.mxu0
  %v1300 = vadd.f32 %v1203, %v1299
  %v1301 = vpop.f32.mrf.mxu0
  %v1302 = vpop.f32.mrf.mxu0
  %v1303 = vadd.f32 %v1206, %v1302
  %v1304 = vpop.f32.mrf.mxu0
  %1305 = vdwg.mxu0
  %v1306 = vmax.f32 %v1244, 0.0
  %v1307 = vmax.f32 %v1247, 0.0
  %v1308 = vmax.f32 %v1252, 0.0
  %v1309 = vmax.f32 %v1255, 0.0
  %v1310 = vmax.f32 %v1260, 0.0
  %v1311 = vmax.f32 %v1263, 0.0
  %v1312 = vmax.f32 %v1268, 0.0
  %v1313 = vmax.f32 %v1271, 0.0
  %v1314 = vmax.f32 %v1276, 0.0
  %v1315 = vmax.f32 %v1279, 0.0
  %v1316 = vmax.f32 %v1284, 0.0
  %v1317 = vmax.f32 %v1287, 0.0
  %v1318 = vmax.f32 %v1292, 0.0
  %v1319 = vmax.f32 %v1295, 0.0
  %v1320 = vmax.f32 %v1300, 0.0
  %v1321 = vmax.f32 %v1303, 0.0
  %1322 = vst [vmem:[%s3] sm:$0xff] %v1306
  %1323 = vst [vmem:[%s3 + $0x8] sm:$0xff] %v1307
  %1324 = vst [vmem:[%s3 + $0x10] sm:$0xff] %v1308
  %1325 = vst [vmem:[%s3 + $0x18] sm:$0xff] %v1309
  %1326 = vst [vmem:[%s3 + $0x20] sm:$0xff] %v1310
  %1327 = vst [vmem:[%s3 + $0x28] sm:$0xff] %v1311
  %1328 = vst [vmem:[%s3 + $0x30] sm:$0xff] %v1312
  %1329 = vst [vmem:[%s3 + $0x38] sm:$0xff] %v1313
  %1330 = vst [vmem:[%s3 + $0x40] sm:$0xff] %v1314
  %1331 = vst [vmem:[%s3 + $0x48] sm:$0xff] %v1315
  %1332 = vst [vmem:[%s3 + $0x50] sm:$0xff] %v1316
  %1333 = vst [vmem:[%s3 + $0x58] sm:$0xff] %v1317
  %1334 = vst [vmem:[%s3 + $0x60] sm:$0xff] %v1318
  %1335 = vst [vmem:[%s3 + $0x68] sm:$0xff] %v1319
  %1336 = vst [vmem:[%s3 + $0x70] sm:$0xff] %v1320
  %1337 = vst [vmem:[%s3 + $0x78] sm:$0xff] %v1321
  // Predicated region
  $region14: #{edgegan_forward.20} parent=0 // pred_check
    _
  $region15: #{edgegan_forward.20} parent=0 // pred_check_branch
    %1339 = sbr.rel (0) target = $region17
  $region16: #{edgegan_forward.20} parent=0 // pred_region
    _
  $region17: #{edgegan_forward.20} parent=0 // pred_fallthru
    _
  // Predicated region
  $region18: #{edgegan_forward.20} parent=0 // pred_check
    _
  $region19: #{edgegan_forward.20} parent=0 // pred_check_branch
    %1341 = sbr.rel (0) target = $region21
  $region20: #{edgegan_forward.20} parent=0 // pred_region
    _
  $region21: #{edgegan_forward.20} parent=0 // pred_fallthru
    _

// kernel: edgegan_forward.21
$region0: #{edgegan_forward.21}
  #allocation0 [shape = 'u32[]', space=smem, size = 0x4, offset = 0x4, fixed_abs, tag = 'smem constant byte address 0x4 - core index']
  #allocation1 [shape = 'u32[144,128]{1,0:T(1,128)}', space=vmem, size = 0x12000, scoped, tag = 'internal scratch']
  %s0 = inlined_call_operand.vmem [shape: bf16[512,512], index: 0, kind: input, shape index: {}]
  %s1 = inlined_call_operand.vmem [shape: bf16[512,128], index: 1, kind: input, shape index: {}]
  %s2 = inlined_call_operand.vmem [shape: f32[1,128], index: 2, kind: input, shape index: {}]
  %s3 = inlined_call_operand.vmem [shape: f32[512,128], index: 3, kind: output, shape index: {}]
  %s4 = sld [smem:[#allocation0]]
  $region45: #{edgegan_forward.21} parent=0
    _
  %s6 = ssub.s32 1, %s4
  %s7 = scalar_select 0, %s6, %s4
  loop: start=0, step=1, limit=4
  $region2: #{edgegan_forward.21} parent=0 // loop_pre_header
    _
  $region3: #{edgegan_forward.21} parent=0 // loop_header
    %s9 = sphi 0, %s13
    %p10 = scmp.ge.s32.totalorder %s9, 4
    %s16 = sphi 0, %s28
    %s17 = sphi 0, %s24
    %s18 = sphi 0, %s16
    %s19 = sphi 0, %s17
    %s20 = sphi 0, %s18
    %s21 = sphi 0, %s19
    %s31 = sphi 0, %s33
    %s34 = sphi 0, %s31
    %s35 = sphi 0, %s34
    %s51 = sphi 0, %s35
    %s57 = sphi 0, %s59
    %s60 = sphi 0, %s57
    %s61 = sphi 0, %s60
    %s77 = sphi 0, %s61
    %s83 = sphi 0, %s85
    %s86 = sphi 0, %s83
    %s87 = sphi 0, %s86
    %s103 = sphi 0, %s87
    %s111 = sphi 0, %s113
    %s114 = sphi 0, %s111
    %s115 = sphi 0, %s114
    %s131 = sphi 0, %s115
  $region4: #{edgegan_forward.21} parent=0 // loop_header_branch
    %12 = sbr.rel (%p10) target = $region8
  $region5: #{edgegan_forward.21} parent=0 // loop_body
    %s14 = ssub.s32 %s9, 1
    %s15 = ssub.s32 %s9, 2
    %s22 = sadd.s32 1, %s17
    %p23 = scmp.ge.s32.totalorder %s22, 1
    %s24 = scalar_select %p23, 0, %s22
    %s25 = sadd.s32 1, %s16
    %s26 = scalar_select %p23, %s25, %s16
    %p27 = scmp.ge.s32.totalorder %s26, 2
    %s28 = scalar_select %p27, 0, %s26
    %s29 = ssub.s32 %s16, %s28
    %p30 = scmp.eq.s32.totalorder %s29, 0
    %s32 = sadd.s32 %s31, 1
    %s33 = scalar_select %p30, %s31, %s32
    %p36 = pneg %p30
    %p37 = scmp.eq.s32.totalorder %s9, 1
    %p38 = por %p36, %p37
    %p39 = scmp.ne.s32.totalorder %s31, %s34
    %p40 = scmp.eq.s32.totalorder %s9, 0
    %p41 = por %p39, %p40
    %p42 = scmp.ne.s32.totalorder %s31, %s34
    %p43 = scmp.eq.s32.totalorder %s14, 1
    %p44 = por %p42, %p43
    %p45 = scmp.ne.s32.totalorder %s34, %s35
    %p46 = scmp.eq.s32.totalorder %s14, 0
    %p47 = por %p45, %p46
    %p48 = scmp.ne.s32.totalorder %s34, %s35
    %p49 = scmp.eq.s32.totalorder %s15, 1
    %p50 = por %p48, %p49
    %p52 = scmp.ne.s32.totalorder %s35, %s51
    %p53 = scmp.eq.s32.totalorder %s15, 0
    %p54 = por %p52, %p53
    %s55 = ssub.s32 %s17, %s24
    %p56 = scmp.eq.s32.totalorder %s55, 0
    %s58 = sadd.s32 %s57, 1
    %s59 = scalar_select %p56, %s57, %s58
    %p62 = pneg %p56
    %p63 = scmp.eq.s32.totalorder %s9, 1
    %p64 = por %p62, %p63
    %p65 = scmp.ne.s32.totalorder %s57, %s60
    %p66 = scmp.eq.s32.totalorder %s9, 0
    %p67 = por %p65, %p66
    %p68 = scmp.ne.s32.totalorder %s57, %s60
    %p69 = scmp.eq.s32.totalorder %s14, 1
    %p70 = por %p68, %p69
    %p71 = scmp.ne.s32.totalorder %s60, %s61
    %p72 = scmp.eq.s32.totalorder %s14, 0
    %p73 = por %p71, %p72
    %p74 = scmp.ne.s32.totalorder %s60, %s61
    %p75 = scmp.eq.s32.totalorder %s15, 1
    %p76 = por %p74, %p75
    %p78 = scmp.ne.s32.totalorder %s61, %s77
    %p79 = scmp.eq.s32.totalorder %s15, 0
    %p80 = por %p78, %p79
    %s81 = ssub.s32 %s17, %s24
    %p82 = scmp.eq.s32.totalorder %s81, 0
    %s84 = sadd.s32 %s83, 1
    %s85 = scalar_select %p82, %s83, %s84
    %p88 = pneg %p82
    %p89 = scmp.eq.s32.totalorder %s9, 1
    %p90 = por %p88, %p89
    %p91 = scmp.ne.s32.totalorder %s83, %s86
    %p92 = scmp.eq.s32.totalorder %s9, 0
    %p93 = por %p91, %p92
    %p94 = scmp.ne.s32.totalorder %s83, %s86
    %p95 = scmp.eq.s32.totalorder %s14, 1
    %p96 = por %p94, %p95
    %p97 = scmp.ne.s32.totalorder %s86, %s87
    %p98 = scmp.eq.s32.totalorder %s14, 0
    %p99 = por %p97, %p98
    %p100 = scmp.ne.s32.totalorder %s86, %s87
    %p101 = scmp.eq.s32.totalorder %s15, 1
    %p102 = por %p100, %p101
    %p104 = scmp.ne.s32.totalorder %s87, %s103
    %p105 = scmp.eq.s32.totalorder %s15, 0
    %p106 = por %p104, %p105
    %s107 = ssub.s32 %s16, %s28
    %s108 = ssub.s32 %s17, %s24
    %s109 = sor.u32 %s107, %s108
    %p110 = scmp.eq.s32.totalorder %s109, 0
    %s112 = sadd.s32 %s111, 1
    %s113 = scalar_select %p110, %s111, %s112
    %p116 = pneg %p110
    %p117 = scmp.eq.s32.totalorder %s9, 1
    %p118 = por %p116, %p117
    %p119 = scmp.ne.s32.totalorder %s111, %s114
    %p120 = scmp.eq.s32.totalorder %s9, 0
    %p121 = por %p119, %p120
    %p122 = scmp.ne.s32.totalorder %s111, %s114
    %p123 = scmp.eq.s32.totalorder %s14, 1
    %p124 = por %p122, %p123
    %p125 = scmp.ne.s32.totalorder %s114, %s115
    %p126 = scmp.eq.s32.totalorder %s14, 0
    %p127 = por %p125, %p126
    %p128 = scmp.ne.s32.totalorder %s114, %s115
    %p129 = scmp.eq.s32.totalorder %s15, 1
    %p130 = por %p128, %p129
    %p132 = scmp.ne.s32.totalorder %s115, %s131
    %p133 = scmp.eq.s32.totalorder %s15, 0
    %p134 = por %p132, %p133
    %p135 = scmp.le.s32.totalorder 1, %s9
    %p136 = scmp.lt.s32.totalorder %s9, 3
    %p137 = pnand %p135, %p136
    %p138 = pneg %p137
    // Predicated region
    $region9: #{edgegan_forward.21} parent=5 // pred_check
      _
    $region10: #{edgegan_forward.21} parent=5 // pred_check_branch
      %140 = sbr.rel (%p137) target = $region12
    $region11: #{edgegan_forward.21} parent=5 // pred_region
      %s141 = ssub.s32 %s9, 1
      // Predicated region
      $region13: #{edgegan_forward.21} parent=11 // pred_check
        %p142 = pneg %p73
      $region14: #{edgegan_forward.21} parent=11 // pred_check_branch
        %144 = sbr.rel (%p142) target = $region16
      $region15: #{edgegan_forward.21} parent=11 // pred_region
        %p145 = scmp.lt.s32.totalorder %s19, 0
        %s146 = scalar_select %p145, %s19, 0
        %s147 = smul.addr %s146, 4
        %s148 = scalar_lea.vmem %s1, %s147
      $region16: #{edgegan_forward.21} parent=11 // pred_fallthru
        _
      // Predicated region
      $region17: #{edgegan_forward.21} parent=11 // pred_check
        %p149 = pneg %p99
      $region18: #{edgegan_forward.21} parent=11 // pred_check_branch
        %151 = sbr.rel (%p149) target = $region20
      $region19: #{edgegan_forward.21} parent=11 // pred_region
        %p152 = scmp.lt.s32.totalorder %s19, 0
        %s153 = scalar_select %p152, %s19, 0
        %s154 = scalar_lea.vmem %s2, %s153
      $region20: #{edgegan_forward.21} parent=11 // pred_fallthru
        _
    $region12: #{edgegan_forward.21} parent=5 // pred_fallthru
      _
    %p155 = scmp.lt.s32.totalorder %s9, 2
    // Predicated region
    $region21: #{edgegan_forward.21} parent=5 // pred_check
      %p156 = pneg %p155
    $region22: #{edgegan_forward.21} parent=5 // pred_check_branch
      %158 = sbr.rel (%p156) target = $region24
    $region23: #{edgegan_forward.21} parent=5 // pred_region
      // Predicated region
      $region25: #{edgegan_forward.21} parent=23 // pred_check
        %p159 = pneg %p41
      $region26: #{edgegan_forward.21} parent=23 // pred_check_branch
        %161 = sbr.rel (%p159) target = $region28
      $region27: #{edgegan_forward.21} parent=23 // pred_region
        %s162 = smul.u32 32, %s16
        %p163 = scmp.lt.s32.totalorder %s162, 63
        %s164 = scalar_select %p163, %s162, 63
        %s165 = smul.addr %s164, 4
        %s166 = smul.addr %s165, 4
        %s167 = scalar_lea.vmem %s0, %s166
        %s168 = smul.u32 32, %s16
      $region28: #{edgegan_forward.21} parent=23 // pred_fallthru
        _
    $region24: #{edgegan_forward.21} parent=5 // pred_fallthru
      _
    %p169 = scmp.le.s32.totalorder 1, %s9
    %p170 = scmp.lt.s32.totalorder %s9, 3
    %p171 = pnand %p169, %p170
    %p172 = pneg %p171
    // Predicated region
    $region29: #{edgegan_forward.21} parent=5 // pred_check
      _
    $region30: #{edgegan_forward.21} parent=5 // pred_check_branch
      %174 = sbr.rel (%p171) target = $region32
    $region31: #{edgegan_forward.21} parent=5 // pred_region
      %s175 = ssub.s32 %s9, 1
      %s176 = smul.u32 32, %s18
      %p177 = scmp.lt.s32.totalorder %s176, 63
      %s178 = scalar_select %p177, %s176, 63
      %s179 = smul.addr %s178, 4
      %s180 = smul.addr %s179, 4
      %s181 = scalar_lea.vmem %s0, %s180
      %p182 = pneg %p47
      %p183 = pneg %p44
      %p184 = scmp.lt.s32.totalorder %s19, 0
      %s185 = scalar_select %p184, %s19, 0
      %s186 = smul.addr %s185, 4
      %s187 = scalar_lea.vmem %s1, %s186
      %p188 = pneg %p73
      %p189 = pneg %p70
      %p190 = scmp.lt.s32.totalorder %s19, 0
      %s191 = scalar_select %p190, %s19, 0
      %s192 = scalar_lea.vmem %s2, %s191
      %p193 = pneg %p99
      %p194 = pneg %p96
      %p195 = pneg %p127
      %p196 = pneg %p124
      %s197 = smul.u32 32, %s18
      %p198 = scmp.lt.s32.totalorder %s197, 63
      %s199 = scalar_select %p198, %s197, 63
      %p200 = scmp.lt.s32.totalorder %s19, 0
      %s201 = scalar_select %p200, %s19, 0
      %s202 = sadd.s32 %s201, %s199
      %s203 = smul.addr %s202, 8
      %s204 = scalar_lea.vmem %s3, %s203
      %s205 = smul.u32 32, %s18
      %p206 = scmp.lt.s32.totalorder %s205, 63
      %s207 = scalar_select %p206, %s205, 63
      %s208 = smul.addr %s207, 4
      %s209 = smul.addr %s208, 4
      %s210 = scalar_lea.vmem %s0, %s209
      %s211 = smul.u32 32, %s18
      %p212 = scmp.lt.s32.totalorder %s19, 0
      %s213 = scalar_select %p212, %s19, 0
      %s214 = smul.addr %s213, 4
      %s215 = scalar_lea.vmem %s1, %s214
      %p216 = scmp.lt.s32.totalorder %s19, 0
      %s217 = scalar_select %p216, %s19, 0
      %s218 = scalar_lea.vmem %s2, %s217
      %s219 = smul.u32 32, %s18
      %p220 = scmp.lt.s32.totalorder %s219, 63
      %s221 = scalar_select %p220, %s219, 63
      %p222 = scmp.lt.s32.totalorder %s19, 0
      %s223 = scalar_select %p222, %s19, 0
      %s224 = sadd.s32 %s223, %s221
      %s225 = smul.addr %s224, 8
      %s226 = scalar_lea.vmem %s3, %s225
      %s227 = smul.u32 32, %s18
      %v229 = vld [vmem:[%s210] sm:$0xff]
      %v230 = vld [vmem:[%s210 + $0x8] sm:$0xff]
      %v231 = vld [vmem:[%s210 + $0x10] sm:$0xff]
      %v232 = vld [vmem:[%s210 + $0x18] sm:$0xff]
      %v233 = vld [vmem:[%s210 + $0x20] sm:$0xff]
      %v234 = vld [vmem:[%s210 + $0x28] sm:$0xff]
      %v235 = vld [vmem:[%s210 + $0x30] sm:$0xff]
      %v236 = vld [vmem:[%s210 + $0x38] sm:$0xff]
      %v237 = vld [vmem:[%s210 + $0x40] sm:$0xff]
      %v238 = vld [vmem:[%s210 + $0x48] sm:$0xff]
      %v239 = vld [vmem:[%s210 + $0x50] sm:$0xff]
      %v240 = vld [vmem:[%s210 + $0x58] sm:$0xff]
      %v241 = vld [vmem:[%s210 + $0x60] sm:$0xff]
      %v242 = vld [vmem:[%s210 + $0x68] sm:$0xff]
      %v243 = vld [vmem:[%s210 + $0x70] sm:$0xff]
      %v244 = vld [vmem:[%s210 + $0x78] sm:$0xff]
      %v245 = vld [vmem:[%s210 + $0x80] sm:$0xff]
      %v246 = vld [vmem:[%s210 + $0x88] sm:$0xff]
      %v247 = vld [vmem:[%s210 + $0x90] sm:$0xff]
      %v248 = vld [vmem:[%s210 + $0x98] sm:$0xff]
      %v249 = vld [vmem:[%s210 + $0xa0] sm:$0xff]
      %v250 = vld [vmem:[%s210 + $0xa8] sm:$0xff]
      %v251 = vld [vmem:[%s210 + $0xb0] sm:$0xff]
      %v252 = vld [vmem:[%s210 + $0xb8] sm:$0xff]
      %v253 = vld [vmem:[%s210 + $0xc0] sm:$0xff]
      %v254 = vld [vmem:[%s210 + $0xc8] sm:$0xff]
      %v255 = vld [vmem:[%s210 + $0xd0] sm:$0xff]
      %v256 = vld [vmem:[%s210 + $0xd8] sm:$0xff]
      %v257 = vld [vmem:[%s210 + $0xe0] sm:$0xff]
      %v258 = vld [vmem:[%s210 + $0xe8] sm:$0xff]
      %v259 = vld [vmem:[%s210 + $0xf0] sm:$0xff]
      %v260 = vld [vmem:[%s210 + $0xf8] sm:$0xff]
      %v261 = vld [vmem:[%s210 + $0x100] sm:$0xff]
      %v262 = vld [vmem:[%s210 + $0x108] sm:$0xff]
      %v263 = vld [vmem:[%s210 + $0x110] sm:$0xff]
      %v264 = vld [vmem:[%s210 + $0x118] sm:$0xff]
      %v265 = vld [vmem:[%s210 + $0x120] sm:$0xff]
      %v266 = vld [vmem:[%s210 + $0x128] sm:$0xff]
      %v267 = vld [vmem:[%s210 + $0x130] sm:$0xff]
      %v268 = vld [vmem:[%s210 + $0x138] sm:$0xff]
      %v269 = vld [vmem:[%s210 + $0x140] sm:$0xff]
      %v270 = vld [vmem:[%s210 + $0x148] sm:$0xff]
      %v271 = vld [vmem:[%s210 + $0x150] sm:$0xff]
      %v272 = vld [vmem:[%s210 + $0x158] sm:$0xff]
      %v273 = vld [vmem:[%s210 + $0x160] sm:$0xff]
      %v274 = vld [vmem:[%s210 + $0x168] sm:$0xff]
      %v275 = vld [vmem:[%s210 + $0x170] sm:$0xff]
      %v276 = vld [vmem:[%s210 + $0x178] sm:$0xff]
      %v277 = vld [vmem:[%s210 + $0x180] sm:$0xff]
      %v278 = vld [vmem:[%s210 + $0x188] sm:$0xff]
      %v279 = vld [vmem:[%s210 + $0x190] sm:$0xff]
      %v280 = vld [vmem:[%s210 + $0x198] sm:$0xff]
      %v281 = vld [vmem:[%s210 + $0x1a0] sm:$0xff]
      %v282 = vld [vmem:[%s210 + $0x1a8] sm:$0xff]
      %v283 = vld [vmem:[%s210 + $0x1b0] sm:$0xff]
      %v284 = vld [vmem:[%s210 + $0x1b8] sm:$0xff]
      %v285 = vld [vmem:[%s210 + $0x1c0] sm:$0xff]
      %v286 = vld [vmem:[%s210 + $0x1c8] sm:$0xff]
      %v287 = vld [vmem:[%s210 + $0x1d0] sm:$0xff]
      %v288 = vld [vmem:[%s210 + $0x1d8] sm:$0xff]
      %v289 = vld [vmem:[%s210 + $0x1e0] sm:$0xff]
      %v290 = vld [vmem:[%s210 + $0x1e8] sm:$0xff]
      %v291 = vld [vmem:[%s210 + $0x1f0] sm:$0xff]
      %v292 = vld [vmem:[%s210 + $0x1f8] sm:$0xff]
      %v293 = vld [vmem:[%s215] sm:$0xf]
      %v294 = vld [vmem:[%s215 + $0x4] sm:$0xf]
      %v295 = vld [vmem:[%s215 + $0x8] sm:$0xf]
      %v296 = vld [vmem:[%s215 + $0xc] sm:$0xf]
      %v297 = vld [vmem:[%s215 + $0x10] sm:$0xf]
      %v298 = vld [vmem:[%s215 + $0x14] sm:$0xf]
      %v299 = vld [vmem:[%s215 + $0x18] sm:$0xf]
      %v300 = vld [vmem:[%s215 + $0x1c] sm:$0xf]
      %v301 = vld [vmem:[%s215 + $0x20] sm:$0xf]
      %v302 = vld [vmem:[%s215 + $0x24] sm:$0xf]
      %v303 = vld [vmem:[%s215 + $0x28] sm:$0xf]
      %v304 = vld [vmem:[%s215 + $0x2c] sm:$0xf]
      %v305 = vld [vmem:[%s215 + $0x30] sm:$0xf]
      %v306 = vld [vmem:[%s215 + $0x34] sm:$0xf]
      %v307 = vld [vmem:[%s215 + $0x38] sm:$0xf]
      %v308 = vld [vmem:[%s215 + $0x3c] sm:$0xf]
      %v309 = vld [vmem:[%s215 + $0x40] sm:$0xf]
      %v310 = vld [vmem:[%s215 + $0x44] sm:$0xf]
      %v311 = vld [vmem:[%s215 + $0x48] sm:$0xf]
      %v312 = vld [vmem:[%s215 + $0x4c] sm:$0xf]
      %v313 = vld [vmem:[%s215 + $0x50] sm:$0xf]
      %v314 = vld [vmem:[%s215 + $0x54] sm:$0xf]
      %v315 = vld [vmem:[%s215 + $0x58] sm:$0xf]
      %v316 = vld [vmem:[%s215 + $0x5c] sm:$0xf]
      %v317 = vld [vmem:[%s215 + $0x60] sm:$0xf]
      %v318 = vld [vmem:[%s215 + $0x64] sm:$0xf]
      %v319 = vld [vmem:[%s215 + $0x68] sm:$0xf]
      %v320 = vld [vmem:[%s215 + $0x6c] sm:$0xf]
      %v321 = vld [vmem:[%s215 + $0x70] sm:$0xf]
      %v322 = vld [vmem:[%s215 + $0x74] sm:$0xf]
      %v323 = vld [vmem:[%s215 + $0x78] sm:$0xf]
      %v324 = vld [vmem:[%s215 + $0x7c] sm:$0xf]
      %v325 = vld [vmem:[%s215 + $0x80] sm:$0xf]
      %v326 = vld [vmem:[%s215 + $0x84] sm:$0xf]
      %v327 = vld [vmem:[%s215 + $0x88] sm:$0xf]
      %v328 = vld [vmem:[%s215 + $0x8c] sm:$0xf]
      %v329 = vld [vmem:[%s215 + $0x90] sm:$0xf]
      %v330 = vld [vmem:[%s215 + $0x94] sm:$0xf]
      %v331 = vld [vmem:[%s215 + $0x98] sm:$0xf]
      %v332 = vld [vmem:[%s215 + $0x9c] sm:$0xf]
      %v333 = vld [vmem:[%s215 + $0xa0] sm:$0xf]
      %v334 = vld [vmem:[%s215 + $0xa4] sm:$0xf]
      %v335 = vld [vmem:[%s215 + $0xa8] sm:$0xf]
      %v336 = vld [vmem:[%s215 + $0xac] sm:$0xf]
      %v337 = vld [vmem:[%s215 + $0xb0] sm:$0xf]
      %v338 = vld [vmem:[%s215 + $0xb4] sm:$0xf]
      %v339 = vld [vmem:[%s215 + $0xb8] sm:$0xf]
      %v340 = vld [vmem:[%s215 + $0xbc] sm:$0xf]
      %v341 = vld [vmem:[%s215 + $0xc0] sm:$0xf]
      %v342 = vld [vmem:[%s215 + $0xc4] sm:$0xf]
      %v343 = vld [vmem:[%s215 + $0xc8] sm:$0xf]
      %v344 = vld [vmem:[%s215 + $0xcc] sm:$0xf]
      %v345 = vld [vmem:[%s215 + $0xd0] sm:$0xf]
      %v346 = vld [vmem:[%s215 + $0xd4] sm:$0xf]
      %v347 = vld [vmem:[%s215 + $0xd8] sm:$0xf]
      %v348 = vld [vmem:[%s215 + $0xdc] sm:$0xf]
      %v349 = vld [vmem:[%s215 + $0xe0] sm:$0xf]
      %v350 = vld [vmem:[%s215 + $0xe4] sm:$0xf]
      %v351 = vld [vmem:[%s215 + $0xe8] sm:$0xf]
      %v352 = vld [vmem:[%s215 + $0xec] sm:$0xf]
      %v353 = vld [vmem:[%s215 + $0xf0] sm:$0xf]
      %v354 = vld [vmem:[%s215 + $0xf4] sm:$0xf]
      %v355 = vld [vmem:[%s215 + $0xf8] sm:$0xf]
      %v356 = vld [vmem:[%s215 + $0xfc] sm:$0xf]
      %v357 = vld [vmem:[%s218] sm:$0x1]
      %v359 = vlaneseq
      %v360 = vshrl.u32 %v359, 7
      %v361 = vsub.s32 0, %v360
      %v362 = vrot.slane %v357, %v361
      %v428 = vunpack.c.l.b16 %v229
      %v429 = vunpack.c.h.b16 %v229
      %v430 = vunpack.c.l.b16 %v230
      %v431 = vunpack.c.h.b16 %v230
      %v432 = vunpack.c.l.b16 %v231
      %v433 = vunpack.c.h.b16 %v231
      %v434 = vunpack.c.l.b16 %v232
      %v435 = vunpack.c.h.b16 %v232
      %v436 = vunpack.c.l.b16 %v233
      %v437 = vunpack.c.h.b16 %v233
      %v438 = vunpack.c.l.b16 %v234
      %v439 = vunpack.c.h.b16 %v234
      %v440 = vunpack.c.l.b16 %v235
      %v441 = vunpack.c.h.b16 %v235
      %v442 = vunpack.c.l.b16 %v236
      %v443 = vunpack.c.h.b16 %v236
      %v444 = vunpack.c.l.b16 %v237
      %v445 = vunpack.c.h.b16 %v237
      %v446 = vunpack.c.l.b16 %v238
      %v447 = vunpack.c.h.b16 %v238
      %v448 = vunpack.c.l.b16 %v239
      %v449 = vunpack.c.h.b16 %v239
      %v450 = vunpack.c.l.b16 %v240
      %v451 = vunpack.c.h.b16 %v240
      %v452 = vunpack.c.l.b16 %v241
      %v453 = vunpack.c.h.b16 %v241
      %v454 = vunpack.c.l.b16 %v242
      %v455 = vunpack.c.h.b16 %v242
      %v456 = vunpack.c.l.b16 %v243
      %v457 = vunpack.c.h.b16 %v243
      %v458 = vunpack.c.l.b16 %v244
      %v459 = vunpack.c.h.b16 %v244
      %v460 = vunpack.c.l.b16 %v245
      %v461 = vunpack.c.h.b16 %v245
      %v462 = vunpack.c.l.b16 %v246
      %v463 = vunpack.c.h.b16 %v246
      %v464 = vunpack.c.l.b16 %v247
      %v465 = vunpack.c.h.b16 %v247
      %v466 = vunpack.c.l.b16 %v248
      %v467 = vunpack.c.h.b16 %v248
      %v468 = vunpack.c.l.b16 %v249
      %v469 = vunpack.c.h.b16 %v249
      %v470 = vunpack.c.l.b16 %v250
      %v471 = vunpack.c.h.b16 %v250
      %v472 = vunpack.c.l.b16 %v251
      %v473 = vunpack.c.h.b16 %v251
      %v474 = vunpack.c.l.b16 %v252
      %v475 = vunpack.c.h.b16 %v252
      %v476 = vunpack.c.l.b16 %v253
      %v477 = vunpack.c.h.b16 %v253
      %v478 = vunpack.c.l.b16 %v254
      %v479 = vunpack.c.h.b16 %v254
      %v480 = vunpack.c.l.b16 %v255
      %v481 = vunpack.c.h.b16 %v255
      %v482 = vunpack.c.l.b16 %v256
      %v483 = vunpack.c.h.b16 %v256
      %v484 = vunpack.c.l.b16 %v257
      %v485 = vunpack.c.h.b16 %v257
      %v486 = vunpack.c.l.b16 %v258
      %v487 = vunpack.c.h.b16 %v258
      %v488 = vunpack.c.l.b16 %v259
      %v489 = vunpack.c.h.b16 %v259
      %v490 = vunpack.c.l.b16 %v260
      %v491 = vunpack.c.h.b16 %v260
      %v492 = vunpack.c.l.b16 %v261
      %v493 = vunpack.c.h.b16 %v261
      %v494 = vunpack.c.l.b16 %v262
      %v495 = vunpack.c.h.b16 %v262
      %v496 = vunpack.c.l.b16 %v263
      %v497 = vunpack.c.h.b16 %v263
      %v498 = vunpack.c.l.b16 %v264
      %v499 = vunpack.c.h.b16 %v264
      %v500 = vunpack.c.l.b16 %v265
      %v501 = vunpack.c.h.b16 %v265
      %v502 = vunpack.c.l.b16 %v266
      %v503 = vunpack.c.h.b16 %v266
      %v504 = vunpack.c.l.b16 %v267
      %v505 = vunpack.c.h.b16 %v267
      %v506 = vunpack.c.l.b16 %v268
      %v507 = vunpack.c.h.b16 %v268
      %v508 = vunpack.c.l.b16 %v269
      %v509 = vunpack.c.h.b16 %v269
      %v510 = vunpack.c.l.b16 %v270
      %v511 = vunpack.c.h.b16 %v270
      %v512 = vunpack.c.l.b16 %v271
      %v513 = vunpack.c.h.b16 %v271
      %v514 = vunpack.c.l.b16 %v272
      %v515 = vunpack.c.h.b16 %v272
      %v516 = vunpack.c.l.b16 %v273
      %v517 = vunpack.c.h.b16 %v273
      %v518 = vunpack.c.l.b16 %v274
      %v519 = vunpack.c.h.b16 %v274
      %v520 = vunpack.c.l.b16 %v275
      %v521 = vunpack.c.h.b16 %v275
      %v522 = vunpack.c.l.b16 %v276
      %v523 = vunpack.c.h.b16 %v276
      %v524 = vunpack.c.l.b16 %v277
      %v525 = vunpack.c.h.b16 %v277
      %v526 = vunpack.c.l.b16 %v278
      %v527 = vunpack.c.h.b16 %v278
      %v528 = vunpack.c.l.b16 %v279
      %v529 = vunpack.c.h.b16 %v279
      %v530 = vunpack.c.l.b16 %v280
      %v531 = vunpack.c.h.b16 %v280
      %v532 = vunpack.c.l.b16 %v281
      %v533 = vunpack.c.h.b16 %v281
      %v534 = vunpack.c.l.b16 %v282
      %v535 = vunpack.c.h.b16 %v282
      %v536 = vunpack.c.l.b16 %v283
      %v537 = vunpack.c.h.b16 %v283
      %v538 = vunpack.c.l.b16 %v284
      %v539 = vunpack.c.h.b16 %v284
      %v540 = vunpack.c.l.b16 %v285
      %v541 = vunpack.c.h.b16 %v285
      %v542 = vunpack.c.l.b16 %v286
      %v543 = vunpack.c.h.b16 %v286
      %v544 = vunpack.c.l.b16 %v287
      %v545 = vunpack.c.h.b16 %v287
      %v546 = vunpack.c.l.b16 %v288
      %v547 = vunpack.c.h.b16 %v288
      %v548 = vunpack.c.l.b16 %v289
      %v549 = vunpack.c.h.b16 %v289
      %v550 = vunpack.c.l.b16 %v290
      %v551 = vunpack.c.h.b16 %v290
      %v552 = vunpack.c.l.b16 %v291
      %v553 = vunpack.c.h.b16 %v291
      %v554 = vunpack.c.l.b16 %v292
      %v555 = vunpack.c.h.b16 %v292
      %v556 = vpack.c.b16 %v432, %v428
      %v557 = vpack.c.b16 %v433, %v429
      %v558 = vpack.c.b16 %v434, %v430
      %v559 = vpack.c.b16 %v435, %v431
      %v560 = vpack.c.b16 %v440, %v436
      %v561 = vpack.c.b16 %v441, %v437
      %v562 = vpack.c.b16 %v442, %v438
      %v563 = vpack.c.b16 %v443, %v439
      %v564 = vpack.c.b16 %v448, %v444
      %v565 = vpack.c.b16 %v449, %v445
      %v566 = vpack.c.b16 %v450, %v446
      %v567 = vpack.c.b16 %v451, %v447
      %v568 = vpack.c.b16 %v456, %v452
      %v569 = vpack.c.b16 %v457, %v453
      %v570 = vpack.c.b16 %v458, %v454
      %v571 = vpack.c.b16 %v459, %v455
      %v572 = vpack.c.b16 %v464, %v460
      %v573 = vpack.c.b16 %v465, %v461
      %v574 = vpack.c.b16 %v466, %v462
      %v575 = vpack.c.b16 %v467, %v463
      %v576 = vpack.c.b16 %v472, %v468
      %v577 = vpack.c.b16 %v473, %v469
      %v578 = vpack.c.b16 %v474, %v470
      %v579 = vpack.c.b16 %v475, %v471
      %v580 = vpack.c.b16 %v480, %v476
      %v581 = vpack.c.b16 %v481, %v477
      %v582 = vpack.c.b16 %v482, %v478
      %v583 = vpack.c.b16 %v483, %v479
      %v584 = vpack.c.b16 %v488, %v484
      %v585 = vpack.c.b16 %v489, %v485
      %v586 = vpack.c.b16 %v490, %v486
      %v587 = vpack.c.b16 %v491, %v487
      %v588 = vpack.c.b16 %v496, %v492
      %v589 = vpack.c.b16 %v497, %v493
      %v590 = vpack.c.b16 %v498, %v494
      %v591 = vpack.c.b16 %v499, %v495
      %v592 = vpack.c.b16 %v504, %v500
      %v593 = vpack.c.b16 %v505, %v501
      %v594 = vpack.c.b16 %v506, %v502
      %v595 = vpack.c.b16 %v507, %v503
      %v596 = vpack.c.b16 %v512, %v508
      %v597 = vpack.c.b16 %v513, %v509
      %v598 = vpack.c.b16 %v514, %v510
      %v599 = vpack.c.b16 %v515, %v511
      %v600 = vpack.c.b16 %v520, %v516
      %v601 = vpack.c.b16 %v521, %v517
      %v602 = vpack.c.b16 %v522, %v518
      %v603 = vpack.c.b16 %v523, %v519
      %v604 = vpack.c.b16 %v528, %v524
      %v605 = vpack.c.b16 %v529, %v525
      %v606 = vpack.c.b16 %v530, %v526
      %v607 = vpack.c.b16 %v531, %v527
      %v608 = vpack.c.b16 %v536, %v532
      %v609 = vpack.c.b16 %v537, %v533
      %v610 = vpack.c.b16 %v538, %v534
      %v611 = vpack.c.b16 %v539, %v535
      %v612 = vpack.c.b16 %v544, %v540
      %v613 = vpack.c.b16 %v545, %v541
      %v614 = vpack.c.b16 %v546, %v542
      %v615 = vpack.c.b16 %v547, %v543
      %v616 = vpack.c.b16 %v552, %v548
      %v617 = vpack.c.b16 %v553, %v549
      %v618 = vpack.c.b16 %v554, %v550
      %v619 = vpack.c.b16 %v555, %v551
      %v748 = vunpack.c.l.b16 %v293
      %v749 = vunpack.c.l.b16 %v294
      %v750 = vunpack.c.l.b16 %v295
      %v751 = vunpack.c.l.b16 %v296
      %v752 = vunpack.c.l.b16 %v297
      %v753 = vunpack.c.l.b16 %v298
      %v754 = vunpack.c.l.b16 %v299
      %v755 = vunpack.c.l.b16 %v300
      %v756 = vunpack.c.l.b16 %v301
      %v757 = vunpack.c.l.b16 %v302
      %v758 = vunpack.c.l.b16 %v303
      %v759 = vunpack.c.l.b16 %v304
      %v760 = vunpack.c.l.b16 %v305
      %v761 = vunpack.c.l.b16 %v306
      %v762 = vunpack.c.l.b16 %v307
      %v763 = vunpack.c.l.b16 %v308
      %v764 = vunpack.c.l.b16 %v309
      %v765 = vunpack.c.l.b16 %v310
      %v766 = vunpack.c.l.b16 %v311
      %v767 = vunpack.c.l.b16 %v312
      %v768 = vunpack.c.l.b16 %v313
      %v769 = vunpack.c.l.b16 %v314
      %v770 = vunpack.c.l.b16 %v315
      %v771 = vunpack.c.l.b16 %v316
      %v772 = vunpack.c.l.b16 %v317
      %v773 = vunpack.c.l.b16 %v318
      %v774 = vunpack.c.l.b16 %v319
      %v775 = vunpack.c.l.b16 %v320
      %v776 = vunpack.c.l.b16 %v321
      %v777 = vunpack.c.l.b16 %v322
      %v778 = vunpack.c.l.b16 %v323
      %v779 = vunpack.c.l.b16 %v324
      %v780 = vunpack.c.l.b16 %v325
      %v781 = vunpack.c.l.b16 %v326
      %v782 = vunpack.c.l.b16 %v327
      %v783 = vunpack.c.l.b16 %v328
      %v784 = vunpack.c.l.b16 %v329
      %v785 = vunpack.c.l.b16 %v330
      %v786 = vunpack.c.l.b16 %v331
      %v787 = vunpack.c.l.b16 %v332
      %v788 = vunpack.c.l.b16 %v333
      %v789 = vunpack.c.l.b16 %v334
      %v790 = vunpack.c.l.b16 %v335
      %v791 = vunpack.c.l.b16 %v336
      %v792 = vunpack.c.l.b16 %v337
      %v793 = vunpack.c.l.b16 %v338
      %v794 = vunpack.c.l.b16 %v339
      %v795 = vunpack.c.l.b16 %v340
      %v796 = vunpack.c.l.b16 %v341
      %v797 = vunpack.c.l.b16 %v342
      %v798 = vunpack.c.l.b16 %v343
      %v799 = vunpack.c.l.b16 %v344
      %v800 = vunpack.c.l.b16 %v345
      %v801 = vunpack.c.l.b16 %v346
      %v802 = vunpack.c.l.b16 %v347
      %v803 = vunpack.c.l.b16 %v348
      %v804 = vunpack.c.l.b16 %v349
      %v805 = vunpack.c.l.b16 %v350
      %v806 = vunpack.c.l.b16 %v351
      %v807 = vunpack.c.l.b16 %v352
      %v808 = vunpack.c.l.b16 %v353
      %v809 = vunpack.c.l.b16 %v354
      %v810 = vunpack.c.l.b16 %v355
      %v811 = vunpack.c.l.b16 %v356
      %v812 = vpack.c.b16 %v749, %v748
      %v813 = vpack.c.b16 %v751, %v750
      %v814 = vpack.c.b16 %v753, %v752
      %v815 = vpack.c.b16 %v755, %v754
      %v816 = vpack.c.b16 %v757, %v756
      %v817 = vpack.c.b16 %v759, %v758
      %v818 = vpack.c.b16 %v761, %v760
      %v819 = vpack.c.b16 %v763, %v762
      %v820 = vpack.c.b16 %v765, %v764
      %v821 = vpack.c.b16 %v767, %v766
      %v822 = vpack.c.b16 %v769, %v768
      %v823 = vpack.c.b16 %v771, %v770
      %v824 = vpack.c.b16 %v773, %v772
      %v825 = vpack.c.b16 %v775, %v774
      %v826 = vpack.c.b16 %v777, %v776
      %v827 = vpack.c.b16 %v779, %v778
      %v828 = vpack.c.b16 %v781, %v780
      %v829 = vpack.c.b16 %v783, %v782
      %v830 = vpack.c.b16 %v785, %v784
      %v831 = vpack.c.b16 %v787, %v786
      %v832 = vpack.c.b16 %v789, %v788
      %v833 = vpack.c.b16 %v791, %v790
      %v834 = vpack.c.b16 %v793, %v792
      %v835 = vpack.c.b16 %v795, %v794
      %v836 = vpack.c.b16 %v797, %v796
      %v837 = vpack.c.b16 %v799, %v798
      %v838 = vpack.c.b16 %v801, %v800
      %v839 = vpack.c.b16 %v803, %v802
      %v840 = vpack.c.b16 %v805, %v804
      %v841 = vpack.c.b16 %v807, %v806
      %v842 = vpack.c.b16 %v809, %v808
      %v843 = vpack.c.b16 %v811, %v810
      %876 = vmatprep.subr.bf16.mxu0 0
      %877 = vmatpush1.bf16.msra.mxu0 %v819
      %878 = vmatprep.subr.bf16.mxu0 0
      %879 = vmatpush1.bf16.msra.mxu0 %v818
      %880 = vmatprep.subr.bf16.mxu0 0
      %881 = vmatpush1.bf16.msra.mxu0 %v817
      %882 = vmatprep.subr.bf16.mxu0 0
      %883 = vmatpush1.bf16.msra.mxu0 %v816
      %884 = vmatprep.subr.bf16.mxu0 0
      %885 = vmatpush1.bf16.msra.mxu0 %v815
      %886 = vmatprep.subr.bf16.mxu0 0
      %887 = vmatpush1.bf16.msra.mxu0 %v814
      %888 = vmatprep.subr.bf16.mxu0 0
      %889 = vmatpush1.bf16.msra.mxu0 %v813
      %890 = vmatprep.subr.bf16.mxu0 0
      %891 = vmatpush1.bf16.msra.mxu0 %v812
      %892 = vmatprep.subr.bf16.mxu0 0
      %893 = vmatpush2.bf16.msra.mxu0 %v827
      %894 = vmatprep.subr.bf16.mxu0 0
      %895 = vmatpush2.bf16.msra.mxu0 %v826
      %896 = vmatprep.subr.bf16.mxu0 0
      %897 = vmatpush2.bf16.msra.mxu0 %v825
      %898 = vmatprep.subr.bf16.mxu0 0
      %899 = vmatpush2.bf16.msra.mxu0 %v824
      %900 = vmatprep.subr.bf16.mxu0 0
      %901 = vmatpush2.bf16.msra.mxu0 %v823
      %902 = vmatprep.subr.bf16.mxu0 0
      %903 = vmatpush2.bf16.msra.mxu0 %v822
      %904 = vmatprep.subr.bf16.mxu0 0
      %905 = vmatpush2.bf16.msra.mxu0 %v821
      %906 = vmatprep.subr.bf16.mxu0 0
      %907 = vmatpush2.bf16.msra.mxu0 %v820
      %908 = vmatprep.mubr.bf16.mxu0 %v557
      %909 = vmatmul.mubr.bf16.gmra.mxu0 %v556
      %v910 = vpop.f32.mrf.mxu0
      %v911 = vadd.f32 %v362, %v910
      %v912 = vpop.f32.mrf.mxu0
      %v913 = vpop.f32.mrf.mxu0
      %v914 = vadd.f32 %v362, %v913
      %v915 = vpop.f32.mrf.mxu0
      %916 = vmatprep.mubr.bf16.mxu0 %v561
      %917 = vmatmul.mubr.bf16.gmra.mxu0 %v560
      %v918 = vpop.f32.mrf.mxu0
      %v919 = vadd.f32 %v362, %v918
      %v920 = vpop.f32.mrf.mxu0
      %v921 = vpop.f32.mrf.mxu0
      %v922 = vadd.f32 %v362, %v921
      %v923 = vpop.f32.mrf.mxu0
      %924 = vmatprep.mubr.bf16.mxu0 %v565
      %925 = vmatmul.mubr.bf16.gmra.mxu0 %v564
      %v926 = vpop.f32.mrf.mxu0
      %v927 = vadd.f32 %v362, %v926
      %v928 = vpop.f32.mrf.mxu0
      %v929 = vpop.f32.mrf.mxu0
      %v930 = vadd.f32 %v362, %v929
      %v931 = vpop.f32.mrf.mxu0
      %932 = vmatprep.mubr.bf16.mxu0 %v569
      %933 = vmatmul.mubr.bf16.gmra.mxu0 %v568
      %v934 = vpop.f32.mrf.mxu0
      %v935 = vadd.f32 %v362, %v934
      %v936 = vpop.f32.mrf.mxu0
      %v937 = vpop.f32.mrf.mxu0
      %v938 = vadd.f32 %v362, %v937
      %v939 = vpop.f32.mrf.mxu0
      %940 = vmatprep.mubr.bf16.mxu0 %v573
      %941 = vmatmul.mubr.bf16.gmra.mxu0 %v572
      %v942 = vpop.f32.mrf.mxu0
      %v943 = vadd.f32 %v362, %v942
      %v944 = vpop.f32.mrf.mxu0
      %v945 = vpop.f32.mrf.mxu0
      %v946 = vadd.f32 %v362, %v945
      %v947 = vpop.f32.mrf.mxu0
      %948 = vmatprep.mubr.bf16.mxu0 %v577
      %949 = vmatmul.mubr.bf16.gmra.mxu0 %v576
      %v950 = vpop.f32.mrf.mxu0
      %v951 = vadd.f32 %v362, %v950
      %v952 = vpop.f32.mrf.mxu0
      %v953 = vpop.f32.mrf.mxu0
      %v954 = vadd.f32 %v362, %v953
      %v955 = vpop.f32.mrf.mxu0
      %956 = vmatprep.mubr.bf16.mxu0 %v581
      %957 = vmatmul.mubr.bf16.gmra.mxu0 %v580
      %v958 = vpop.f32.mrf.mxu0
      %v959 = vadd.f32 %v362, %v958
      %v960 = vpop.f32.mrf.mxu0
      %v961 = vpop.f32.mrf.mxu0
      %v962 = vadd.f32 %v362, %v961
      %v963 = vpop.f32.mrf.mxu0
      %964 = vmatprep.mubr.bf16.mxu0 %v585
      %965 = vmatmul.mubr.bf16.gmra.mxu0 %v584
      %v966 = vpop.f32.mrf.mxu0
      %v967 = vadd.f32 %v362, %v966
      %v968 = vpop.f32.mrf.mxu0
      %v969 = vpop.f32.mrf.mxu0
      %v970 = vadd.f32 %v362, %v969
      %v971 = vpop.f32.mrf.mxu0
      %972 = vmatprep.mubr.bf16.mxu0 %v589
      %973 = vmatmul.mubr.bf16.gmra.mxu0 %v588
      %v974 = vpop.f32.mrf.mxu0
      %v975 = vadd.f32 %v362, %v974
      %v976 = vpop.f32.mrf.mxu0
      %v977 = vpop.f32.mrf.mxu0
      %v978 = vadd.f32 %v362, %v977
      %v979 = vpop.f32.mrf.mxu0
      %980 = vmatprep.mubr.bf16.mxu0 %v593
      %981 = vmatmul.mubr.bf16.gmra.mxu0 %v592
      %v982 = vpop.f32.mrf.mxu0
      %v983 = vadd.f32 %v362, %v982
      %v984 = vpop.f32.mrf.mxu0
      %v985 = vpop.f32.mrf.mxu0
      %v986 = vadd.f32 %v362, %v985
      %v987 = vpop.f32.mrf.mxu0
      %988 = vmatprep.mubr.bf16.mxu0 %v597
      %989 = vmatmul.mubr.bf16.gmra.mxu0 %v596
      %v990 = vpop.f32.mrf.mxu0
      %v991 = vadd.f32 %v362, %v990
      %v992 = vpop.f32.mrf.mxu0
      %v993 = vpop.f32.mrf.mxu0
      %v994 = vadd.f32 %v362, %v993
      %v995 = vpop.f32.mrf.mxu0
      %996 = vmatprep.mubr.bf16.mxu0 %v601
      %997 = vmatmul.mubr.bf16.gmra.mxu0 %v600
      %v998 = vpop.f32.mrf.mxu0
      %v999 = vadd.f32 %v362, %v998
      %v1000 = vpop.f32.mrf.mxu0
      %v1001 = vpop.f32.mrf.mxu0
      %v1002 = vadd.f32 %v362, %v1001
      %v1003 = vpop.f32.mrf.mxu0
      %1004 = vmatprep.mubr.bf16.mxu0 %v605
      %1005 = vmatmul.mubr.bf16.gmra.mxu0 %v604
      %v1006 = vpop.f32.mrf.mxu0
      %v1007 = vadd.f32 %v362, %v1006
      %v1008 = vpop.f32.mrf.mxu0
      %v1009 = vpop.f32.mrf.mxu0
      %v1010 = vadd.f32 %v362, %v1009
      %v1011 = vpop.f32.mrf.mxu0
      %1012 = vmatprep.mubr.bf16.mxu0 %v609
      %1013 = vmatmul.mubr.bf16.gmra.mxu0 %v608
      %v1014 = vpop.f32.mrf.mxu0
      %v1015 = vadd.f32 %v362, %v1014
      %v1016 = vpop.f32.mrf.mxu0
      %v1017 = vpop.f32.mrf.mxu0
      %v1018 = vadd.f32 %v362, %v1017
      %v1019 = vpop.f32.mrf.mxu0
      %1020 = vmatprep.mubr.bf16.mxu0 %v613
      %1021 = vmatmul.mubr.bf16.gmra.mxu0 %v612
      %v1022 = vpop.f32.mrf.mxu0
      %v1023 = vadd.f32 %v362, %v1022
      %v1024 = vpop.f32.mrf.mxu0
      %v1025 = vpop.f32.mrf.mxu0
      %v1026 = vadd.f32 %v362, %v1025
      %v1027 = vpop.f32.mrf.mxu0
      %1028 = vmatprep.mubr.bf16.mxu0 %v617
      %1029 = vmatmul.mubr.bf16.gmra.mxu0 %v616
      %v1030 = vpop.f32.mrf.mxu0
      %v1031 = vadd.f32 %v362, %v1030
      %v1032 = vpop.f32.mrf.mxu0
      %v1033 = vpop.f32.mrf.mxu0
      %v1034 = vadd.f32 %v362, %v1033
      %v1035 = vpop.f32.mrf.mxu0
      %1036 = vdwg.mxu0
      %1037 = vmatprep.subr.bf16.mxu0 0
      %1038 = vmatpush1.bf16.msra.mxu0 %v835
      %1039 = vmatprep.subr.bf16.mxu0 0
      %1040 = vmatpush1.bf16.msra.mxu0 %v834
      %1041 = vmatprep.subr.bf16.mxu0 0
      %1042 = vmatpush1.bf16.msra.mxu0 %v833
      %1043 = vmatprep.subr.bf16.mxu0 0
      %1044 = vmatpush1.bf16.msra.mxu0 %v832
      %1045 = vmatprep.subr.bf16.mxu0 0
      %1046 = vmatpush1.bf16.msra.mxu0 %v831
      %1047 = vmatprep.subr.bf16.mxu0 0
      %1048 = vmatpush1.bf16.msra.mxu0 %v830
      %1049 = vmatprep.subr.bf16.mxu0 0
      %1050 = vmatpush1.bf16.msra.mxu0 %v829
      %1051 = vmatprep.subr.bf16.mxu0 0
      %1052 = vmatpush1.bf16.msra.mxu0 %v828
      %1053 = vmatprep.subr.bf16.mxu0 0
      %1054 = vmatpush2.bf16.msra.mxu0 %v843
      %1055 = vmatprep.subr.bf16.mxu0 0
      %1056 = vmatpush2.bf16.msra.mxu0 %v842
      %1057 = vmatprep.subr.bf16.mxu0 0
      %1058 = vmatpush2.bf16.msra.mxu0 %v841
      %1059 = vmatprep.subr.bf16.mxu0 0
      %1060 = vmatpush2.bf16.msra.mxu0 %v840
      %1061 = vmatprep.subr.bf16.mxu0 0
      %1062 = vmatpush2.bf16.msra.mxu0 %v839
      %1063 = vmatprep.subr.bf16.mxu0 0
      %1064 = vmatpush2.bf16.msra.mxu0 %v838
      %1065 = vmatprep.subr.bf16.mxu0 0
      %1066 = vmatpush2.bf16.msra.mxu0 %v837
      %1067 = vmatprep.subr.bf16.mxu0 0
      %1068 = vmatpush2.bf16.msra.mxu0 %v836
      %1069 = vmatprep.mubr.bf16.mxu0 %v559
      %1070 = vmatmul.mubr.bf16.gmra.mxu0 %v558
      %v1071 = vpop.f32.mrf.mxu0
      %v1072 = vadd.f32 %v911, %v1071
      %v1073 = vpop.f32.mrf.mxu0
      %v1074 = vpop.f32.mrf.mxu0
      %v1075 = vadd.f32 %v914, %v1074
      %v1076 = vpop.f32.mrf.mxu0
      %1077 = vmatprep.mubr.bf16.mxu0 %v563
      %1078 = vmatmul.mubr.bf16.gmra.mxu0 %v562
      %v1079 = vpop.f32.mrf.mxu0
      %v1080 = vadd.f32 %v919, %v1079
      %v1081 = vpop.f32.mrf.mxu0
      %v1082 = vpop.f32.mrf.mxu0
      %v1083 = vadd.f32 %v922, %v1082
      %v1084 = vpop.f32.mrf.mxu0
      %1085 = vmatprep.mubr.bf16.mxu0 %v567
      %1086 = vmatmul.mubr.bf16.gmra.mxu0 %v566
      %v1087 = vpop.f32.mrf.mxu0
      %v1088 = vadd.f32 %v927, %v1087
      %v1089 = vpop.f32.mrf.mxu0
      %v1090 = vpop.f32.mrf.mxu0
      %v1091 = vadd.f32 %v930, %v1090
      %v1092 = vpop.f32.mrf.mxu0
      %1093 = vmatprep.mubr.bf16.mxu0 %v571
      %1094 = vmatmul.mubr.bf16.gmra.mxu0 %v570
      %v1095 = vpop.f32.mrf.mxu0
      %v1096 = vadd.f32 %v935, %v1095
      %v1097 = vpop.f32.mrf.mxu0
      %v1098 = vpop.f32.mrf.mxu0
      %v1099 = vadd.f32 %v938, %v1098
      %v1100 = vpop.f32.mrf.mxu0
      %1101 = vmatprep.mubr.bf16.mxu0 %v575
      %1102 = vmatmul.mubr.bf16.gmra.mxu0 %v574
      %v1103 = vpop.f32.mrf.mxu0
      %v1104 = vadd.f32 %v943, %v1103
      %v1105 = vpop.f32.mrf.mxu0
      %v1106 = vpop.f32.mrf.mxu0
      %v1107 = vadd.f32 %v946, %v1106
      %v1108 = vpop.f32.mrf.mxu0
      %1109 = vmatprep.mubr.bf16.mxu0 %v579
      %1110 = vmatmul.mubr.bf16.gmra.mxu0 %v578
      %v1111 = vpop.f32.mrf.mxu0
      %v1112 = vadd.f32 %v951, %v1111
      %v1113 = vpop.f32.mrf.mxu0
      %v1114 = vpop.f32.mrf.mxu0
      %v1115 = vadd.f32 %v954, %v1114
      %v1116 = vpop.f32.mrf.mxu0
      %1117 = vmatprep.mubr.bf16.mxu0 %v583
      %1118 = vmatmul.mubr.bf16.gmra.mxu0 %v582
      %v1119 = vpop.f32.mrf.mxu0
      %v1120 = vadd.f32 %v959, %v1119
      %v1121 = vpop.f32.mrf.mxu0
      %v1122 = vpop.f32.mrf.mxu0
      %v1123 = vadd.f32 %v962, %v1122
      %v1124 = vpop.f32.mrf.mxu0
      %1125 = vmatprep.mubr.bf16.mxu0 %v587
      %1126 = vmatmul.mubr.bf16.gmra.mxu0 %v586
      %v1127 = vpop.f32.mrf.mxu0
      %v1128 = vadd.f32 %v967, %v1127
      %v1129 = vpop.f32.mrf.mxu0
      %v1130 = vpop.f32.mrf.mxu0
      %v1131 = vadd.f32 %v970, %v1130
      %v1132 = vpop.f32.mrf.mxu0
      %1133 = vmatprep.mubr.bf16.mxu0 %v591
      %1134 = vmatmul.mubr.bf16.gmra.mxu0 %v590
      %v1135 = vpop.f32.mrf.mxu0
      %v1136 = vadd.f32 %v975, %v1135
      %v1137 = vpop.f32.mrf.mxu0
      %v1138 = vpop.f32.mrf.mxu0
      %v1139 = vadd.f32 %v978, %v1138
      %v1140 = vpop.f32.mrf.mxu0
      %1141 = vmatprep.mubr.bf16.mxu0 %v595
      %1142 = vmatmul.mubr.bf16.gmra.mxu0 %v594
      %v1143 = vpop.f32.mrf.mxu0
      %v1144 = vadd.f32 %v983, %v1143
      %v1145 = vpop.f32.mrf.mxu0
      %v1146 = vpop.f32.mrf.mxu0
      %v1147 = vadd.f32 %v986, %v1146
      %v1148 = vpop.f32.mrf.mxu0
      %1149 = vmatprep.mubr.bf16.mxu0 %v599
      %1150 = vmatmul.mubr.bf16.gmra.mxu0 %v598
      %v1151 = vpop.f32.mrf.mxu0
      %v1152 = vadd.f32 %v991, %v1151
      %v1153 = vpop.f32.mrf.mxu0
      %v1154 = vpop.f32.mrf.mxu0
      %v1155 = vadd.f32 %v994, %v1154
      %v1156 = vpop.f32.mrf.mxu0
      %1157 = vmatprep.mubr.bf16.mxu0 %v603
      %1158 = vmatmul.mubr.bf16.gmra.mxu0 %v602
      %v1159 = vpop.f32.mrf.mxu0
      %v1160 = vadd.f32 %v999, %v1159
      %v1161 = vpop.f32.mrf.mxu0
      %v1162 = vpop.f32.mrf.mxu0
      %v1163 = vadd.f32 %v1002, %v1162
      %v1164 = vpop.f32.mrf.mxu0
      %1165 = vmatprep.mubr.bf16.mxu0 %v607
      %1166 = vmatmul.mubr.bf16.gmra.mxu0 %v606
      %v1167 = vpop.f32.mrf.mxu0
      %v1168 = vadd.f32 %v1007, %v1167
      %v1169 = vpop.f32.mrf.mxu0
      %v1170 = vpop.f32.mrf.mxu0
      %v1171 = vadd.f32 %v1010, %v1170
      %v1172 = vpop.f32.mrf.mxu0
      %1173 = vmatprep.mubr.bf16.mxu0 %v611
      %1174 = vmatmul.mubr.bf16.gmra.mxu0 %v610
      %v1175 = vpop.f32.mrf.mxu0
      %v1176 = vadd.f32 %v1015, %v1175
      %v1177 = vpop.f32.mrf.mxu0
      %v1178 = vpop.f32.mrf.mxu0
      %v1179 = vadd.f32 %v1018, %v1178
      %v1180 = vpop.f32.mrf.mxu0
      %1181 = vmatprep.mubr.bf16.mxu0 %v615
      %1182 = vmatmul.mubr.bf16.gmra.mxu0 %v614
      %v1183 = vpop.f32.mrf.mxu0
      %v1184 = vadd.f32 %v1023, %v1183
      %v1185 = vpop.f32.mrf.mxu0
      %v1186 = vpop.f32.mrf.mxu0
      %v1187 = vadd.f32 %v1026, %v1186
      %v1188 = vpop.f32.mrf.mxu0
      %1189 = vmatprep.mubr.bf16.mxu0 %v619
      %1190 = vmatmul.mubr.bf16.gmra.mxu0 %v618
      %v1191 = vpop.f32.mrf.mxu0
      %v1192 = vadd.f32 %v1031, %v1191
      %v1193 = vpop.f32.mrf.mxu0
      %v1194 = vpop.f32.mrf.mxu0
      %v1195 = vadd.f32 %v1034, %v1194
      %v1196 = vpop.f32.mrf.mxu0
      %1197 = vdwg.mxu0
      %v1198 = vtanh.pop %v1072
      %v1199 = vtanh.pop %v1075
      %v1200 = vtanh.pop %v1080
      %v1201 = vtanh.pop %v1083
      %v1202 = vtanh.pop %v1088
      %v1203 = vtanh.pop %v1091
      %v1204 = vtanh.pop %v1096
      %v1205 = vtanh.pop %v1099
      %v1206 = vtanh.pop %v1104
      %v1207 = vtanh.pop %v1107
      %v1208 = vtanh.pop %v1112
      %v1209 = vtanh.pop %v1115
      %v1210 = vtanh.pop %v1120
      %v1211 = vtanh.pop %v1123
      %v1212 = vtanh.pop %v1128
      %v1213 = vtanh.pop %v1131
      %v1214 = vtanh.pop %v1136
      %v1215 = vtanh.pop %v1139
      %v1216 = vtanh.pop %v1144
      %v1217 = vtanh.pop %v1147
      %v1218 = vtanh.pop %v1152
      %v1219 = vtanh.pop %v1155
      %v1220 = vtanh.pop %v1160
      %v1221 = vtanh.pop %v1163
      %v1222 = vtanh.pop %v1168
      %v1223 = vtanh.pop %v1171
      %v1224 = vtanh.pop %v1176
      %v1225 = vtanh.pop %v1179
      %v1226 = vtanh.pop %v1184
      %v1227 = vtanh.pop %v1187
      %v1228 = vtanh.pop %v1192
      %v1229 = vtanh.pop %v1195
      %1230 = vst [vmem:[%s226] sm:$0xff] %v1198
      %1231 = vst [vmem:[%s226 + $0x8] sm:$0xff] %v1199
      %1232 = vst [vmem:[%s226 + $0x10] sm:$0xff] %v1200
      %1233 = vst [vmem:[%s226 + $0x18] sm:$0xff] %v1201
      %1234 = vst [vmem:[%s226 + $0x20] sm:$0xff] %v1202
      %1235 = vst [vmem:[%s226 + $0x28] sm:$0xff] %v1203
      %1236 = vst [vmem:[%s226 + $0x30] sm:$0xff] %v1204
      %1237 = vst [vmem:[%s226 + $0x38] sm:$0xff] %v1205
      %1238 = vst [vmem:[%s226 + $0x40] sm:$0xff] %v1206
      %1239 = vst [vmem:[%s226 + $0x48] sm:$0xff] %v1207
      %1240 = vst [vmem:[%s226 + $0x50] sm:$0xff] %v1208
      %1241 = vst [vmem:[%s226 + $0x58] sm:$0xff] %v1209
      %1242 = vst [vmem:[%s226 + $0x60] sm:$0xff] %v1210
      %1243 = vst [vmem:[%s226 + $0x68] sm:$0xff] %v1211
      %1244 = vst [vmem:[%s226 + $0x70] sm:$0xff] %v1212
      %1245 = vst [vmem:[%s226 + $0x78] sm:$0xff] %v1213
      %1246 = vst [vmem:[%s226 + $0x80] sm:$0xff] %v1214
      %1247 = vst [vmem:[%s226 + $0x88] sm:$0xff] %v1215
      %1248 = vst [vmem:[%s226 + $0x90] sm:$0xff] %v1216
      %1249 = vst [vmem:[%s226 + $0x98] sm:$0xff] %v1217
      %1250 = vst [vmem:[%s226 + $0xa0] sm:$0xff] %v1218
      %1251 = vst [vmem:[%s226 + $0xa8] sm:$0xff] %v1219
      %1252 = vst [vmem:[%s226 + $0xb0] sm:$0xff] %v1220
      %1253 = vst [vmem:[%s226 + $0xb8] sm:$0xff] %v1221
      %1254 = vst [vmem:[%s226 + $0xc0] sm:$0xff] %v1222
      %1255 = vst [vmem:[%s226 + $0xc8] sm:$0xff] %v1223
      %1256 = vst [vmem:[%s226 + $0xd0] sm:$0xff] %v1224
      %1257 = vst [vmem:[%s226 + $0xd8] sm:$0xff] %v1225
      %1258 = vst [vmem:[%s226 + $0xe0] sm:$0xff] %v1226
      %1259 = vst [vmem:[%s226 + $0xe8] sm:$0xff] %v1227
      %1260 = vst [vmem:[%s226 + $0xf0] sm:$0xff] %v1228
      %1261 = vst [vmem:[%s226 + $0xf8] sm:$0xff] %v1229
      %s1262 = smul.u32 32, %s18
      %p1263 = scmp.lt.s32.totalorder %s1262, 63
      %s1264 = scalar_select %p1263, %s1262, 63
      %p1265 = scmp.lt.s32.totalorder %s19, 0
      %s1266 = scalar_select %p1265, %s19, 0
      %s1267 = sadd.s32 %s1266, %s1264
      %s1268 = smul.addr %s1267, 8
      %s1269 = scalar_lea.vmem %s3, %s1268
      // Predicated region
      $region33: #{edgegan_forward.21} parent=31 // pred_check
        %p1270 = pneg %p124
      $region34: #{edgegan_forward.21} parent=31 // pred_check_branch
        %1272 = sbr.rel (%p1270) target = $region36
      $region35: #{edgegan_forward.21} parent=31 // pred_region
        %s1273 = smul.u32 32, %s18
      $region36: #{edgegan_forward.21} parent=31 // pred_fallthru
        _
    $region32: #{edgegan_forward.21} parent=5 // pred_fallthru
      _
    %p1274 = scmp.le.s32.totalorder 2, %s9
    // Predicated region
    $region37: #{edgegan_forward.21} parent=5 // pred_check
      %p1275 = pneg %p1274
    $region38: #{edgegan_forward.21} parent=5 // pred_check_branch
      %1277 = sbr.rel (%p1275) target = $region40
    $region39: #{edgegan_forward.21} parent=5 // pred_region
      %s1278 = ssub.s32 %s9, 2
      // Predicated region
      $region41: #{edgegan_forward.21} parent=39 // pred_check
        %p1279 = pneg %p130
      $region42: #{edgegan_forward.21} parent=39 // pred_check_branch
        %1281 = sbr.rel (%p1279) target = $region44
      $region43: #{edgegan_forward.21} parent=39 // pred_region
        %s1282 = smul.u32 32, %s20
        %p1283 = scmp.lt.s32.totalorder %s1282, 63
        %s1284 = scalar_select %p1283, %s1282, 63
        %p1285 = scmp.lt.s32.totalorder %s21, 0
        %s1286 = scalar_select %p1285, %s21, 0
        %s1287 = sadd.s32 %s1286, %s1284
        %s1288 = smul.addr %s1287, 8
        %s1289 = scalar_lea.vmem %s3, %s1288
      $region44: #{edgegan_forward.21} parent=39 // pred_fallthru
        _
    $region40: #{edgegan_forward.21} parent=5 // pred_fallthru
      _
  $region6: #{edgegan_forward.21} parent=0 // loop_footer
    %s13 = sadd.s32 1, %s9
  $region7: #{edgegan_forward.21} parent=0 // loop_footer_branch
    %8 = sbr.rel target = $region3
  $region8: #{edgegan_forward.21} parent=0 // loop_exit
    _

// kernel: edgegan_forward.35
$region0: #{edgegan_forward.35}
  #allocation0 [shape = 'u32[]', space=smem, size = 0x4, offset = 0x4, fixed_abs, tag = 'smem constant byte address 0x4 - core index']
  #allocation1 [shape = 'u32[144,128]{1,0:T(1,128)}', space=vmem, size = 0x12000, scoped, tag = 'internal scratch']
  %s0 = inlined_call_operand.vmem [shape: bf16[128,128], index: 0, kind: input, shape index: {}]
  %s1 = inlined_call_operand.vmem [shape: bf16[128,128], index: 1, kind: input, shape index: {}]
  %s2 = inlined_call_operand.vmem [shape: f32[1,128], index: 2, kind: input, shape index: {}]
  %s3 = inlined_call_operand.vmem [shape: f32[128,128], index: 3, kind: output, shape index: {}]
  %s4 = sld [smem:[#allocation0]]
  $region22: #{edgegan_forward.35} parent=0
    _
  %s6 = ssub.s32 1, %s4
  %s7 = scalar_select 0, %s6, %s4
  // Predicated region
  $region2: #{edgegan_forward.35} parent=0 // pred_check
    _
  $region3: #{edgegan_forward.35} parent=0 // pred_check_branch
    %9 = sbr.rel (0) target = $region5
  $region4: #{edgegan_forward.35} parent=0 // pred_region
    _
  $region5: #{edgegan_forward.35} parent=0 // pred_fallthru
    _
  // Predicated region
  $region6: #{edgegan_forward.35} parent=0 // pred_check
    _
  $region7: #{edgegan_forward.35} parent=0 // pred_check_branch
    %11 = sbr.rel (0) target = $region9
  $region8: #{edgegan_forward.35} parent=0 // pred_region
    _
  $region9: #{edgegan_forward.35} parent=0 // pred_fallthru
    _
  // Predicated region
  $region10: #{edgegan_forward.35} parent=0 // pred_check
    _
  $region11: #{edgegan_forward.35} parent=0 // pred_check_branch
    %13 = sbr.rel (0) target = $region13
  $region12: #{edgegan_forward.35} parent=0 // pred_region
    _
  $region13: #{edgegan_forward.35} parent=0 // pred_fallthru
    _
  %v15 = vld [vmem:[%s0] sm:$0xf]
  %v16 = vld [vmem:[%s0 + $0x4] sm:$0xf]
  %v17 = vld [vmem:[%s0 + $0x8] sm:$0xf]
  %v18 = vld [vmem:[%s0 + $0xc] sm:$0xf]
  %v19 = vld [vmem:[%s0 + $0x10] sm:$0xf]
  %v20 = vld [vmem:[%s0 + $0x14] sm:$0xf]
  %v21 = vld [vmem:[%s0 + $0x18] sm:$0xf]
  %v22 = vld [vmem:[%s0 + $0x1c] sm:$0xf]
  %v23 = vld [vmem:[%s0 + $0x20] sm:$0xf]
  %v24 = vld [vmem:[%s0 + $0x24] sm:$0xf]
  %v25 = vld [vmem:[%s0 + $0x28] sm:$0xf]
  %v26 = vld [vmem:[%s0 + $0x2c] sm:$0xf]
  %v27 = vld [vmem:[%s0 + $0x30] sm:$0xf]
  %v28 = vld [vmem:[%s0 + $0x34] sm:$0xf]
  %v29 = vld [vmem:[%s0 + $0x38] sm:$0xf]
  %v30 = vld [vmem:[%s0 + $0x3c] sm:$0xf]
  %v31 = vld [vmem:[%s1] sm:$0xf]
  %v32 = vld [vmem:[%s1 + $0x4] sm:$0xf]
  %v33 = vld [vmem:[%s1 + $0x8] sm:$0xf]
  %v34 = vld [vmem:[%s1 + $0xc] sm:$0xf]
  %v35 = vld [vmem:[%s1 + $0x10] sm:$0xf]
  %v36 = vld [vmem:[%s1 + $0x14] sm:$0xf]
  %v37 = vld [vmem:[%s1 + $0x18] sm:$0xf]
  %v38 = vld [vmem:[%s1 + $0x1c] sm:$0xf]
  %v39 = vld [vmem:[%s1 + $0x20] sm:$0xf]
  %v40 = vld [vmem:[%s1 + $0x24] sm:$0xf]
  %v41 = vld [vmem:[%s1 + $0x28] sm:$0xf]
  %v42 = vld [vmem:[%s1 + $0x2c] sm:$0xf]
  %v43 = vld [vmem:[%s1 + $0x30] sm:$0xf]
  %v44 = vld [vmem:[%s1 + $0x34] sm:$0xf]
  %v45 = vld [vmem:[%s1 + $0x38] sm:$0xf]
  %v46 = vld [vmem:[%s1 + $0x3c] sm:$0xf]
  %v47 = vld [vmem:[%s2] sm:$0x1]
  %v49 = vlaneseq
  %v50 = vshrl.u32 %v49, 7
  %v51 = vsub.s32 0, %v50
  %v52 = vrot.slane %v47, %v51
  %v70 = vunpack.c.l.b16 %v15
  %v71 = vunpack.c.l.b16 %v16
  %v72 = vunpack.c.l.b16 %v17
  %v73 = vunpack.c.l.b16 %v18
  %v74 = vunpack.c.l.b16 %v19
  %v75 = vunpack.c.l.b16 %v20
  %v76 = vunpack.c.l.b16 %v21
  %v77 = vunpack.c.l.b16 %v22
  %v78 = vunpack.c.l.b16 %v23
  %v79 = vunpack.c.l.b16 %v24
  %v80 = vunpack.c.l.b16 %v25
  %v81 = vunpack.c.l.b16 %v26
  %v82 = vunpack.c.l.b16 %v27
  %v83 = vunpack.c.l.b16 %v28
  %v84 = vunpack.c.l.b16 %v29
  %v85 = vunpack.c.l.b16 %v30
  %v86 = vpack.c.b16 %v71, %v70
  %v87 = vpack.c.b16 %v73, %v72
  %v88 = vpack.c.b16 %v75, %v74
  %v89 = vpack.c.b16 %v77, %v76
  %v90 = vpack.c.b16 %v79, %v78
  %v91 = vpack.c.b16 %v81, %v80
  %v92 = vpack.c.b16 %v83, %v82
  %v93 = vpack.c.b16 %v85, %v84
  %v118 = vunpack.c.l.b16 %v31
  %v119 = vunpack.c.l.b16 %v32
  %v120 = vunpack.c.l.b16 %v33
  %v121 = vunpack.c.l.b16 %v34
  %v122 = vunpack.c.l.b16 %v35
  %v123 = vunpack.c.l.b16 %v36
  %v124 = vunpack.c.l.b16 %v37
  %v125 = vunpack.c.l.b16 %v38
  %v126 = vunpack.c.l.b16 %v39
  %v127 = vunpack.c.l.b16 %v40
  %v128 = vunpack.c.l.b16 %v41
  %v129 = vunpack.c.l.b16 %v42
  %v130 = vunpack.c.l.b16 %v43
  %v131 = vunpack.c.l.b16 %v44
  %v132 = vunpack.c.l.b16 %v45
  %v133 = vunpack.c.l.b16 %v46
  %v134 = vpack.c.b16 %v119, %v118
  %v135 = vpack.c.b16 %v121, %v120
  %v136 = vpack.c.b16 %v123, %v122
  %v137 = vpack.c.b16 %v125, %v124
  %v138 = vpack.c.b16 %v127, %v126
  %v139 = vpack.c.b16 %v129, %v128
  %v140 = vpack.c.b16 %v131, %v130
  %v141 = vpack.c.b16 %v133, %v132
  %150 = vmatprep.subr.bf16.mxu0 0
  %151 = vmatpush1.bf16.msra.mxu0 %v141
  %152 = vmatprep.subr.bf16.mxu0 0
  %153 = vmatpush1.bf16.msra.mxu0 %v140
  %154 = vmatprep.subr.bf16.mxu0 0
  %155 = vmatpush1.bf16.msra.mxu0 %v139
  %156 = vmatprep.subr.bf16.mxu0 0
  %157 = vmatpush1.bf16.msra.mxu0 %v138
  %158 = vmatprep.subr.bf16.mxu0 0
  %159 = vmatpush1.bf16.msra.mxu0 %v137
  %160 = vmatprep.subr.bf16.mxu0 0
  %161 = vmatpush1.bf16.msra.mxu0 %v136
  %162 = vmatprep.subr.bf16.mxu0 0
  %163 = vmatpush1.bf16.msra.mxu0 %v135
  %164 = vmatprep.subr.bf16.mxu0 0
  %165 = vmatpush1.bf16.msra.mxu0 %v134
  %166 = vmatprep.subr.bf16.mxu0 0
  %167 = vmatpush2.bf16.msra.mxu0 0
  %168 = vmatprep.subr.bf16.mxu0 0
  %169 = vmatpush2.bf16.msra.mxu0 0
  %170 = vmatprep.subr.bf16.mxu0 0
  %171 = vmatpush2.bf16.msra.mxu0 0
  %172 = vmatprep.subr.bf16.mxu0 0
  %173 = vmatpush2.bf16.msra.mxu0 0
  %174 = vmatprep.subr.bf16.mxu0 0
  %175 = vmatpush2.bf16.msra.mxu0 0
  %176 = vmatprep.subr.bf16.mxu0 0
  %177 = vmatpush2.bf16.msra.mxu0 0
  %178 = vmatprep.subr.bf16.mxu0 0
  %179 = vmatpush2.bf16.msra.mxu0 0
  %180 = vmatprep.subr.bf16.mxu0 0
  %181 = vmatpush2.bf16.msra.mxu0 0
  %182 = vmatprep.mubr.bf16.mxu0 0
  %183 = vmatmul.mubr.bf16.gmra.mxu0 %v86
  %v184 = vpop.f32.mrf.mxu0
  %v185 = vadd.f32 %v52, %v184
  %v186 = vpop.f32.mrf.mxu0
  %v187 = vpop.f32.mrf.mxu0
  %v188 = vadd.f32 %v52, %v187
  %v189 = vpop.f32.mrf.mxu0
  %190 = vmatprep.mubr.bf16.mxu0 0
  %191 = vmatmul.mubr.bf16.gmra.mxu0 %v87
  %v192 = vpop.f32.mrf.mxu0
  %v193 = vadd.f32 %v52, %v192
  %v194 = vpop.f32.mrf.mxu0
  %v195 = vpop.f32.mrf.mxu0
  %v196 = vadd.f32 %v52, %v195
  %v197 = vpop.f32.mrf.mxu0
  %198 = vmatprep.mubr.bf16.mxu0 0
  %199 = vmatmul.mubr.bf16.gmra.mxu0 %v88
  %v200 = vpop.f32.mrf.mxu0
  %v201 = vadd.f32 %v52, %v200
  %v202 = vpop.f32.mrf.mxu0
  %v203 = vpop.f32.mrf.mxu0
  %v204 = vadd.f32 %v52, %v203
  %v205 = vpop.f32.mrf.mxu0
  %206 = vmatprep.mubr.bf16.mxu0 0
  %207 = vmatmul.mubr.bf16.gmra.mxu0 %v89
  %v208 = vpop.f32.mrf.mxu0
  %v209 = vadd.f32 %v52, %v208
  %v210 = vpop.f32.mrf.mxu0
  %v211 = vpop.f32.mrf.mxu0
  %v212 = vadd.f32 %v52, %v211
  %v213 = vpop.f32.mrf.mxu0
  %214 = vmatprep.mubr.bf16.mxu0 0
  %215 = vmatmul.mubr.bf16.gmra.mxu0 %v90
  %v216 = vpop.f32.mrf.mxu0
  %v217 = vadd.f32 %v52, %v216
  %v218 = vpop.f32.mrf.mxu0
  %v219 = vpop.f32.mrf.mxu0
  %v220 = vadd.f32 %v52, %v219
  %v221 = vpop.f32.mrf.mxu0
  %222 = vmatprep.mubr.bf16.mxu0 0
  %223 = vmatmul.mubr.bf16.gmra.mxu0 %v91
  %v224 = vpop.f32.mrf.mxu0
  %v225 = vadd.f32 %v52, %v224
  %v226 = vpop.f32.mrf.mxu0
  %v227 = vpop.f32.mrf.mxu0
  %v228 = vadd.f32 %v52, %v227
  %v229 = vpop.f32.mrf.mxu0
  %230 = vmatprep.mubr.bf16.mxu0 0
  %231 = vmatmul.mubr.bf16.gmra.mxu0 %v92
  %v232 = vpop.f32.mrf.mxu0
  %v233 = vadd.f32 %v52, %v232
  %v234 = vpop.f32.mrf.mxu0
  %v235 = vpop.f32.mrf.mxu0
  %v236 = vadd.f32 %v52, %v235
  %v237 = vpop.f32.mrf.mxu0
  %238 = vmatprep.mubr.bf16.mxu0 0
  %239 = vmatmul.mubr.bf16.gmra.mxu0 %v93
  %v240 = vpop.f32.mrf.mxu0
  %v241 = vadd.f32 %v52, %v240
  %v242 = vpop.f32.mrf.mxu0
  %v243 = vpop.f32.mrf.mxu0
  %v244 = vadd.f32 %v52, %v243
  %v245 = vpop.f32.mrf.mxu0
  %246 = vdwg.mxu0
  %vm247 = vcmp.gt.f32.partialorder %v185, 0.0
  %vm248 = vcmp.gt.f32.partialorder %v188, 0.0
  %vm249 = vcmp.gt.f32.partialorder %v193, 0.0
  %vm250 = vcmp.gt.f32.partialorder %v196, 0.0
  %vm251 = vcmp.gt.f32.partialorder %v201, 0.0
  %vm252 = vcmp.gt.f32.partialorder %v204, 0.0
  %vm253 = vcmp.gt.f32.partialorder %v209, 0.0
  %vm254 = vcmp.gt.f32.partialorder %v212, 0.0
  %vm255 = vcmp.gt.f32.partialorder %v217, 0.0
  %vm256 = vcmp.gt.f32.partialorder %v220, 0.0
  %vm257 = vcmp.gt.f32.partialorder %v225, 0.0
  %vm258 = vcmp.gt.f32.partialorder %v228, 0.0
  %vm259 = vcmp.gt.f32.partialorder %v233, 0.0
  %vm260 = vcmp.gt.f32.partialorder %v236, 0.0
  %vm261 = vcmp.gt.f32.partialorder %v241, 0.0
  %vm262 = vcmp.gt.f32.partialorder %v244, 0.0
  %v263 = vmul.f32 %v185, 0.2
  %v264 = vmul.f32 %v188, 0.2
  %v265 = vmul.f32 %v193, 0.2
  %v266 = vmul.f32 %v196, 0.2
  %v267 = vmul.f32 %v201, 0.2
  %v268 = vmul.f32 %v204, 0.2
  %v269 = vmul.f32 %v209, 0.2
  %v270 = vmul.f32 %v212, 0.2
  %v271 = vmul.f32 %v217, 0.2
  %v272 = vmul.f32 %v220, 0.2
  %v273 = vmul.f32 %v225, 0.2
  %v274 = vmul.f32 %v228, 0.2
  %v275 = vmul.f32 %v233, 0.2
  %v276 = vmul.f32 %v236, 0.2
  %v277 = vmul.f32 %v241, 0.2
  %v278 = vmul.f32 %v244, 0.2
  %v279 = vsel %vm247, %v185, %v263
  %v280 = vsel %vm248, %v188, %v264
  %v281 = vsel %vm249, %v193, %v265
  %v282 = vsel %vm250, %v196, %v266
  %v283 = vsel %vm251, %v201, %v267
  %v284 = vsel %vm252, %v204, %v268
  %v285 = vsel %vm253, %v209, %v269
  %v286 = vsel %vm254, %v212, %v270
  %v287 = vsel %vm255, %v217, %v271
  %v288 = vsel %vm256, %v220, %v272
  %v289 = vsel %vm257, %v225, %v273
  %v290 = vsel %vm258, %v228, %v274
  %v291 = vsel %vm259, %v233, %v275
  %v292 = vsel %vm260, %v236, %v276
  %v293 = vsel %vm261, %v241, %v277
  %v294 = vsel %vm262, %v244, %v278
  %295 = vst [vmem:[%s3] sm:$0xff] %v279
  %296 = vst [vmem:[%s3 + $0x8] sm:$0xff] %v280
  %297 = vst [vmem:[%s3 + $0x10] sm:$0xff] %v281
  %298 = vst [vmem:[%s3 + $0x18] sm:$0xff] %v282
  %299 = vst [vmem:[%s3 + $0x20] sm:$0xff] %v283
  %300 = vst [vmem:[%s3 + $0x28] sm:$0xff] %v284
  %301 = vst [vmem:[%s3 + $0x30] sm:$0xff] %v285
  %302 = vst [vmem:[%s3 + $0x38] sm:$0xff] %v286
  %303 = vst [vmem:[%s3 + $0x40] sm:$0xff] %v287
  %304 = vst [vmem:[%s3 + $0x48] sm:$0xff] %v288
  %305 = vst [vmem:[%s3 + $0x50] sm:$0xff] %v289
  %306 = vst [vmem:[%s3 + $0x58] sm:$0xff] %v290
  %307 = vst [vmem:[%s3 + $0x60] sm:$0xff] %v291
  %308 = vst [vmem:[%s3 + $0x68] sm:$0xff] %v292
  %309 = vst [vmem:[%s3 + $0x70] sm:$0xff] %v293
  %310 = vst [vmem:[%s3 + $0x78] sm:$0xff] %v294
  // Predicated region
  $region14: #{edgegan_forward.35} parent=0 // pred_check
    _
  $region15: #{edgegan_forward.35} parent=0 // pred_check_branch
    %312 = sbr.rel (0) target = $region17
  $region16: #{edgegan_forward.35} parent=0 // pred_region
    _
  $region17: #{edgegan_forward.35} parent=0 // pred_fallthru
    _
  // Predicated region
  $region18: #{edgegan_forward.35} parent=0 // pred_check
    _
  $region19: #{edgegan_forward.35} parent=0 // pred_check_branch
    %314 = sbr.rel (0) target = $region21
  $region20: #{edgegan_forward.35} parent=0 // pred_region
    _
  $region21: #{edgegan_forward.35} parent=0 // pred_fallthru
    _

// kernel: edgegan_forward.36
$region0: #{edgegan_forward.36}
  #allocation0 [shape = 'u32[]', space=smem, size = 0x4, offset = 0x4, fixed_abs, tag = 'smem constant byte address 0x4 - core index']
  #allocation1 [shape = 'u32[144,128]{1,0:T(1,128)}', space=vmem, size = 0x12000, scoped, tag = 'internal scratch']
  %s0 = inlined_call_operand.vmem [shape: bf16[32,128], index: 0, kind: input, shape index: {}]
  %s1 = inlined_call_operand.vmem [shape: bf16[128,128], index: 1, kind: input, shape index: {}]
  %s2 = inlined_call_operand.vmem [shape: f32[1,128], index: 2, kind: input, shape index: {}]
  %s3 = inlined_call_operand.vmem [shape: f32[32,128], index: 3, kind: output, shape index: {}]
  %s4 = sld [smem:[#allocation0]]
  $region22: #{edgegan_forward.36} parent=0
    _
  %s6 = ssub.s32 1, %s4
  %s7 = scalar_select 0, %s6, %s4
  // Predicated region
  $region2: #{edgegan_forward.36} parent=0 // pred_check
    _
  $region3: #{edgegan_forward.36} parent=0 // pred_check_branch
    %9 = sbr.rel (0) target = $region5
  $region4: #{edgegan_forward.36} parent=0 // pred_region
    _
  $region5: #{edgegan_forward.36} parent=0 // pred_fallthru
    _
  // Predicated region
  $region6: #{edgegan_forward.36} parent=0 // pred_check
    _
  $region7: #{edgegan_forward.36} parent=0 // pred_check_branch
    %11 = sbr.rel (0) target = $region9
  $region8: #{edgegan_forward.36} parent=0 // pred_region
    _
  $region9: #{edgegan_forward.36} parent=0 // pred_fallthru
    _
  // Predicated region
  $region10: #{edgegan_forward.36} parent=0 // pred_check
    _
  $region11: #{edgegan_forward.36} parent=0 // pred_check_branch
    %13 = sbr.rel (0) target = $region13
  $region12: #{edgegan_forward.36} parent=0 // pred_region
    _
  $region13: #{edgegan_forward.36} parent=0 // pred_fallthru
    _
  %v15 = vld [vmem:[%s0] sm:$0xf]
  %v16 = vld [vmem:[%s0 + $0x4] sm:$0xf]
  %v17 = vld [vmem:[%s0 + $0x8] sm:$0xf]
  %v18 = vld [vmem:[%s0 + $0xc] sm:$0xf]
  %v19 = vld [vmem:[%s1] sm:$0xf]
  %v20 = vld [vmem:[%s1 + $0x4] sm:$0xf]
  %v21 = vld [vmem:[%s1 + $0x8] sm:$0xf]
  %v22 = vld [vmem:[%s1 + $0xc] sm:$0xf]
  %v23 = vld [vmem:[%s1 + $0x10] sm:$0xf]
  %v24 = vld [vmem:[%s1 + $0x14] sm:$0xf]
  %v25 = vld [vmem:[%s1 + $0x18] sm:$0xf]
  %v26 = vld [vmem:[%s1 + $0x1c] sm:$0xf]
  %v27 = vld [vmem:[%s1 + $0x20] sm:$0xf]
  %v28 = vld [vmem:[%s1 + $0x24] sm:$0xf]
  %v29 = vld [vmem:[%s1 + $0x28] sm:$0xf]
  %v30 = vld [vmem:[%s1 + $0x2c] sm:$0xf]
  %v31 = vld [vmem:[%s1 + $0x30] sm:$0xf]
  %v32 = vld [vmem:[%s1 + $0x34] sm:$0xf]
  %v33 = vld [vmem:[%s1 + $0x38] sm:$0xf]
  %v34 = vld [vmem:[%s1 + $0x3c] sm:$0xf]
  %v35 = vld [vmem:[%s2] sm:$0x1]
  %v37 = vlaneseq
  %v38 = vshrl.u32 %v37, 7
  %v39 = vsub.s32 0, %v38
  %v40 = vrot.slane %v35, %v39
  %v46 = vunpack.c.l.b16 %v15
  %v47 = vunpack.c.l.b16 %v16
  %v48 = vunpack.c.l.b16 %v17
  %v49 = vunpack.c.l.b16 %v18
  %v50 = vpack.c.b16 %v47, %v46
  %v51 = vpack.c.b16 %v49, %v48
  %v70 = vunpack.c.l.b16 %v19
  %v71 = vunpack.c.l.b16 %v20
  %v72 = vunpack.c.l.b16 %v21
  %v73 = vunpack.c.l.b16 %v22
  %v74 = vunpack.c.l.b16 %v23
  %v75 = vunpack.c.l.b16 %v24
  %v76 = vunpack.c.l.b16 %v25
  %v77 = vunpack.c.l.b16 %v26
  %v78 = vunpack.c.l.b16 %v27
  %v79 = vunpack.c.l.b16 %v28
  %v80 = vunpack.c.l.b16 %v29
  %v81 = vunpack.c.l.b16 %v30
  %v82 = vunpack.c.l.b16 %v31
  %v83 = vunpack.c.l.b16 %v32
  %v84 = vunpack.c.l.b16 %v33
  %v85 = vunpack.c.l.b16 %v34
  %v86 = vpack.c.b16 %v71, %v70
  %v87 = vpack.c.b16 %v73, %v72
  %v88 = vpack.c.b16 %v75, %v74
  %v89 = vpack.c.b16 %v77, %v76
  %v90 = vpack.c.b16 %v79, %v78
  %v91 = vpack.c.b16 %v81, %v80
  %v92 = vpack.c.b16 %v83, %v82
  %v93 = vpack.c.b16 %v85, %v84
  %102 = vmatprep.subr.bf16.mxu0 0
  %103 = vmatpush1.bf16.msra.mxu0 %v93
  %104 = vmatprep.subr.bf16.mxu0 0
  %105 = vmatpush1.bf16.msra.mxu0 %v92
  %106 = vmatprep.subr.bf16.mxu0 0
  %107 = vmatpush1.bf16.msra.mxu0 %v91
  %108 = vmatprep.subr.bf16.mxu0 0
  %109 = vmatpush1.bf16.msra.mxu0 %v90
  %110 = vmatprep.subr.bf16.mxu0 0
  %111 = vmatpush1.bf16.msra.mxu0 %v89
  %112 = vmatprep.subr.bf16.mxu0 0
  %113 = vmatpush1.bf16.msra.mxu0 %v88
  %114 = vmatprep.subr.bf16.mxu0 0
  %115 = vmatpush1.bf16.msra.mxu0 %v87
  %116 = vmatprep.subr.bf16.mxu0 0
  %117 = vmatpush1.bf16.msra.mxu0 %v86
  %118 = vmatprep.subr.bf16.mxu0 0
  %119 = vmatpush2.bf16.msra.mxu0 0
  %120 = vmatprep.subr.bf16.mxu0 0
  %121 = vmatpush2.bf16.msra.mxu0 0
  %122 = vmatprep.subr.bf16.mxu0 0
  %123 = vmatpush2.bf16.msra.mxu0 0
  %124 = vmatprep.subr.bf16.mxu0 0
  %125 = vmatpush2.bf16.msra.mxu0 0
  %126 = vmatprep.subr.bf16.mxu0 0
  %127 = vmatpush2.bf16.msra.mxu0 0
  %128 = vmatprep.subr.bf16.mxu0 0
  %129 = vmatpush2.bf16.msra.mxu0 0
  %130 = vmatprep.subr.bf16.mxu0 0
  %131 = vmatpush2.bf16.msra.mxu0 0
  %132 = vmatprep.subr.bf16.mxu0 0
  %133 = vmatpush2.bf16.msra.mxu0 0
  %134 = vmatprep.mubr.bf16.mxu0 0
  %135 = vmatmul.mubr.bf16.gmra.mxu0 %v50
  %v136 = vpop.f32.mrf.mxu0
  %v137 = vadd.f32 %v40, %v136
  %v138 = vpop.f32.mrf.mxu0
  %v139 = vpop.f32.mrf.mxu0
  %v140 = vadd.f32 %v40, %v139
  %v141 = vpop.f32.mrf.mxu0
  %142 = vmatprep.mubr.bf16.mxu0 0
  %143 = vmatmul.mubr.bf16.gmra.mxu0 %v51
  %v144 = vpop.f32.mrf.mxu0
  %v145 = vadd.f32 %v40, %v144
  %v146 = vpop.f32.mrf.mxu0
  %v147 = vpop.f32.mrf.mxu0
  %v148 = vadd.f32 %v40, %v147
  %v149 = vpop.f32.mrf.mxu0
  %150 = vdwg.mxu0
  %vm151 = vcmp.gt.f32.partialorder %v137, 0.0
  %vm152 = vcmp.gt.f32.partialorder %v140, 0.0
  %vm153 = vcmp.gt.f32.partialorder %v145, 0.0
  %vm154 = vcmp.gt.f32.partialorder %v148, 0.0
  %v155 = vmul.f32 %v137, 0.2
  %v156 = vmul.f32 %v140, 0.2
  %v157 = vmul.f32 %v145, 0.2
  %v158 = vmul.f32 %v148, 0.2
  %v159 = vsel %vm151, %v137, %v155
  %v160 = vsel %vm152, %v140, %v156
  %v161 = vsel %vm153, %v145, %v157
  %v162 = vsel %vm154, %v148, %v158
  %163 = vst [vmem:[%s3] sm:$0xff] %v159
  %164 = vst [vmem:[%s3 + $0x8] sm:$0xff] %v160
  %165 = vst [vmem:[%s3 + $0x10] sm:$0xff] %v161
  %166 = vst [vmem:[%s3 + $0x18] sm:$0xff] %v162
  // Predicated region
  $region14: #{edgegan_forward.36} parent=0 // pred_check
    _
  $region15: #{edgegan_forward.36} parent=0 // pred_check_branch
    %168 = sbr.rel (0) target = $region17
  $region16: #{edgegan_forward.36} parent=0 // pred_region
    _
  $region17: #{edgegan_forward.36} parent=0 // pred_fallthru
    _
  // Predicated region
  $region18: #{edgegan_forward.36} parent=0 // pred_check
    _
  $region19: #{edgegan_forward.36} parent=0 // pred_check_branch
    %170 = sbr.rel (0) target = $region21
  $region20: #{edgegan_forward.36} parent=0 // pred_region
    _
  $region21: #{edgegan_forward.36} parent=0 // pred_fallthru
    _

// kernel: edgegan_forward.37
$region0: #{edgegan_forward.37}
  #allocation0 [shape = 'u32[]', space=smem, size = 0x4, offset = 0x4, fixed_abs, tag = 'smem constant byte address 0x4 - core index']
  #allocation1 [shape = 'u32[144,128]{1,0:T(1,128)}', space=vmem, size = 0x12000, scoped, tag = 'internal scratch']
  %s0 = inlined_call_operand.vmem [shape: bf16[8,256], index: 0, kind: input, shape index: {}]
  %s1 = inlined_call_operand.vmem [shape: bf16[256,128], index: 1, kind: input, shape index: {}]
  %s2 = inlined_call_operand.vmem [shape: f32[1,128], index: 2, kind: input, shape index: {}]
  %s3 = inlined_call_operand.vmem [shape: f32[8,128], index: 3, kind: output, shape index: {}]
  %s4 = sld [smem:[#allocation0]]
  $region22: #{edgegan_forward.37} parent=0
    _
  %s6 = ssub.s32 1, %s4
  %s7 = scalar_select 0, %s6, %s4
  // Predicated region
  $region2: #{edgegan_forward.37} parent=0 // pred_check
    _
  $region3: #{edgegan_forward.37} parent=0 // pred_check_branch
    %9 = sbr.rel (0) target = $region5
  $region4: #{edgegan_forward.37} parent=0 // pred_region
    _
  $region5: #{edgegan_forward.37} parent=0 // pred_fallthru
    _
  // Predicated region
  $region6: #{edgegan_forward.37} parent=0 // pred_check
    _
  $region7: #{edgegan_forward.37} parent=0 // pred_check_branch
    %11 = sbr.rel (0) target = $region9
  $region8: #{edgegan_forward.37} parent=0 // pred_region
    _
  $region9: #{edgegan_forward.37} parent=0 // pred_fallthru
    _
  // Predicated region
  $region10: #{edgegan_forward.37} parent=0 // pred_check
    _
  $region11: #{edgegan_forward.37} parent=0 // pred_check_branch
    %13 = sbr.rel (0) target = $region13
  $region12: #{edgegan_forward.37} parent=0 // pred_region
    _
  $region13: #{edgegan_forward.37} parent=0 // pred_fallthru
    _
  %v15 = vld [vmem:[%s0] sm:$0xff]
  %v16 = vld [vmem:[%s1] sm:$0xf]
  %v17 = vld [vmem:[%s1 + $0x4] sm:$0xf]
  %v18 = vld [vmem:[%s1 + $0x8] sm:$0xf]
  %v19 = vld [vmem:[%s1 + $0xc] sm:$0xf]
  %v20 = vld [vmem:[%s1 + $0x10] sm:$0xf]
  %v21 = vld [vmem:[%s1 + $0x14] sm:$0xf]
  %v22 = vld [vmem:[%s1 + $0x18] sm:$0xf]
  %v23 = vld [vmem:[%s1 + $0x1c] sm:$0xf]
  %v24 = vld [vmem:[%s1 + $0x20] sm:$0xf]
  %v25 = vld [vmem:[%s1 + $0x24] sm:$0xf]
  %v26 = vld [vmem:[%s1 + $0x28] sm:$0xf]
  %v27 = vld [vmem:[%s1 + $0x2c] sm:$0xf]
  %v28 = vld [vmem:[%s1 + $0x30] sm:$0xf]
  %v29 = vld [vmem:[%s1 + $0x34] sm:$0xf]
  %v30 = vld [vmem:[%s1 + $0x38] sm:$0xf]
  %v31 = vld [vmem:[%s1 + $0x3c] sm:$0xf]
  %v32 = vld [vmem:[%s1 + $0x40] sm:$0xf]
  %v33 = vld [vmem:[%s1 + $0x44] sm:$0xf]
  %v34 = vld [vmem:[%s1 + $0x48] sm:$0xf]
  %v35 = vld [vmem:[%s1 + $0x4c] sm:$0xf]
  %v36 = vld [vmem:[%s1 + $0x50] sm:$0xf]
  %v37 = vld [vmem:[%s1 + $0x54] sm:$0xf]
  %v38 = vld [vmem:[%s1 + $0x58] sm:$0xf]
  %v39 = vld [vmem:[%s1 + $0x5c] sm:$0xf]
  %v40 = vld [vmem:[%s1 + $0x60] sm:$0xf]
  %v41 = vld [vmem:[%s1 + $0x64] sm:$0xf]
  %v42 = vld [vmem:[%s1 + $0x68] sm:$0xf]
  %v43 = vld [vmem:[%s1 + $0x6c] sm:$0xf]
  %v44 = vld [vmem:[%s1 + $0x70] sm:$0xf]
  %v45 = vld [vmem:[%s1 + $0x74] sm:$0xf]
  %v46 = vld [vmem:[%s1 + $0x78] sm:$0xf]
  %v47 = vld [vmem:[%s1 + $0x7c] sm:$0xf]
  %v48 = vld [vmem:[%s2] sm:$0x1]
  %v50 = vlaneseq
  %v51 = vshrl.u32 %v50, 7
  %v52 = vsub.s32 0, %v51
  %v53 = vrot.slane %v48, %v52
  %v56 = vunpack.c.l.b16 %v15
  %v57 = vunpack.c.h.b16 %v15
  %v58 = vpack.c.b16 %v56, %v56
  %v59 = vpack.c.b16 %v57, %v57
  %v94 = vunpack.c.l.b16 %v16
  %v95 = vunpack.c.l.b16 %v17
  %v96 = vunpack.c.l.b16 %v18
  %v97 = vunpack.c.l.b16 %v19
  %v98 = vunpack.c.l.b16 %v20
  %v99 = vunpack.c.l.b16 %v21
  %v100 = vunpack.c.l.b16 %v22
  %v101 = vunpack.c.l.b16 %v23
  %v102 = vunpack.c.l.b16 %v24
  %v103 = vunpack.c.l.b16 %v25
  %v104 = vunpack.c.l.b16 %v26
  %v105 = vunpack.c.l.b16 %v27
  %v106 = vunpack.c.l.b16 %v28
  %v107 = vunpack.c.l.b16 %v29
  %v108 = vunpack.c.l.b16 %v30
  %v109 = vunpack.c.l.b16 %v31
  %v110 = vunpack.c.l.b16 %v32
  %v111 = vunpack.c.l.b16 %v33
  %v112 = vunpack.c.l.b16 %v34
  %v113 = vunpack.c.l.b16 %v35
  %v114 = vunpack.c.l.b16 %v36
  %v115 = vunpack.c.l.b16 %v37
  %v116 = vunpack.c.l.b16 %v38
  %v117 = vunpack.c.l.b16 %v39
  %v118 = vunpack.c.l.b16 %v40
  %v119 = vunpack.c.l.b16 %v41
  %v120 = vunpack.c.l.b16 %v42
  %v121 = vunpack.c.l.b16 %v43
  %v122 = vunpack.c.l.b16 %v44
  %v123 = vunpack.c.l.b16 %v45
  %v124 = vunpack.c.l.b16 %v46
  %v125 = vunpack.c.l.b16 %v47
  %v126 = vpack.c.b16 %v95, %v94
  %v127 = vpack.c.b16 %v97, %v96
  %v128 = vpack.c.b16 %v99, %v98
  %v129 = vpack.c.b16 %v101, %v100
  %v130 = vpack.c.b16 %v103, %v102
  %v131 = vpack.c.b16 %v105, %v104
  %v132 = vpack.c.b16 %v107, %v106
  %v133 = vpack.c.b16 %v109, %v108
  %v134 = vpack.c.b16 %v111, %v110
  %v135 = vpack.c.b16 %v113, %v112
  %v136 = vpack.c.b16 %v115, %v114
  %v137 = vpack.c.b16 %v117, %v116
  %v138 = vpack.c.b16 %v119, %v118
  %v139 = vpack.c.b16 %v121, %v120
  %v140 = vpack.c.b16 %v123, %v122
  %v141 = vpack.c.b16 %v125, %v124
  %158 = vmatprep.subr.bf16.mxu0 0
  %159 = vmatpush1.bf16.msra.mxu0 %v133
  %160 = vmatprep.subr.bf16.mxu0 0
  %161 = vmatpush1.bf16.msra.mxu0 %v132
  %162 = vmatprep.subr.bf16.mxu0 0
  %163 = vmatpush1.bf16.msra.mxu0 %v131
  %164 = vmatprep.subr.bf16.mxu0 0
  %165 = vmatpush1.bf16.msra.mxu0 %v130
  %166 = vmatprep.subr.bf16.mxu0 0
  %167 = vmatpush1.bf16.msra.mxu0 %v129
  %168 = vmatprep.subr.bf16.mxu0 0
  %169 = vmatpush1.bf16.msra.mxu0 %v128
  %170 = vmatprep.subr.bf16.mxu0 0
  %171 = vmatpush1.bf16.msra.mxu0 %v127
  %172 = vmatprep.subr.bf16.mxu0 0
  %173 = vmatpush1.bf16.msra.mxu0 %v126
  %174 = vmatprep.subr.bf16.mxu0 0
  %175 = vmatpush2.bf16.msra.mxu0 %v141
  %176 = vmatprep.subr.bf16.mxu0 0
  %177 = vmatpush2.bf16.msra.mxu0 %v140
  %178 = vmatprep.subr.bf16.mxu0 0
  %179 = vmatpush2.bf16.msra.mxu0 %v139
  %180 = vmatprep.subr.bf16.mxu0 0
  %181 = vmatpush2.bf16.msra.mxu0 %v138
  %182 = vmatprep.subr.bf16.mxu0 0
  %183 = vmatpush2.bf16.msra.mxu0 %v137
  %184 = vmatprep.subr.bf16.mxu0 0
  %185 = vmatpush2.bf16.msra.mxu0 %v136
  %186 = vmatprep.subr.bf16.mxu0 0
  %187 = vmatpush2.bf16.msra.mxu0 %v135
  %188 = vmatprep.subr.bf16.mxu0 0
  %189 = vmatpush2.bf16.msra.mxu0 %v134
  %190 = vmatprep.mubr.bf16.mxu0 %v59
  %191 = vmatmul.mubr.bf16.gmra.mxu0 %v58
  %v192 = vpop.f32.mrf.mxu0
  %v193 = vadd.f32 %v53, %v192
  %v194 = vpop.f32.mrf.mxu0
  %v195 = vpop.f32.mrf.mxu0
  %v196 = vpop.f32.mrf.mxu0
  %197 = vdwg.mxu0
  %198 = vst [vmem:[%s3] sm:$0xff] %v193
  // Predicated region
  $region14: #{edgegan_forward.37} parent=0 // pred_check
    _
  $region15: #{edgegan_forward.37} parent=0 // pred_check_branch
    %200 = sbr.rel (0) target = $region17
  $region16: #{edgegan_forward.37} parent=0 // pred_region
    _
  $region17: #{edgegan_forward.37} parent=0 // pred_fallthru
    _
  // Predicated region
  $region18: #{edgegan_forward.37} parent=0 // pred_check
    _
  $region19: #{edgegan_forward.37} parent=0 // pred_check_branch
    %202 = sbr.rel (0) target = $region21
  $region20: #{edgegan_forward.37} parent=0 // pred_region
    _
  $region21: #{edgegan_forward.37} parent=0 // pred_fallthru
    _

// kernel: edgegan_forward.28
$region0: #{edgegan_forward.28}
  #allocation0 [shape = 'u32[]', space=smem, size = 0x4, offset = 0x4, fixed_abs, tag = 'smem constant byte address 0x4 - core index']
  #allocation1 [shape = 'u32[144,128]{1,0:T(1,128)}', space=vmem, size = 0x12000, scoped, tag = 'internal scratch']
  %s0 = inlined_call_operand.vmem [shape: bf16[64,128], index: 0, kind: input, shape index: {}]
  %s1 = inlined_call_operand.vmem [shape: bf16[128,128], index: 1, kind: input, shape index: {}]
  %s2 = inlined_call_operand.vmem [shape: f32[1,128], index: 2, kind: input, shape index: {}]
  %s3 = inlined_call_operand.vmem [shape: f32[64,128], index: 3, kind: output, shape index: {}]
  %s4 = sld [smem:[#allocation0]]
  $region22: #{edgegan_forward.28} parent=0
    _
  %s6 = ssub.s32 1, %s4
  %s7 = scalar_select 0, %s6, %s4
  // Predicated region
  $region2: #{edgegan_forward.28} parent=0 // pred_check
    _
  $region3: #{edgegan_forward.28} parent=0 // pred_check_branch
    %9 = sbr.rel (0) target = $region5
  $region4: #{edgegan_forward.28} parent=0 // pred_region
    _
  $region5: #{edgegan_forward.28} parent=0 // pred_fallthru
    _
  // Predicated region
  $region6: #{edgegan_forward.28} parent=0 // pred_check
    _
  $region7: #{edgegan_forward.28} parent=0 // pred_check_branch
    %11 = sbr.rel (0) target = $region9
  $region8: #{edgegan_forward.28} parent=0 // pred_region
    _
  $region9: #{edgegan_forward.28} parent=0 // pred_fallthru
    _
  // Predicated region
  $region10: #{edgegan_forward.28} parent=0 // pred_check
    _
  $region11: #{edgegan_forward.28} parent=0 // pred_check_branch
    %13 = sbr.rel (0) target = $region13
  $region12: #{edgegan_forward.28} parent=0 // pred_region
    _
  $region13: #{edgegan_forward.28} parent=0 // pred_fallthru
    _
  %v15 = vld [vmem:[%s0] sm:$0xf]
  %v16 = vld [vmem:[%s0 + $0x4] sm:$0xf]
  %v17 = vld [vmem:[%s0 + $0x8] sm:$0xf]
  %v18 = vld [vmem:[%s0 + $0xc] sm:$0xf]
  %v19 = vld [vmem:[%s0 + $0x10] sm:$0xf]
  %v20 = vld [vmem:[%s0 + $0x14] sm:$0xf]
  %v21 = vld [vmem:[%s0 + $0x18] sm:$0xf]
  %v22 = vld [vmem:[%s0 + $0x1c] sm:$0xf]
  %v23 = vld [vmem:[%s1] sm:$0xf]
  %v24 = vld [vmem:[%s1 + $0x4] sm:$0xf]
  %v25 = vld [vmem:[%s1 + $0x8] sm:$0xf]
  %v26 = vld [vmem:[%s1 + $0xc] sm:$0xf]
  %v27 = vld [vmem:[%s1 + $0x10] sm:$0xf]
  %v28 = vld [vmem:[%s1 + $0x14] sm:$0xf]
  %v29 = vld [vmem:[%s1 + $0x18] sm:$0xf]
  %v30 = vld [vmem:[%s1 + $0x1c] sm:$0xf]
  %v31 = vld [vmem:[%s1 + $0x20] sm:$0xf]
  %v32 = vld [vmem:[%s1 + $0x24] sm:$0xf]
  %v33 = vld [vmem:[%s1 + $0x28] sm:$0xf]
  %v34 = vld [vmem:[%s1 + $0x2c] sm:$0xf]
  %v35 = vld [vmem:[%s1 + $0x30] sm:$0xf]
  %v36 = vld [vmem:[%s1 + $0x34] sm:$0xf]
  %v37 = vld [vmem:[%s1 + $0x38] sm:$0xf]
  %v38 = vld [vmem:[%s1 + $0x3c] sm:$0xf]
  %v39 = vld [vmem:[%s2] sm:$0x1]
  %v41 = vlaneseq
  %v42 = vshrl.u32 %v41, 7
  %v43 = vsub.s32 0, %v42
  %v44 = vrot.slane %v39, %v43
  %v54 = vunpack.c.l.b16 %v15
  %v55 = vunpack.c.l.b16 %v16
  %v56 = vunpack.c.l.b16 %v17
  %v57 = vunpack.c.l.b16 %v18
  %v58 = vunpack.c.l.b16 %v19
  %v59 = vunpack.c.l.b16 %v20
  %v60 = vunpack.c.l.b16 %v21
  %v61 = vunpack.c.l.b16 %v22
  %v62 = vpack.c.b16 %v55, %v54
  %v63 = vpack.c.b16 %v57, %v56
  %v64 = vpack.c.b16 %v59, %v58
  %v65 = vpack.c.b16 %v61, %v60
  %v86 = vunpack.c.l.b16 %v23
  %v87 = vunpack.c.l.b16 %v24
  %v88 = vunpack.c.l.b16 %v25
  %v89 = vunpack.c.l.b16 %v26
  %v90 = vunpack.c.l.b16 %v27
  %v91 = vunpack.c.l.b16 %v28
  %v92 = vunpack.c.l.b16 %v29
  %v93 = vunpack.c.l.b16 %v30
  %v94 = vunpack.c.l.b16 %v31
  %v95 = vunpack.c.l.b16 %v32
  %v96 = vunpack.c.l.b16 %v33
  %v97 = vunpack.c.l.b16 %v34
  %v98 = vunpack.c.l.b16 %v35
  %v99 = vunpack.c.l.b16 %v36
  %v100 = vunpack.c.l.b16 %v37
  %v101 = vunpack.c.l.b16 %v38
  %v102 = vpack.c.b16 %v87, %v86
  %v103 = vpack.c.b16 %v89, %v88
  %v104 = vpack.c.b16 %v91, %v90
  %v105 = vpack.c.b16 %v93, %v92
  %v106 = vpack.c.b16 %v95, %v94
  %v107 = vpack.c.b16 %v97, %v96
  %v108 = vpack.c.b16 %v99, %v98
  %v109 = vpack.c.b16 %v101, %v100
  %118 = vmatprep.subr.bf16.mxu0 0
  %119 = vmatpush1.bf16.msra.mxu0 %v109
  %120 = vmatprep.subr.bf16.mxu0 0
  %121 = vmatpush1.bf16.msra.mxu0 %v108
  %122 = vmatprep.subr.bf16.mxu0 0
  %123 = vmatpush1.bf16.msra.mxu0 %v107
  %124 = vmatprep.subr.bf16.mxu0 0
  %125 = vmatpush1.bf16.msra.mxu0 %v106
  %126 = vmatprep.subr.bf16.mxu0 0
  %127 = vmatpush1.bf16.msra.mxu0 %v105
  %128 = vmatprep.subr.bf16.mxu0 0
  %129 = vmatpush1.bf16.msra.mxu0 %v104
  %130 = vmatprep.subr.bf16.mxu0 0
  %131 = vmatpush1.bf16.msra.mxu0 %v103
  %132 = vmatprep.subr.bf16.mxu0 0
  %133 = vmatpush1.bf16.msra.mxu0 %v102
  %134 = vmatprep.subr.bf16.mxu0 0
  %135 = vmatpush2.bf16.msra.mxu0 0
  %136 = vmatprep.subr.bf16.mxu0 0
  %137 = vmatpush2.bf16.msra.mxu0 0
  %138 = vmatprep.subr.bf16.mxu0 0
  %139 = vmatpush2.bf16.msra.mxu0 0
  %140 = vmatprep.subr.bf16.mxu0 0
  %141 = vmatpush2.bf16.msra.mxu0 0
  %142 = vmatprep.subr.bf16.mxu0 0
  %143 = vmatpush2.bf16.msra.mxu0 0
  %144 = vmatprep.subr.bf16.mxu0 0
  %145 = vmatpush2.bf16.msra.mxu0 0
  %146 = vmatprep.subr.bf16.mxu0 0
  %147 = vmatpush2.bf16.msra.mxu0 0
  %148 = vmatprep.subr.bf16.mxu0 0
  %149 = vmatpush2.bf16.msra.mxu0 0
  %150 = vmatprep.mubr.bf16.mxu0 0
  %151 = vmatmul.mubr.bf16.gmra.mxu0 %v62
  %v152 = vpop.f32.mrf.mxu0
  %v153 = vadd.f32 %v44, %v152
  %v154 = vpop.f32.mrf.mxu0
  %v155 = vpop.f32.mrf.mxu0
  %v156 = vadd.f32 %v44, %v155
  %v157 = vpop.f32.mrf.mxu0
  %158 = vmatprep.mubr.bf16.mxu0 0
  %159 = vmatmul.mubr.bf16.gmra.mxu0 %v63
  %v160 = vpop.f32.mrf.mxu0
  %v161 = vadd.f32 %v44, %v160
  %v162 = vpop.f32.mrf.mxu0
  %v163 = vpop.f32.mrf.mxu0
  %v164 = vadd.f32 %v44, %v163
  %v165 = vpop.f32.mrf.mxu0
  %166 = vmatprep.mubr.bf16.mxu0 0
  %167 = vmatmul.mubr.bf16.gmra.mxu0 %v64
  %v168 = vpop.f32.mrf.mxu0
  %v169 = vadd.f32 %v44, %v168
  %v170 = vpop.f32.mrf.mxu0
  %v171 = vpop.f32.mrf.mxu0
  %v172 = vadd.f32 %v44, %v171
  %v173 = vpop.f32.mrf.mxu0
  %174 = vmatprep.mubr.bf16.mxu0 0
  %175 = vmatmul.mubr.bf16.gmra.mxu0 %v65
  %v176 = vpop.f32.mrf.mxu0
  %v177 = vadd.f32 %v44, %v176
  %v178 = vpop.f32.mrf.mxu0
  %v179 = vpop.f32.mrf.mxu0
  %v180 = vadd.f32 %v44, %v179
  %v181 = vpop.f32.mrf.mxu0
  %182 = vdwg.mxu0
  %vm183 = vcmp.gt.f32.partialorder %v153, 0.0
  %vm184 = vcmp.gt.f32.partialorder %v156, 0.0
  %vm185 = vcmp.gt.f32.partialorder %v161, 0.0
  %vm186 = vcmp.gt.f32.partialorder %v164, 0.0
  %vm187 = vcmp.gt.f32.partialorder %v169, 0.0
  %vm188 = vcmp.gt.f32.partialorder %v172, 0.0
  %vm189 = vcmp.gt.f32.partialorder %v177, 0.0
  %vm190 = vcmp.gt.f32.partialorder %v180, 0.0
  %v191 = vmul.f32 %v153, 0.2
  %v192 = vmul.f32 %v156, 0.2
  %v193 = vmul.f32 %v161, 0.2
  %v194 = vmul.f32 %v164, 0.2
  %v195 = vmul.f32 %v169, 0.2
  %v196 = vmul.f32 %v172, 0.2
  %v197 = vmul.f32 %v177, 0.2
  %v198 = vmul.f32 %v180, 0.2
  %v199 = vsel %vm183, %v153, %v191
  %v200 = vsel %vm184, %v156, %v192
  %v201 = vsel %vm185, %v161, %v193
  %v202 = vsel %vm186, %v164, %v194
  %v203 = vsel %vm187, %v169, %v195
  %v204 = vsel %vm188, %v172, %v196
  %v205 = vsel %vm189, %v177, %v197
  %v206 = vsel %vm190, %v180, %v198
  %207 = vst [vmem:[%s3] sm:$0xff] %v199
  %208 = vst [vmem:[%s3 + $0x8] sm:$0xff] %v200
  %209 = vst [vmem:[%s3 + $0x10] sm:$0xff] %v201
  %210 = vst [vmem:[%s3 + $0x18] sm:$0xff] %v202
  %211 = vst [vmem:[%s3 + $0x20] sm:$0xff] %v203
  %212 = vst [vmem:[%s3 + $0x28] sm:$0xff] %v204
  %213 = vst [vmem:[%s3 + $0x30] sm:$0xff] %v205
  %214 = vst [vmem:[%s3 + $0x38] sm:$0xff] %v206
  // Predicated region
  $region14: #{edgegan_forward.28} parent=0 // pred_check
    _
  $region15: #{edgegan_forward.28} parent=0 // pred_check_branch
    %216 = sbr.rel (0) target = $region17
  $region16: #{edgegan_forward.28} parent=0 // pred_region
    _
  $region17: #{edgegan_forward.28} parent=0 // pred_fallthru
    _
  // Predicated region
  $region18: #{edgegan_forward.28} parent=0 // pred_check
    _
  $region19: #{edgegan_forward.28} parent=0 // pred_check_branch
    %218 = sbr.rel (0) target = $region21
  $region20: #{edgegan_forward.28} parent=0 // pred_region
    _
  $region21: #{edgegan_forward.28} parent=0 // pred_fallthru
    _

// kernel: edgegan_forward.29
$region0: #{edgegan_forward.29}
  #allocation0 [shape = 'u32[]', space=smem, size = 0x4, offset = 0x4, fixed_abs, tag = 'smem constant byte address 0x4 - core index']
  #allocation1 [shape = 'u32[144,128]{1,0:T(1,128)}', space=vmem, size = 0x12000, scoped, tag = 'internal scratch']
  %s0 = inlined_call_operand.vmem [shape: bf16[16,128], index: 0, kind: input, shape index: {}]
  %s1 = inlined_call_operand.vmem [shape: bf16[128,128], index: 1, kind: input, shape index: {}]
  %s2 = inlined_call_operand.vmem [shape: f32[1,128], index: 2, kind: input, shape index: {}]
  %s3 = inlined_call_operand.vmem [shape: f32[16,128], index: 3, kind: output, shape index: {}]
  %s4 = sld [smem:[#allocation0]]
  $region22: #{edgegan_forward.29} parent=0
    _
  %s6 = ssub.s32 1, %s4
  %s7 = scalar_select 0, %s6, %s4
  // Predicated region
  $region2: #{edgegan_forward.29} parent=0 // pred_check
    _
  $region3: #{edgegan_forward.29} parent=0 // pred_check_branch
    %9 = sbr.rel (0) target = $region5
  $region4: #{edgegan_forward.29} parent=0 // pred_region
    _
  $region5: #{edgegan_forward.29} parent=0 // pred_fallthru
    _
  // Predicated region
  $region6: #{edgegan_forward.29} parent=0 // pred_check
    _
  $region7: #{edgegan_forward.29} parent=0 // pred_check_branch
    %11 = sbr.rel (0) target = $region9
  $region8: #{edgegan_forward.29} parent=0 // pred_region
    _
  $region9: #{edgegan_forward.29} parent=0 // pred_fallthru
    _
  // Predicated region
  $region10: #{edgegan_forward.29} parent=0 // pred_check
    _
  $region11: #{edgegan_forward.29} parent=0 // pred_check_branch
    %13 = sbr.rel (0) target = $region13
  $region12: #{edgegan_forward.29} parent=0 // pred_region
    _
  $region13: #{edgegan_forward.29} parent=0 // pred_fallthru
    _
  %v15 = vld [vmem:[%s0] sm:$0xf]
  %v16 = vld [vmem:[%s0 + $0x4] sm:$0xf]
  %v17 = vld [vmem:[%s1] sm:$0xf]
  %v18 = vld [vmem:[%s1 + $0x4] sm:$0xf]
  %v19 = vld [vmem:[%s1 + $0x8] sm:$0xf]
  %v20 = vld [vmem:[%s1 + $0xc] sm:$0xf]
  %v21 = vld [vmem:[%s1 + $0x10] sm:$0xf]
  %v22 = vld [vmem:[%s1 + $0x14] sm:$0xf]
  %v23 = vld [vmem:[%s1 + $0x18] sm:$0xf]
  %v24 = vld [vmem:[%s1 + $0x1c] sm:$0xf]
  %v25 = vld [vmem:[%s1 + $0x20] sm:$0xf]
  %v26 = vld [vmem:[%s1 + $0x24] sm:$0xf]
  %v27 = vld [vmem:[%s1 + $0x28] sm:$0xf]
  %v28 = vld [vmem:[%s1 + $0x2c] sm:$0xf]
  %v29 = vld [vmem:[%s1 + $0x30] sm:$0xf]
  %v30 = vld [vmem:[%s1 + $0x34] sm:$0xf]
  %v31 = vld [vmem:[%s1 + $0x38] sm:$0xf]
  %v32 = vld [vmem:[%s1 + $0x3c] sm:$0xf]
  %v33 = vld [vmem:[%s2] sm:$0x1]
  %v35 = vlaneseq
  %v36 = vshrl.u32 %v35, 7
  %v37 = vsub.s32 0, %v36
  %v38 = vrot.slane %v33, %v37
  %v42 = vunpack.c.l.b16 %v15
  %v43 = vunpack.c.l.b16 %v16
  %v44 = vpack.c.b16 %v43, %v42
  %v62 = vunpack.c.l.b16 %v17
  %v63 = vunpack.c.l.b16 %v18
  %v64 = vunpack.c.l.b16 %v19
  %v65 = vunpack.c.l.b16 %v20
  %v66 = vunpack.c.l.b16 %v21
  %v67 = vunpack.c.l.b16 %v22
  %v68 = vunpack.c.l.b16 %v23
  %v69 = vunpack.c.l.b16 %v24
  %v70 = vunpack.c.l.b16 %v25
  %v71 = vunpack.c.l.b16 %v26
  %v72 = vunpack.c.l.b16 %v27
  %v73 = vunpack.c.l.b16 %v28
  %v74 = vunpack.c.l.b16 %v29
  %v75 = vunpack.c.l.b16 %v30
  %v76 = vunpack.c.l.b16 %v31
  %v77 = vunpack.c.l.b16 %v32
  %v78 = vpack.c.b16 %v63, %v62
  %v79 = vpack.c.b16 %v65, %v64
  %v80 = vpack.c.b16 %v67, %v66
  %v81 = vpack.c.b16 %v69, %v68
  %v82 = vpack.c.b16 %v71, %v70
  %v83 = vpack.c.b16 %v73, %v72
  %v84 = vpack.c.b16 %v75, %v74
  %v85 = vpack.c.b16 %v77, %v76
  %94 = vmatprep.subr.bf16.mxu0 0
  %95 = vmatpush1.bf16.msra.mxu0 %v85
  %96 = vmatprep.subr.bf16.mxu0 0
  %97 = vmatpush1.bf16.msra.mxu0 %v84
  %98 = vmatprep.subr.bf16.mxu0 0
  %99 = vmatpush1.bf16.msra.mxu0 %v83
  %100 = vmatprep.subr.bf16.mxu0 0
  %101 = vmatpush1.bf16.msra.mxu0 %v82
  %102 = vmatprep.subr.bf16.mxu0 0
  %103 = vmatpush1.bf16.msra.mxu0 %v81
  %104 = vmatprep.subr.bf16.mxu0 0
  %105 = vmatpush1.bf16.msra.mxu0 %v80
  %106 = vmatprep.subr.bf16.mxu0 0
  %107 = vmatpush1.bf16.msra.mxu0 %v79
  %108 = vmatprep.subr.bf16.mxu0 0
  %109 = vmatpush1.bf16.msra.mxu0 %v78
  %110 = vmatprep.subr.bf16.mxu0 0
  %111 = vmatpush2.bf16.msra.mxu0 0
  %112 = vmatprep.subr.bf16.mxu0 0
  %113 = vmatpush2.bf16.msra.mxu0 0
  %114 = vmatprep.subr.bf16.mxu0 0
  %115 = vmatpush2.bf16.msra.mxu0 0
  %116 = vmatprep.subr.bf16.mxu0 0
  %117 = vmatpush2.bf16.msra.mxu0 0
  %118 = vmatprep.subr.bf16.mxu0 0
  %119 = vmatpush2.bf16.msra.mxu0 0
  %120 = vmatprep.subr.bf16.mxu0 0
  %121 = vmatpush2.bf16.msra.mxu0 0
  %122 = vmatprep.subr.bf16.mxu0 0
  %123 = vmatpush2.bf16.msra.mxu0 0
  %124 = vmatprep.subr.bf16.mxu0 0
  %125 = vmatpush2.bf16.msra.mxu0 0
  %126 = vmatprep.mubr.bf16.mxu0 0
  %127 = vmatmul.mubr.bf16.gmra.mxu0 %v44
  %v128 = vpop.f32.mrf.mxu0
  %v129 = vadd.f32 %v38, %v128
  %v130 = vpop.f32.mrf.mxu0
  %v131 = vpop.f32.mrf.mxu0
  %v132 = vadd.f32 %v38, %v131
  %v133 = vpop.f32.mrf.mxu0
  %134 = vdwg.mxu0
  %vm135 = vcmp.gt.f32.partialorder %v129, 0.0
  %vm136 = vcmp.gt.f32.partialorder %v132, 0.0
  %v137 = vmul.f32 %v129, 0.2
  %v138 = vmul.f32 %v132, 0.2
  %v139 = vsel %vm135, %v129, %v137
  %v140 = vsel %vm136, %v132, %v138
  %141 = vst [vmem:[%s3] sm:$0xff] %v139
  %142 = vst [vmem:[%s3 + $0x8] sm:$0xff] %v140
  // Predicated region
  $region14: #{edgegan_forward.29} parent=0 // pred_check
    _
  $region15: #{edgegan_forward.29} parent=0 // pred_check_branch
    %144 = sbr.rel (0) target = $region17
  $region16: #{edgegan_forward.29} parent=0 // pred_region
    _
  $region17: #{edgegan_forward.29} parent=0 // pred_fallthru
    _
  // Predicated region
  $region18: #{edgegan_forward.29} parent=0 // pred_check
    _
  $region19: #{edgegan_forward.29} parent=0 // pred_check_branch
    %146 = sbr.rel (0) target = $region21
  $region20: #{edgegan_forward.29} parent=0 // pred_region
    _
  $region21: #{edgegan_forward.29} parent=0 // pred_fallthru
    _

// kernel: edgegan_forward.30
$region0: #{edgegan_forward.30}
  #allocation0 [shape = 'u32[]', space=smem, size = 0x4, offset = 0x4, fixed_abs, tag = 'smem constant byte address 0x4 - core index']
  #allocation1 [shape = 'u32[144,128]{1,0:T(1,128)}', space=vmem, size = 0x12000, scoped, tag = 'internal scratch']
  %s0 = inlined_call_operand.vmem [shape: bf16[8,128], index: 0, kind: input, shape index: {}]
  %s1 = inlined_call_operand.vmem [shape: bf16[128,128], index: 1, kind: input, shape index: {}]
  %s2 = inlined_call_operand.vmem [shape: f32[1,128], index: 2, kind: input, shape index: {}]
  %s3 = inlined_call_operand.vmem [shape: f32[8,128], index: 3, kind: output, shape index: {}]
  %s4 = sld [smem:[#allocation0]]
  $region22: #{edgegan_forward.30} parent=0
    _
  %s6 = ssub.s32 1, %s4
  %s7 = scalar_select 0, %s6, %s4
  // Predicated region
  $region2: #{edgegan_forward.30} parent=0 // pred_check
    _
  $region3: #{edgegan_forward.30} parent=0 // pred_check_branch
    %9 = sbr.rel (0) target = $region5
  $region4: #{edgegan_forward.30} parent=0 // pred_region
    _
  $region5: #{edgegan_forward.30} parent=0 // pred_fallthru
    _
  // Predicated region
  $region6: #{edgegan_forward.30} parent=0 // pred_check
    _
  $region7: #{edgegan_forward.30} parent=0 // pred_check_branch
    %11 = sbr.rel (0) target = $region9
  $region8: #{edgegan_forward.30} parent=0 // pred_region
    _
  $region9: #{edgegan_forward.30} parent=0 // pred_fallthru
    _
  // Predicated region
  $region10: #{edgegan_forward.30} parent=0 // pred_check
    _
  $region11: #{edgegan_forward.30} parent=0 // pred_check_branch
    %13 = sbr.rel (0) target = $region13
  $region12: #{edgegan_forward.30} parent=0 // pred_region
    _
  $region13: #{edgegan_forward.30} parent=0 // pred_fallthru
    _
  %v15 = vld [vmem:[%s0] sm:$0xf]
  %v16 = vld [vmem:[%s1] sm:$0xf]
  %v17 = vld [vmem:[%s1 + $0x4] sm:$0xf]
  %v18 = vld [vmem:[%s1 + $0x8] sm:$0xf]
  %v19 = vld [vmem:[%s1 + $0xc] sm:$0xf]
  %v20 = vld [vmem:[%s1 + $0x10] sm:$0xf]
  %v21 = vld [vmem:[%s1 + $0x14] sm:$0xf]
  %v22 = vld [vmem:[%s1 + $0x18] sm:$0xf]
  %v23 = vld [vmem:[%s1 + $0x1c] sm:$0xf]
  %v24 = vld [vmem:[%s1 + $0x20] sm:$0xf]
  %v25 = vld [vmem:[%s1 + $0x24] sm:$0xf]
  %v26 = vld [vmem:[%s1 + $0x28] sm:$0xf]
  %v27 = vld [vmem:[%s1 + $0x2c] sm:$0xf]
  %v28 = vld [vmem:[%s1 + $0x30] sm:$0xf]
  %v29 = vld [vmem:[%s1 + $0x34] sm:$0xf]
  %v30 = vld [vmem:[%s1 + $0x38] sm:$0xf]
  %v31 = vld [vmem:[%s1 + $0x3c] sm:$0xf]
  %v32 = vld [vmem:[%s2] sm:$0x1]
  %v34 = vlaneseq
  %v35 = vshrl.u32 %v34, 7
  %v36 = vsub.s32 0, %v35
  %v37 = vrot.slane %v32, %v36
  %v55 = vunpack.c.l.b16 %v16
  %v56 = vunpack.c.l.b16 %v17
  %v57 = vunpack.c.l.b16 %v18
  %v58 = vunpack.c.l.b16 %v19
  %v59 = vunpack.c.l.b16 %v20
  %v60 = vunpack.c.l.b16 %v21
  %v61 = vunpack.c.l.b16 %v22
  %v62 = vunpack.c.l.b16 %v23
  %v63 = vunpack.c.l.b16 %v24
  %v64 = vunpack.c.l.b16 %v25
  %v65 = vunpack.c.l.b16 %v26
  %v66 = vunpack.c.l.b16 %v27
  %v67 = vunpack.c.l.b16 %v28
  %v68 = vunpack.c.l.b16 %v29
  %v69 = vunpack.c.l.b16 %v30
  %v70 = vunpack.c.l.b16 %v31
  %v71 = vpack.c.b16 %v56, %v55
  %v72 = vpack.c.b16 %v58, %v57
  %v73 = vpack.c.b16 %v60, %v59
  %v74 = vpack.c.b16 %v62, %v61
  %v75 = vpack.c.b16 %v64, %v63
  %v76 = vpack.c.b16 %v66, %v65
  %v77 = vpack.c.b16 %v68, %v67
  %v78 = vpack.c.b16 %v70, %v69
  %87 = vmatprep.subr.bf16.mxu0 0
  %88 = vmatpush1.bf16.msra.mxu0 %v78
  %89 = vmatprep.subr.bf16.mxu0 0
  %90 = vmatpush1.bf16.msra.mxu0 %v77
  %91 = vmatprep.subr.bf16.mxu0 0
  %92 = vmatpush1.bf16.msra.mxu0 %v76
  %93 = vmatprep.subr.bf16.mxu0 0
  %94 = vmatpush1.bf16.msra.mxu0 %v75
  %95 = vmatprep.subr.bf16.mxu0 0
  %96 = vmatpush1.bf16.msra.mxu0 %v74
  %97 = vmatprep.subr.bf16.mxu0 0
  %98 = vmatpush1.bf16.msra.mxu0 %v73
  %99 = vmatprep.subr.bf16.mxu0 0
  %100 = vmatpush1.bf16.msra.mxu0 %v72
  %101 = vmatprep.subr.bf16.mxu0 0
  %102 = vmatpush1.bf16.msra.mxu0 %v71
  %103 = vmatprep.subr.bf16.mxu0 0
  %104 = vmatpush2.bf16.msra.mxu0 0
  %105 = vmatprep.subr.bf16.mxu0 0
  %106 = vmatpush2.bf16.msra.mxu0 0
  %107 = vmatprep.subr.bf16.mxu0 0
  %108 = vmatpush2.bf16.msra.mxu0 0
  %109 = vmatprep.subr.bf16.mxu0 0
  %110 = vmatpush2.bf16.msra.mxu0 0
  %111 = vmatprep.subr.bf16.mxu0 0
  %112 = vmatpush2.bf16.msra.mxu0 0
  %113 = vmatprep.subr.bf16.mxu0 0
  %114 = vmatpush2.bf16.msra.mxu0 0
  %115 = vmatprep.subr.bf16.mxu0 0
  %116 = vmatpush2.bf16.msra.mxu0 0
  %117 = vmatprep.subr.bf16.mxu0 0
  %118 = vmatpush2.bf16.msra.mxu0 0
  %119 = vmatprep.mubr.bf16.mxu0 0
  %120 = vmatmul.mubr.bf16.gmra.mxu0 %v15
  %v121 = vpop.f32.mrf.mxu0
  %v122 = vadd.f32 %v37, %v121
  %v123 = vpop.f32.mrf.mxu0
  %v124 = vpop.f32.mrf.mxu0
  %v125 = vpop.f32.mrf.mxu0
  %126 = vdwg.mxu0
  %127 = vst [vmem:[%s3] sm:$0xff] %v122
  // Predicated region
  $region14: #{edgegan_forward.30} parent=0 // pred_check
    _
  $region15: #{edgegan_forward.30} parent=0 // pred_check_branch
    %129 = sbr.rel (0) target = $region17
  $region16: #{edgegan_forward.30} parent=0 // pred_region
    _
  $region17: #{edgegan_forward.30} parent=0 // pred_fallthru
    _
  // Predicated region
  $region18: #{edgegan_forward.30} parent=0 // pred_check
    _
  $region19: #{edgegan_forward.30} parent=0 // pred_check_branch
    %131 = sbr.rel (0) target = $region21
  $region20: #{edgegan_forward.30} parent=0 // pred_region
    _
  $region21: #{edgegan_forward.30} parent=0 // pred_fallthru
    _

// kernel: edgegan_forward.31
$region0: #{edgegan_forward.31}
  #allocation0 [shape = 'u32[]', space=smem, size = 0x4, offset = 0x4, fixed_abs, tag = 'smem constant byte address 0x4 - core index']
  #allocation1 [shape = 'u32[144,128]{1,0:T(1,128)}', space=vmem, size = 0x12000, scoped, tag = 'internal scratch']
  %s0 = inlined_call_operand.vmem [shape: bf16[256,128], index: 0, kind: input, shape index: {}]
  %s1 = inlined_call_operand.vmem [shape: bf16[128,128], index: 1, kind: input, shape index: {}]
  %s2 = inlined_call_operand.vmem [shape: f32[1,128], index: 2, kind: input, shape index: {}]
  %s3 = inlined_call_operand.vmem [shape: f32[256,128], index: 3, kind: output, shape index: {}]
  %s4 = sld [smem:[#allocation0]]
  $region22: #{edgegan_forward.31} parent=0
    _
  %s6 = ssub.s32 1, %s4
  %s7 = scalar_select 0, %s6, %s4
  // Predicated region
  $region2: #{edgegan_forward.31} parent=0 // pred_check
    _
  $region3: #{edgegan_forward.31} parent=0 // pred_check_branch
    %9 = sbr.rel (0) target = $region5
  $region4: #{edgegan_forward.31} parent=0 // pred_region
    _
  $region5: #{edgegan_forward.31} parent=0 // pred_fallthru
    _
  // Predicated region
  $region6: #{edgegan_forward.31} parent=0 // pred_check
    _
  $region7: #{edgegan_forward.31} parent=0 // pred_check_branch
    %11 = sbr.rel (0) target = $region9
  $region8: #{edgegan_forward.31} parent=0 // pred_region
    _
  $region9: #{edgegan_forward.31} parent=0 // pred_fallthru
    _
  // Predicated region
  $region10: #{edgegan_forward.31} parent=0 // pred_check
    _
  $region11: #{edgegan_forward.31} parent=0 // pred_check_branch
    %13 = sbr.rel (0) target = $region13
  $region12: #{edgegan_forward.31} parent=0 // pred_region
    _
  $region13: #{edgegan_forward.31} parent=0 // pred_fallthru
    _
  %v15 = vld [vmem:[%s0] sm:$0xf]
  %v16 = vld [vmem:[%s0 + $0x4] sm:$0xf]
  %v17 = vld [vmem:[%s0 + $0x8] sm:$0xf]
  %v18 = vld [vmem:[%s0 + $0xc] sm:$0xf]
  %v19 = vld [vmem:[%s0 + $0x10] sm:$0xf]
  %v20 = vld [vmem:[%s0 + $0x14] sm:$0xf]
  %v21 = vld [vmem:[%s0 + $0x18] sm:$0xf]
  %v22 = vld [vmem:[%s0 + $0x1c] sm:$0xf]
  %v23 = vld [vmem:[%s0 + $0x20] sm:$0xf]
  %v24 = vld [vmem:[%s0 + $0x24] sm:$0xf]
  %v25 = vld [vmem:[%s0 + $0x28] sm:$0xf]
  %v26 = vld [vmem:[%s0 + $0x2c] sm:$0xf]
  %v27 = vld [vmem:[%s0 + $0x30] sm:$0xf]
  %v28 = vld [vmem:[%s0 + $0x34] sm:$0xf]
  %v29 = vld [vmem:[%s0 + $0x38] sm:$0xf]
  %v30 = vld [vmem:[%s0 + $0x3c] sm:$0xf]
  %v31 = vld [vmem:[%s0 + $0x40] sm:$0xf]
  %v32 = vld [vmem:[%s0 + $0x44] sm:$0xf]
  %v33 = vld [vmem:[%s0 + $0x48] sm:$0xf]
  %v34 = vld [vmem:[%s0 + $0x4c] sm:$0xf]
  %v35 = vld [vmem:[%s0 + $0x50] sm:$0xf]
  %v36 = vld [vmem:[%s0 + $0x54] sm:$0xf]
  %v37 = vld [vmem:[%s0 + $0x58] sm:$0xf]
  %v38 = vld [vmem:[%s0 + $0x5c] sm:$0xf]
  %v39 = vld [vmem:[%s0 + $0x60] sm:$0xf]
  %v40 = vld [vmem:[%s0 + $0x64] sm:$0xf]
  %v41 = vld [vmem:[%s0 + $0x68] sm:$0xf]
  %v42 = vld [vmem:[%s0 + $0x6c] sm:$0xf]
  %v43 = vld [vmem:[%s0 + $0x70] sm:$0xf]
  %v44 = vld [vmem:[%s0 + $0x74] sm:$0xf]
  %v45 = vld [vmem:[%s0 + $0x78] sm:$0xf]
  %v46 = vld [vmem:[%s0 + $0x7c] sm:$0xf]
  %v47 = vld [vmem:[%s1] sm:$0xf]
  %v48 = vld [vmem:[%s1 + $0x4] sm:$0xf]
  %v49 = vld [vmem:[%s1 + $0x8] sm:$0xf]
  %v50 = vld [vmem:[%s1 + $0xc] sm:$0xf]
  %v51 = vld [vmem:[%s1 + $0x10] sm:$0xf]
  %v52 = vld [vmem:[%s1 + $0x14] sm:$0xf]
  %v53 = vld [vmem:[%s1 + $0x18] sm:$0xf]
  %v54 = vld [vmem:[%s1 + $0x1c] sm:$0xf]
  %v55 = vld [vmem:[%s1 + $0x20] sm:$0xf]
  %v56 = vld [vmem:[%s1 + $0x24] sm:$0xf]
  %v57 = vld [vmem:[%s1 + $0x28] sm:$0xf]
  %v58 = vld [vmem:[%s1 + $0x2c] sm:$0xf]
  %v59 = vld [vmem:[%s1 + $0x30] sm:$0xf]
  %v60 = vld [vmem:[%s1 + $0x34] sm:$0xf]
  %v61 = vld [vmem:[%s1 + $0x38] sm:$0xf]
  %v62 = vld [vmem:[%s1 + $0x3c] sm:$0xf]
  %v63 = vld [vmem:[%s2] sm:$0x1]
  %v65 = vlaneseq
  %v66 = vshrl.u32 %v65, 7
  %v67 = vsub.s32 0, %v66
  %v68 = vrot.slane %v63, %v67
  %v102 = vunpack.c.l.b16 %v15
  %v103 = vunpack.c.l.b16 %v16
  %v104 = vunpack.c.l.b16 %v17
  %v105 = vunpack.c.l.b16 %v18
  %v106 = vunpack.c.l.b16 %v19
  %v107 = vunpack.c.l.b16 %v20
  %v108 = vunpack.c.l.b16 %v21
  %v109 = vunpack.c.l.b16 %v22
  %v110 = vunpack.c.l.b16 %v23
  %v111 = vunpack.c.l.b16 %v24
  %v112 = vunpack.c.l.b16 %v25
  %v113 = vunpack.c.l.b16 %v26
  %v114 = vunpack.c.l.b16 %v27
  %v115 = vunpack.c.l.b16 %v28
  %v116 = vunpack.c.l.b16 %v29
  %v117 = vunpack.c.l.b16 %v30
  %v118 = vunpack.c.l.b16 %v31
  %v119 = vunpack.c.l.b16 %v32
  %v120 = vunpack.c.l.b16 %v33
  %v121 = vunpack.c.l.b16 %v34
  %v122 = vunpack.c.l.b16 %v35
  %v123 = vunpack.c.l.b16 %v36
  %v124 = vunpack.c.l.b16 %v37
  %v125 = vunpack.c.l.b16 %v38
  %v126 = vunpack.c.l.b16 %v39
  %v127 = vunpack.c.l.b16 %v40
  %v128 = vunpack.c.l.b16 %v41
  %v129 = vunpack.c.l.b16 %v42
  %v130 = vunpack.c.l.b16 %v43
  %v131 = vunpack.c.l.b16 %v44
  %v132 = vunpack.c.l.b16 %v45
  %v133 = vunpack.c.l.b16 %v46
  %v134 = vpack.c.b16 %v103, %v102
  %v135 = vpack.c.b16 %v105, %v104
  %v136 = vpack.c.b16 %v107, %v106
  %v137 = vpack.c.b16 %v109, %v108
  %v138 = vpack.c.b16 %v111, %v110
  %v139 = vpack.c.b16 %v113, %v112
  %v140 = vpack.c.b16 %v115, %v114
  %v141 = vpack.c.b16 %v117, %v116
  %v142 = vpack.c.b16 %v119, %v118
  %v143 = vpack.c.b16 %v121, %v120
  %v144 = vpack.c.b16 %v123, %v122
  %v145 = vpack.c.b16 %v125, %v124
  %v146 = vpack.c.b16 %v127, %v126
  %v147 = vpack.c.b16 %v129, %v128
  %v148 = vpack.c.b16 %v131, %v130
  %v149 = vpack.c.b16 %v133, %v132
  %v182 = vunpack.c.l.b16 %v47
  %v183 = vunpack.c.l.b16 %v48
  %v184 = vunpack.c.l.b16 %v49
  %v185 = vunpack.c.l.b16 %v50
  %v186 = vunpack.c.l.b16 %v51
  %v187 = vunpack.c.l.b16 %v52
  %v188 = vunpack.c.l.b16 %v53
  %v189 = vunpack.c.l.b16 %v54
  %v190 = vunpack.c.l.b16 %v55
  %v191 = vunpack.c.l.b16 %v56
  %v192 = vunpack.c.l.b16 %v57
  %v193 = vunpack.c.l.b16 %v58
  %v194 = vunpack.c.l.b16 %v59
  %v195 = vunpack.c.l.b16 %v60
  %v196 = vunpack.c.l.b16 %v61
  %v197 = vunpack.c.l.b16 %v62
  %v198 = vpack.c.b16 %v183, %v182
  %v199 = vpack.c.b16 %v185, %v184
  %v200 = vpack.c.b16 %v187, %v186
  %v201 = vpack.c.b16 %v189, %v188
  %v202 = vpack.c.b16 %v191, %v190
  %v203 = vpack.c.b16 %v193, %v192
  %v204 = vpack.c.b16 %v195, %v194
  %v205 = vpack.c.b16 %v197, %v196
  %214 = vmatprep.subr.bf16.mxu0 0
  %215 = vmatpush1.bf16.msra.mxu0 %v205
  %216 = vmatprep.subr.bf16.mxu0 0
  %217 = vmatpush1.bf16.msra.mxu0 %v204
  %218 = vmatprep.subr.bf16.mxu0 0
  %219 = vmatpush1.bf16.msra.mxu0 %v203
  %220 = vmatprep.subr.bf16.mxu0 0
  %221 = vmatpush1.bf16.msra.mxu0 %v202
  %222 = vmatprep.subr.bf16.mxu0 0
  %223 = vmatpush1.bf16.msra.mxu0 %v201
  %224 = vmatprep.subr.bf16.mxu0 0
  %225 = vmatpush1.bf16.msra.mxu0 %v200
  %226 = vmatprep.subr.bf16.mxu0 0
  %227 = vmatpush1.bf16.msra.mxu0 %v199
  %228 = vmatprep.subr.bf16.mxu0 0
  %229 = vmatpush1.bf16.msra.mxu0 %v198
  %230 = vmatprep.subr.bf16.mxu0 0
  %231 = vmatpush2.bf16.msra.mxu0 0
  %232 = vmatprep.subr.bf16.mxu0 0
  %233 = vmatpush2.bf16.msra.mxu0 0
  %234 = vmatprep.subr.bf16.mxu0 0
  %235 = vmatpush2.bf16.msra.mxu0 0
  %236 = vmatprep.subr.bf16.mxu0 0
  %237 = vmatpush2.bf16.msra.mxu0 0
  %238 = vmatprep.subr.bf16.mxu0 0
  %239 = vmatpush2.bf16.msra.mxu0 0
  %240 = vmatprep.subr.bf16.mxu0 0
  %241 = vmatpush2.bf16.msra.mxu0 0
  %242 = vmatprep.subr.bf16.mxu0 0
  %243 = vmatpush2.bf16.msra.mxu0 0
  %244 = vmatprep.subr.bf16.mxu0 0
  %245 = vmatpush2.bf16.msra.mxu0 0
  %246 = vmatprep.mubr.bf16.mxu0 0
  %247 = vmatmul.mubr.bf16.gmra.mxu0 %v134
  %v248 = vpop.f32.mrf.mxu0
  %v249 = vadd.f32 %v68, %v248
  %v250 = vpop.f32.mrf.mxu0
  %v251 = vpop.f32.mrf.mxu0
  %v252 = vadd.f32 %v68, %v251
  %v253 = vpop.f32.mrf.mxu0
  %254 = vmatprep.mubr.bf16.mxu0 0
  %255 = vmatmul.mubr.bf16.gmra.mxu0 %v135
  %v256 = vpop.f32.mrf.mxu0
  %v257 = vadd.f32 %v68, %v256
  %v258 = vpop.f32.mrf.mxu0
  %v259 = vpop.f32.mrf.mxu0
  %v260 = vadd.f32 %v68, %v259
  %v261 = vpop.f32.mrf.mxu0
  %262 = vmatprep.mubr.bf16.mxu0 0
  %263 = vmatmul.mubr.bf16.gmra.mxu0 %v136
  %v264 = vpop.f32.mrf.mxu0
  %v265 = vadd.f32 %v68, %v264
  %v266 = vpop.f32.mrf.mxu0
  %v267 = vpop.f32.mrf.mxu0
  %v268 = vadd.f32 %v68, %v267
  %v269 = vpop.f32.mrf.mxu0
  %270 = vmatprep.mubr.bf16.mxu0 0
  %271 = vmatmul.mubr.bf16.gmra.mxu0 %v137
  %v272 = vpop.f32.mrf.mxu0
  %v273 = vadd.f32 %v68, %v272
  %v274 = vpop.f32.mrf.mxu0
  %v275 = vpop.f32.mrf.mxu0
  %v276 = vadd.f32 %v68, %v275
  %v277 = vpop.f32.mrf.mxu0
  %278 = vmatprep.mubr.bf16.mxu0 0
  %279 = vmatmul.mubr.bf16.gmra.mxu0 %v138
  %v280 = vpop.f32.mrf.mxu0
  %v281 = vadd.f32 %v68, %v280
  %v282 = vpop.f32.mrf.mxu0
  %v283 = vpop.f32.mrf.mxu0
  %v284 = vadd.f32 %v68, %v283
  %v285 = vpop.f32.mrf.mxu0
  %286 = vmatprep.mubr.bf16.mxu0 0
  %287 = vmatmul.mubr.bf16.gmra.mxu0 %v139
  %v288 = vpop.f32.mrf.mxu0
  %v289 = vadd.f32 %v68, %v288
  %v290 = vpop.f32.mrf.mxu0
  %v291 = vpop.f32.mrf.mxu0
  %v292 = vadd.f32 %v68, %v291
  %v293 = vpop.f32.mrf.mxu0
  %294 = vmatprep.mubr.bf16.mxu0 0
  %295 = vmatmul.mubr.bf16.gmra.mxu0 %v140
  %v296 = vpop.f32.mrf.mxu0
  %v297 = vadd.f32 %v68, %v296
  %v298 = vpop.f32.mrf.mxu0
  %v299 = vpop.f32.mrf.mxu0
  %v300 = vadd.f32 %v68, %v299
  %v301 = vpop.f32.mrf.mxu0
  %302 = vmatprep.mubr.bf16.mxu0 0
  %303 = vmatmul.mubr.bf16.gmra.mxu0 %v141
  %v304 = vpop.f32.mrf.mxu0
  %v305 = vadd.f32 %v68, %v304
  %v306 = vpop.f32.mrf.mxu0
  %v307 = vpop.f32.mrf.mxu0
  %v308 = vadd.f32 %v68, %v307
  %v309 = vpop.f32.mrf.mxu0
  %310 = vmatprep.mubr.bf16.mxu0 0
  %311 = vmatmul.mubr.bf16.gmra.mxu0 %v142
  %v312 = vpop.f32.mrf.mxu0
  %v313 = vadd.f32 %v68, %v312
  %v314 = vpop.f32.mrf.mxu0
  %v315 = vpop.f32.mrf.mxu0
  %v316 = vadd.f32 %v68, %v315
  %v317 = vpop.f32.mrf.mxu0
  %318 = vmatprep.mubr.bf16.mxu0 0
  %319 = vmatmul.mubr.bf16.gmra.mxu0 %v143
  %v320 = vpop.f32.mrf.mxu0
  %v321 = vadd.f32 %v68, %v320
  %v322 = vpop.f32.mrf.mxu0
  %v323 = vpop.f32.mrf.mxu0
  %v324 = vadd.f32 %v68, %v323
  %v325 = vpop.f32.mrf.mxu0
  %326 = vmatprep.mubr.bf16.mxu0 0
  %327 = vmatmul.mubr.bf16.gmra.mxu0 %v144
  %v328 = vpop.f32.mrf.mxu0
  %v329 = vadd.f32 %v68, %v328
  %v330 = vpop.f32.mrf.mxu0
  %v331 = vpop.f32.mrf.mxu0
  %v332 = vadd.f32 %v68, %v331
  %v333 = vpop.f32.mrf.mxu0
  %334 = vmatprep.mubr.bf16.mxu0 0
  %335 = vmatmul.mubr.bf16.gmra.mxu0 %v145
  %v336 = vpop.f32.mrf.mxu0
  %v337 = vadd.f32 %v68, %v336
  %v338 = vpop.f32.mrf.mxu0
  %v339 = vpop.f32.mrf.mxu0
  %v340 = vadd.f32 %v68, %v339
  %v341 = vpop.f32.mrf.mxu0
  %342 = vmatprep.mubr.bf16.mxu0 0
  %343 = vmatmul.mubr.bf16.gmra.mxu0 %v146
  %v344 = vpop.f32.mrf.mxu0
  %v345 = vadd.f32 %v68, %v344
  %v346 = vpop.f32.mrf.mxu0
  %v347 = vpop.f32.mrf.mxu0
  %v348 = vadd.f32 %v68, %v347
  %v349 = vpop.f32.mrf.mxu0
  %350 = vmatprep.mubr.bf16.mxu0 0
  %351 = vmatmul.mubr.bf16.gmra.mxu0 %v147
  %v352 = vpop.f32.mrf.mxu0
  %v353 = vadd.f32 %v68, %v352
  %v354 = vpop.f32.mrf.mxu0
  %v355 = vpop.f32.mrf.mxu0
  %v356 = vadd.f32 %v68, %v355
  %v357 = vpop.f32.mrf.mxu0
  %358 = vmatprep.mubr.bf16.mxu0 0
  %359 = vmatmul.mubr.bf16.gmra.mxu0 %v148
  %v360 = vpop.f32.mrf.mxu0
  %v361 = vadd.f32 %v68, %v360
  %v362 = vpop.f32.mrf.mxu0
  %v363 = vpop.f32.mrf.mxu0
  %v364 = vadd.f32 %v68, %v363
  %v365 = vpop.f32.mrf.mxu0
  %366 = vmatprep.mubr.bf16.mxu0 0
  %367 = vmatmul.mubr.bf16.gmra.mxu0 %v149
  %v368 = vpop.f32.mrf.mxu0
  %v369 = vadd.f32 %v68, %v368
  %v370 = vpop.f32.mrf.mxu0
  %v371 = vpop.f32.mrf.mxu0
  %v372 = vadd.f32 %v68, %v371
  %v373 = vpop.f32.mrf.mxu0
  %374 = vdwg.mxu0
  %vm375 = vcmp.gt.f32.partialorder %v249, 0.0
  %vm376 = vcmp.gt.f32.partialorder %v252, 0.0
  %vm377 = vcmp.gt.f32.partialorder %v257, 0.0
  %vm378 = vcmp.gt.f32.partialorder %v260, 0.0
  %vm379 = vcmp.gt.f32.partialorder %v265, 0.0
  %vm380 = vcmp.gt.f32.partialorder %v268, 0.0
  %vm381 = vcmp.gt.f32.partialorder %v273, 0.0
  %vm382 = vcmp.gt.f32.partialorder %v276, 0.0
  %vm383 = vcmp.gt.f32.partialorder %v281, 0.0
  %vm384 = vcmp.gt.f32.partialorder %v284, 0.0
  %vm385 = vcmp.gt.f32.partialorder %v289, 0.0
  %vm386 = vcmp.gt.f32.partialorder %v292, 0.0
  %vm387 = vcmp.gt.f32.partialorder %v297, 0.0
  %vm388 = vcmp.gt.f32.partialorder %v300, 0.0
  %vm389 = vcmp.gt.f32.partialorder %v305, 0.0
  %vm390 = vcmp.gt.f32.partialorder %v308, 0.0
  %vm391 = vcmp.gt.f32.partialorder %v313, 0.0
  %vm392 = vcmp.gt.f32.partialorder %v316, 0.0
  %vm393 = vcmp.gt.f32.partialorder %v321, 0.0
  %vm394 = vcmp.gt.f32.partialorder %v324, 0.0
  %vm395 = vcmp.gt.f32.partialorder %v329, 0.0
  %vm396 = vcmp.gt.f32.partialorder %v332, 0.0
  %vm397 = vcmp.gt.f32.partialorder %v337, 0.0
  %vm398 = vcmp.gt.f32.partialorder %v340, 0.0
  %vm399 = vcmp.gt.f32.partialorder %v345, 0.0
  %vm400 = vcmp.gt.f32.partialorder %v348, 0.0
  %vm401 = vcmp.gt.f32.partialorder %v353, 0.0
  %vm402 = vcmp.gt.f32.partialorder %v356, 0.0
  %vm403 = vcmp.gt.f32.partialorder %v361, 0.0
  %vm404 = vcmp.gt.f32.partialorder %v364, 0.0
  %vm405 = vcmp.gt.f32.partialorder %v369, 0.0
  %vm406 = vcmp.gt.f32.partialorder %v372, 0.0
  %v407 = vmul.f32 %v249, 0.2
  %v408 = vmul.f32 %v252, 0.2
  %v409 = vmul.f32 %v257, 0.2
  %v410 = vmul.f32 %v260, 0.2
  %v411 = vmul.f32 %v265, 0.2
  %v412 = vmul.f32 %v268, 0.2
  %v413 = vmul.f32 %v273, 0.2
  %v414 = vmul.f32 %v276, 0.2
  %v415 = vmul.f32 %v281, 0.2
  %v416 = vmul.f32 %v284, 0.2
  %v417 = vmul.f32 %v289, 0.2
  %v418 = vmul.f32 %v292, 0.2
  %v419 = vmul.f32 %v297, 0.2
  %v420 = vmul.f32 %v300, 0.2
  %v421 = vmul.f32 %v305, 0.2
  %v422 = vmul.f32 %v308, 0.2
  %v423 = vmul.f32 %v313, 0.2
  %v424 = vmul.f32 %v316, 0.2
  %v425 = vmul.f32 %v321, 0.2
  %v426 = vmul.f32 %v324, 0.2
  %v427 = vmul.f32 %v329, 0.2
  %v428 = vmul.f32 %v332, 0.2
  %v429 = vmul.f32 %v337, 0.2
  %v430 = vmul.f32 %v340, 0.2
  %v431 = vmul.f32 %v345, 0.2
  %v432 = vmul.f32 %v348, 0.2
  %v433 = vmul.f32 %v353, 0.2
  %v434 = vmul.f32 %v356, 0.2
  %v435 = vmul.f32 %v361, 0.2
  %v436 = vmul.f32 %v364, 0.2
  %v437 = vmul.f32 %v369, 0.2
  %v438 = vmul.f32 %v372, 0.2
  %v439 = vsel %vm375, %v249, %v407
  %v440 = vsel %vm376, %v252, %v408
  %v441 = vsel %vm377, %v257, %v409
  %v442 = vsel %vm378, %v260, %v410
  %v443 = vsel %vm379, %v265, %v411
  %v444 = vsel %vm380, %v268, %v412
  %v445 = vsel %vm381, %v273, %v413
  %v446 = vsel %vm382, %v276, %v414
  %v447 = vsel %vm383, %v281, %v415
  %v448 = vsel %vm384, %v284, %v416
  %v449 = vsel %vm385, %v289, %v417
  %v450 = vsel %vm386, %v292, %v418
  %v451 = vsel %vm387, %v297, %v419
  %v452 = vsel %vm388, %v300, %v420
  %v453 = vsel %vm389, %v305, %v421
  %v454 = vsel %vm390, %v308, %v422
  %v455 = vsel %vm391, %v313, %v423
  %v456 = vsel %vm392, %v316, %v424
  %v457 = vsel %vm393, %v321, %v425
  %v458 = vsel %vm394, %v324, %v426
  %v459 = vsel %vm395, %v329, %v427
  %v460 = vsel %vm396, %v332, %v428
  %v461 = vsel %vm397, %v337, %v429
  %v462 = vsel %vm398, %v340, %v430
  %v463 = vsel %vm399, %v345, %v431
  %v464 = vsel %vm400, %v348, %v432
  %v465 = vsel %vm401, %v353, %v433
  %v466 = vsel %vm402, %v356, %v434
  %v467 = vsel %vm403, %v361, %v435
  %v468 = vsel %vm404, %v364, %v436
  %v469 = vsel %vm405, %v369, %v437
  %v470 = vsel %vm406, %v372, %v438
  %471 = vst [vmem:[%s3] sm:$0xff] %v439
  %472 = vst [vmem:[%s3 + $0x8] sm:$0xff] %v440
  %473 = vst [vmem:[%s3 + $0x10] sm:$0xff] %v441
  %474 = vst [vmem:[%s3 + $0x18] sm:$0xff] %v442
  %475 = vst [vmem:[%s3 + $0x20] sm:$0xff] %v443
  %476 = vst [vmem:[%s3 + $0x28] sm:$0xff] %v444
  %477 = vst [vmem:[%s3 + $0x30] sm:$0xff] %v445
  %478 = vst [vmem:[%s3 + $0x38] sm:$0xff] %v446
  %479 = vst [vmem:[%s3 + $0x40] sm:$0xff] %v447
  %480 = vst [vmem:[%s3 + $0x48] sm:$0xff] %v448
  %481 = vst [vmem:[%s3 + $0x50] sm:$0xff] %v449
  %482 = vst [vmem:[%s3 + $0x58] sm:$0xff] %v450
  %483 = vst [vmem:[%s3 + $0x60] sm:$0xff] %v451
  %484 = vst [vmem:[%s3 + $0x68] sm:$0xff] %v452
  %485 = vst [vmem:[%s3 + $0x70] sm:$0xff] %v453
  %486 = vst [vmem:[%s3 + $0x78] sm:$0xff] %v454
  %487 = vst [vmem:[%s3 + $0x80] sm:$0xff] %v455
  %488 = vst [vmem:[%s3 + $0x88] sm:$0xff] %v456
  %489 = vst [vmem:[%s3 + $0x90] sm:$0xff] %v457
  %490 = vst [vmem:[%s3 + $0x98] sm:$0xff] %v458
  %491 = vst [vmem:[%s3 + $0xa0] sm:$0xff] %v459
  %492 = vst [vmem:[%s3 + $0xa8] sm:$0xff] %v460
  %493 = vst [vmem:[%s3 + $0xb0] sm:$0xff] %v461
  %494 = vst [vmem:[%s3 + $0xb8] sm:$0xff] %v462
  %495 = vst [vmem:[%s3 + $0xc0] sm:$0xff] %v463
  %496 = vst [vmem:[%s3 + $0xc8] sm:$0xff] %v464
  %497 = vst [vmem:[%s3 + $0xd0] sm:$0xff] %v465
  %498 = vst [vmem:[%s3 + $0xd8] sm:$0xff] %v466
  %499 = vst [vmem:[%s3 + $0xe0] sm:$0xff] %v467
  %500 = vst [vmem:[%s3 + $0xe8] sm:$0xff] %v468
  %501 = vst [vmem:[%s3 + $0xf0] sm:$0xff] %v469
  %502 = vst [vmem:[%s3 + $0xf8] sm:$0xff] %v470
  // Predicated region
  $region14: #{edgegan_forward.31} parent=0 // pred_check
    _
  $region15: #{edgegan_forward.31} parent=0 // pred_check_branch
    %504 = sbr.rel (0) target = $region17
  $region16: #{edgegan_forward.31} parent=0 // pred_region
    _
  $region17: #{edgegan_forward.31} parent=0 // pred_fallthru
    _
  // Predicated region
  $region18: #{edgegan_forward.31} parent=0 // pred_check
    _
  $region19: #{edgegan_forward.31} parent=0 // pred_check_branch
    %506 = sbr.rel (0) target = $region21
  $region20: #{edgegan_forward.31} parent=0 // pred_region
    _
  $region21: #{edgegan_forward.31} parent=0 // pred_fallthru
    _

// kernel: edgegan_forward.33
$region0: #{edgegan_forward.33}
  #allocation0 [shape = 'u32[]', space=smem, size = 0x4, offset = 0x4, fixed_abs, tag = 'smem constant byte address 0x4 - core index']
  #allocation1 [shape = 'u32[144,128]{1,0:T(1,128)}', space=vmem, size = 0x12000, scoped, tag = 'internal scratch']
  %s0 = inlined_call_operand.vmem [shape: bf16[8,256], index: 0, kind: input, shape index: {}]
  %s1 = inlined_call_operand.vmem [shape: bf16[256,128], index: 1, kind: input, shape index: {}]
  %s2 = inlined_call_operand.vmem [shape: f32[1,128], index: 2, kind: input, shape index: {}]
  %s3 = inlined_call_operand.vmem [shape: f32[8,128], index: 3, kind: output, shape index: {}]
  %s4 = sld [smem:[#allocation0]]
  $region22: #{edgegan_forward.33} parent=0
    _
  %s6 = ssub.s32 1, %s4
  %s7 = scalar_select 0, %s6, %s4
  // Predicated region
  $region2: #{edgegan_forward.33} parent=0 // pred_check
    _
  $region3: #{edgegan_forward.33} parent=0 // pred_check_branch
    %9 = sbr.rel (0) target = $region5
  $region4: #{edgegan_forward.33} parent=0 // pred_region
    _
  $region5: #{edgegan_forward.33} parent=0 // pred_fallthru
    _
  // Predicated region
  $region6: #{edgegan_forward.33} parent=0 // pred_check
    _
  $region7: #{edgegan_forward.33} parent=0 // pred_check_branch
    %11 = sbr.rel (0) target = $region9
  $region8: #{edgegan_forward.33} parent=0 // pred_region
    _
  $region9: #{edgegan_forward.33} parent=0 // pred_fallthru
    _
  // Predicated region
  $region10: #{edgegan_forward.33} parent=0 // pred_check
    _
  $region11: #{edgegan_forward.33} parent=0 // pred_check_branch
    %13 = sbr.rel (0) target = $region13
  $region12: #{edgegan_forward.33} parent=0 // pred_region
    _
  $region13: #{edgegan_forward.33} parent=0 // pred_fallthru
    _
  %v15 = vld [vmem:[%s0] sm:$0xff]
  %v16 = vld [vmem:[%s1] sm:$0xf]
  %v17 = vld [vmem:[%s1 + $0x4] sm:$0xf]
  %v18 = vld [vmem:[%s1 + $0x8] sm:$0xf]
  %v19 = vld [vmem:[%s1 + $0xc] sm:$0xf]
  %v20 = vld [vmem:[%s1 + $0x10] sm:$0xf]
  %v21 = vld [vmem:[%s1 + $0x14] sm:$0xf]
  %v22 = vld [vmem:[%s1 + $0x18] sm:$0xf]
  %v23 = vld [vmem:[%s1 + $0x1c] sm:$0xf]
  %v24 = vld [vmem:[%s1 + $0x20] sm:$0xf]
  %v25 = vld [vmem:[%s1 + $0x24] sm:$0xf]
  %v26 = vld [vmem:[%s1 + $0x28] sm:$0xf]
  %v27 = vld [vmem:[%s1 + $0x2c] sm:$0xf]
  %v28 = vld [vmem:[%s1 + $0x30] sm:$0xf]
  %v29 = vld [vmem:[%s1 + $0x34] sm:$0xf]
  %v30 = vld [vmem:[%s1 + $0x38] sm:$0xf]
  %v31 = vld [vmem:[%s1 + $0x3c] sm:$0xf]
  %v32 = vld [vmem:[%s1 + $0x40] sm:$0xf]
  %v33 = vld [vmem:[%s1 + $0x44] sm:$0xf]
  %v34 = vld [vmem:[%s1 + $0x48] sm:$0xf]
  %v35 = vld [vmem:[%s1 + $0x4c] sm:$0xf]
  %v36 = vld [vmem:[%s1 + $0x50] sm:$0xf]
  %v37 = vld [vmem:[%s1 + $0x54] sm:$0xf]
  %v38 = vld [vmem:[%s1 + $0x58] sm:$0xf]
  %v39 = vld [vmem:[%s1 + $0x5c] sm:$0xf]
  %v40 = vld [vmem:[%s1 + $0x60] sm:$0xf]
  %v41 = vld [vmem:[%s1 + $0x64] sm:$0xf]
  %v42 = vld [vmem:[%s1 + $0x68] sm:$0xf]
  %v43 = vld [vmem:[%s1 + $0x6c] sm:$0xf]
  %v44 = vld [vmem:[%s1 + $0x70] sm:$0xf]
  %v45 = vld [vmem:[%s1 + $0x74] sm:$0xf]
  %v46 = vld [vmem:[%s1 + $0x78] sm:$0xf]
  %v47 = vld [vmem:[%s1 + $0x7c] sm:$0xf]
  %v48 = vld [vmem:[%s2] sm:$0x1]
  %v50 = vlaneseq
  %v51 = vshrl.u32 %v50, 7
  %v52 = vsub.s32 0, %v51
  %v53 = vrot.slane %v48, %v52
  %v56 = vunpack.c.l.b16 %v15
  %v57 = vunpack.c.h.b16 %v15
  %v58 = vpack.c.b16 %v56, %v56
  %v59 = vpack.c.b16 %v57, %v57
  %v94 = vunpack.c.l.b16 %v16
  %v95 = vunpack.c.l.b16 %v17
  %v96 = vunpack.c.l.b16 %v18
  %v97 = vunpack.c.l.b16 %v19
  %v98 = vunpack.c.l.b16 %v20
  %v99 = vunpack.c.l.b16 %v21
  %v100 = vunpack.c.l.b16 %v22
  %v101 = vunpack.c.l.b16 %v23
  %v102 = vunpack.c.l.b16 %v24
  %v103 = vunpack.c.l.b16 %v25
  %v104 = vunpack.c.l.b16 %v26
  %v105 = vunpack.c.l.b16 %v27
  %v106 = vunpack.c.l.b16 %v28
  %v107 = vunpack.c.l.b16 %v29
  %v108 = vunpack.c.l.b16 %v30
  %v109 = vunpack.c.l.b16 %v31
  %v110 = vunpack.c.l.b16 %v32
  %v111 = vunpack.c.l.b16 %v33
  %v112 = vunpack.c.l.b16 %v34
  %v113 = vunpack.c.l.b16 %v35
  %v114 = vunpack.c.l.b16 %v36
  %v115 = vunpack.c.l.b16 %v37
  %v116 = vunpack.c.l.b16 %v38
  %v117 = vunpack.c.l.b16 %v39
  %v118 = vunpack.c.l.b16 %v40
  %v119 = vunpack.c.l.b16 %v41
  %v120 = vunpack.c.l.b16 %v42
  %v121 = vunpack.c.l.b16 %v43
  %v122 = vunpack.c.l.b16 %v44
  %v123 = vunpack.c.l.b16 %v45
  %v124 = vunpack.c.l.b16 %v46
  %v125 = vunpack.c.l.b16 %v47
  %v126 = vpack.c.b16 %v95, %v94
  %v127 = vpack.c.b16 %v97, %v96
  %v128 = vpack.c.b16 %v99, %v98
  %v129 = vpack.c.b16 %v101, %v100
  %v130 = vpack.c.b16 %v103, %v102
  %v131 = vpack.c.b16 %v105, %v104
  %v132 = vpack.c.b16 %v107, %v106
  %v133 = vpack.c.b16 %v109, %v108
  %v134 = vpack.c.b16 %v111, %v110
  %v135 = vpack.c.b16 %v113, %v112
  %v136 = vpack.c.b16 %v115, %v114
  %v137 = vpack.c.b16 %v117, %v116
  %v138 = vpack.c.b16 %v119, %v118
  %v139 = vpack.c.b16 %v121, %v120
  %v140 = vpack.c.b16 %v123, %v122
  %v141 = vpack.c.b16 %v125, %v124
  %158 = vmatprep.subr.bf16.mxu0 0
  %159 = vmatpush1.bf16.msra.mxu0 %v133
  %160 = vmatprep.subr.bf16.mxu0 0
  %161 = vmatpush1.bf16.msra.mxu0 %v132
  %162 = vmatprep.subr.bf16.mxu0 0
  %163 = vmatpush1.bf16.msra.mxu0 %v131
  %164 = vmatprep.subr.bf16.mxu0 0
  %165 = vmatpush1.bf16.msra.mxu0 %v130
  %166 = vmatprep.subr.bf16.mxu0 0
  %167 = vmatpush1.bf16.msra.mxu0 %v129
  %168 = vmatprep.subr.bf16.mxu0 0
  %169 = vmatpush1.bf16.msra.mxu0 %v128
  %170 = vmatprep.subr.bf16.mxu0 0
  %171 = vmatpush1.bf16.msra.mxu0 %v127
  %172 = vmatprep.subr.bf16.mxu0 0
  %173 = vmatpush1.bf16.msra.mxu0 %v126
  %174 = vmatprep.subr.bf16.mxu0 0
  %175 = vmatpush2.bf16.msra.mxu0 %v141
  %176 = vmatprep.subr.bf16.mxu0 0
  %177 = vmatpush2.bf16.msra.mxu0 %v140
  %178 = vmatprep.subr.bf16.mxu0 0
  %179 = vmatpush2.bf16.msra.mxu0 %v139
  %180 = vmatprep.subr.bf16.mxu0 0
  %181 = vmatpush2.bf16.msra.mxu0 %v138
  %182 = vmatprep.subr.bf16.mxu0 0
  %183 = vmatpush2.bf16.msra.mxu0 %v137
  %184 = vmatprep.subr.bf16.mxu0 0
  %185 = vmatpush2.bf16.msra.mxu0 %v136
  %186 = vmatprep.subr.bf16.mxu0 0
  %187 = vmatpush2.bf16.msra.mxu0 %v135
  %188 = vmatprep.subr.bf16.mxu0 0
  %189 = vmatpush2.bf16.msra.mxu0 %v134
  %190 = vmatprep.mubr.bf16.mxu0 %v59
  %191 = vmatmul.mubr.bf16.gmra.mxu0 %v58
  %v192 = vpop.f32.mrf.mxu0
  %v193 = vadd.f32 %v53, %v192
  %v194 = vpop.f32.mrf.mxu0
  %v195 = vpop.f32.mrf.mxu0
  %v196 = vpop.f32.mrf.mxu0
  %197 = vdwg.mxu0
  %vm198 = vcmp.gt.f32.partialorder %v193, 0.0
  %v199 = vmul.f32 %v193, 0.2
  %v200 = vsel %vm198, %v193, %v199
  %201 = vst [vmem:[%s3] sm:$0xff] %v200
  // Predicated region
  $region14: #{edgegan_forward.33} parent=0 // pred_check
    _
  $region15: #{edgegan_forward.33} parent=0 // pred_check_branch
    %203 = sbr.rel (0) target = $region17
  $region16: #{edgegan_forward.33} parent=0 // pred_region
    _
  $region17: #{edgegan_forward.33} parent=0 // pred_fallthru
    _
  // Predicated region
  $region18: #{edgegan_forward.33} parent=0 // pred_check
    _
  $region19: #{edgegan_forward.33} parent=0 // pred_check_branch
    %205 = sbr.rel (0) target = $region21
  $region20: #{edgegan_forward.33} parent=0 // pred_region
    _
  $region21: #{edgegan_forward.33} parent=0 // pred_fallthru
    _

// kernel: edgegan_forward.22
$region0: #{edgegan_forward.22}
  #allocation0 [shape = 'u32[]', space=smem, size = 0x4, offset = 0x4, fixed_abs, tag = 'smem constant byte address 0x4 - core index']
  #allocation1 [shape = 'u32[144,128]{1,0:T(1,128)}', space=vmem, size = 0x12000, scoped, tag = 'internal scratch']
  %s0 = inlined_call_operand.vmem [shape: bf16[512,128], index: 0, kind: input, shape index: {}]
  %s1 = inlined_call_operand.vmem [shape: bf16[128,128], index: 1, kind: input, shape index: {}]
  %s2 = inlined_call_operand.vmem [shape: f32[1,128], index: 2, kind: input, shape index: {}]
  %s3 = inlined_call_operand.vmem [shape: f32[512,128], index: 3, kind: output, shape index: {}]
  %s4 = sld [smem:[#allocation0]]
  $region45: #{edgegan_forward.22} parent=0
    _
  %s6 = ssub.s32 1, %s4
  %s7 = scalar_select 0, %s6, %s4
  loop: start=0, step=1, limit=4
  $region2: #{edgegan_forward.22} parent=0 // loop_pre_header
    _
  $region3: #{edgegan_forward.22} parent=0 // loop_header
    %s9 = sphi 0, %s13
    %p10 = scmp.ge.s32.totalorder %s9, 4
    %s16 = sphi 0, %s28
    %s17 = sphi 0, %s24
    %s18 = sphi 0, %s16
    %s19 = sphi 0, %s17
    %s20 = sphi 0, %s18
    %s21 = sphi 0, %s19
    %s31 = sphi 0, %s33
    %s34 = sphi 0, %s31
    %s35 = sphi 0, %s34
    %s51 = sphi 0, %s35
    %s57 = sphi 0, %s59
    %s60 = sphi 0, %s57
    %s61 = sphi 0, %s60
    %s77 = sphi 0, %s61
    %s83 = sphi 0, %s85
    %s86 = sphi 0, %s83
    %s87 = sphi 0, %s86
    %s103 = sphi 0, %s87
    %s111 = sphi 0, %s113
    %s114 = sphi 0, %s111
    %s115 = sphi 0, %s114
    %s131 = sphi 0, %s115
  $region4: #{edgegan_forward.22} parent=0 // loop_header_branch
    %12 = sbr.rel (%p10) target = $region8
  $region5: #{edgegan_forward.22} parent=0 // loop_body
    %s14 = ssub.s32 %s9, 1
    %s15 = ssub.s32 %s9, 2
    %s22 = sadd.s32 1, %s17
    %p23 = scmp.ge.s32.totalorder %s22, 1
    %s24 = scalar_select %p23, 0, %s22
    %s25 = sadd.s32 1, %s16
    %s26 = scalar_select %p23, %s25, %s16
    %p27 = scmp.ge.s32.totalorder %s26, 2
    %s28 = scalar_select %p27, 0, %s26
    %s29 = ssub.s32 %s16, %s28
    %p30 = scmp.eq.s32.totalorder %s29, 0
    %s32 = sadd.s32 %s31, 1
    %s33 = scalar_select %p30, %s31, %s32
    %p36 = pneg %p30
    %p37 = scmp.eq.s32.totalorder %s9, 1
    %p38 = por %p36, %p37
    %p39 = scmp.ne.s32.totalorder %s31, %s34
    %p40 = scmp.eq.s32.totalorder %s9, 0
    %p41 = por %p39, %p40
    %p42 = scmp.ne.s32.totalorder %s31, %s34
    %p43 = scmp.eq.s32.totalorder %s14, 1
    %p44 = por %p42, %p43
    %p45 = scmp.ne.s32.totalorder %s34, %s35
    %p46 = scmp.eq.s32.totalorder %s14, 0
    %p47 = por %p45, %p46
    %p48 = scmp.ne.s32.totalorder %s34, %s35
    %p49 = scmp.eq.s32.totalorder %s15, 1
    %p50 = por %p48, %p49
    %p52 = scmp.ne.s32.totalorder %s35, %s51
    %p53 = scmp.eq.s32.totalorder %s15, 0
    %p54 = por %p52, %p53
    %s55 = ssub.s32 %s17, %s24
    %p56 = scmp.eq.s32.totalorder %s55, 0
    %s58 = sadd.s32 %s57, 1
    %s59 = scalar_select %p56, %s57, %s58
    %p62 = pneg %p56
    %p63 = scmp.eq.s32.totalorder %s9, 1
    %p64 = por %p62, %p63
    %p65 = scmp.ne.s32.totalorder %s57, %s60
    %p66 = scmp.eq.s32.totalorder %s9, 0
    %p67 = por %p65, %p66
    %p68 = scmp.ne.s32.totalorder %s57, %s60
    %p69 = scmp.eq.s32.totalorder %s14, 1
    %p70 = por %p68, %p69
    %p71 = scmp.ne.s32.totalorder %s60, %s61
    %p72 = scmp.eq.s32.totalorder %s14, 0
    %p73 = por %p71, %p72
    %p74 = scmp.ne.s32.totalorder %s60, %s61
    %p75 = scmp.eq.s32.totalorder %s15, 1
    %p76 = por %p74, %p75
    %p78 = scmp.ne.s32.totalorder %s61, %s77
    %p79 = scmp.eq.s32.totalorder %s15, 0
    %p80 = por %p78, %p79
    %s81 = ssub.s32 %s17, %s24
    %p82 = scmp.eq.s32.totalorder %s81, 0
    %s84 = sadd.s32 %s83, 1
    %s85 = scalar_select %p82, %s83, %s84
    %p88 = pneg %p82
    %p89 = scmp.eq.s32.totalorder %s9, 1
    %p90 = por %p88, %p89
    %p91 = scmp.ne.s32.totalorder %s83, %s86
    %p92 = scmp.eq.s32.totalorder %s9, 0
    %p93 = por %p91, %p92
    %p94 = scmp.ne.s32.totalorder %s83, %s86
    %p95 = scmp.eq.s32.totalorder %s14, 1
    %p96 = por %p94, %p95
    %p97 = scmp.ne.s32.totalorder %s86, %s87
    %p98 = scmp.eq.s32.totalorder %s14, 0
    %p99 = por %p97, %p98
    %p100 = scmp.ne.s32.totalorder %s86, %s87
    %p101 = scmp.eq.s32.totalorder %s15, 1
    %p102 = por %p100, %p101
    %p104 = scmp.ne.s32.totalorder %s87, %s103
    %p105 = scmp.eq.s32.totalorder %s15, 0
    %p106 = por %p104, %p105
    %s107 = ssub.s32 %s16, %s28
    %s108 = ssub.s32 %s17, %s24
    %s109 = sor.u32 %s107, %s108
    %p110 = scmp.eq.s32.totalorder %s109, 0
    %s112 = sadd.s32 %s111, 1
    %s113 = scalar_select %p110, %s111, %s112
    %p116 = pneg %p110
    %p117 = scmp.eq.s32.totalorder %s9, 1
    %p118 = por %p116, %p117
    %p119 = scmp.ne.s32.totalorder %s111, %s114
    %p120 = scmp.eq.s32.totalorder %s9, 0
    %p121 = por %p119, %p120
    %p122 = scmp.ne.s32.totalorder %s111, %s114
    %p123 = scmp.eq.s32.totalorder %s14, 1
    %p124 = por %p122, %p123
    %p125 = scmp.ne.s32.totalorder %s114, %s115
    %p126 = scmp.eq.s32.totalorder %s14, 0
    %p127 = por %p125, %p126
    %p128 = scmp.ne.s32.totalorder %s114, %s115
    %p129 = scmp.eq.s32.totalorder %s15, 1
    %p130 = por %p128, %p129
    %p132 = scmp.ne.s32.totalorder %s115, %s131
    %p133 = scmp.eq.s32.totalorder %s15, 0
    %p134 = por %p132, %p133
    %p135 = scmp.le.s32.totalorder 1, %s9
    %p136 = scmp.lt.s32.totalorder %s9, 3
    %p137 = pnand %p135, %p136
    %p138 = pneg %p137
    // Predicated region
    $region9: #{edgegan_forward.22} parent=5 // pred_check
      _
    $region10: #{edgegan_forward.22} parent=5 // pred_check_branch
      %140 = sbr.rel (%p137) target = $region12
    $region11: #{edgegan_forward.22} parent=5 // pred_region
      %s141 = ssub.s32 %s9, 1
      // Predicated region
      $region13: #{edgegan_forward.22} parent=11 // pred_check
        %p142 = pneg %p73
      $region14: #{edgegan_forward.22} parent=11 // pred_check_branch
        %144 = sbr.rel (%p142) target = $region16
      $region15: #{edgegan_forward.22} parent=11 // pred_region
        %p145 = scmp.lt.s32.totalorder %s19, 0
        %s146 = scalar_select %p145, %s19, 0
        %s147 = smul.addr %s146, 4
        %s148 = scalar_lea.vmem %s1, %s147
      $region16: #{edgegan_forward.22} parent=11 // pred_fallthru
        _
      // Predicated region
      $region17: #{edgegan_forward.22} parent=11 // pred_check
        %p149 = pneg %p99
      $region18: #{edgegan_forward.22} parent=11 // pred_check_branch
        %151 = sbr.rel (%p149) target = $region20
      $region19: #{edgegan_forward.22} parent=11 // pred_region
        %p152 = scmp.lt.s32.totalorder %s19, 0
        %s153 = scalar_select %p152, %s19, 0
        %s154 = scalar_lea.vmem %s2, %s153
      $region20: #{edgegan_forward.22} parent=11 // pred_fallthru
        _
    $region12: #{edgegan_forward.22} parent=5 // pred_fallthru
      _
    %p155 = scmp.lt.s32.totalorder %s9, 2
    // Predicated region
    $region21: #{edgegan_forward.22} parent=5 // pred_check
      %p156 = pneg %p155
    $region22: #{edgegan_forward.22} parent=5 // pred_check_branch
      %158 = sbr.rel (%p156) target = $region24
    $region23: #{edgegan_forward.22} parent=5 // pred_region
      // Predicated region
      $region25: #{edgegan_forward.22} parent=23 // pred_check
        %p159 = pneg %p41
      $region26: #{edgegan_forward.22} parent=23 // pred_check_branch
        %161 = sbr.rel (%p159) target = $region28
      $region27: #{edgegan_forward.22} parent=23 // pred_region
        %s162 = smul.u32 32, %s16
        %p163 = scmp.lt.s32.totalorder %s162, 63
        %s164 = scalar_select %p163, %s162, 63
        %s165 = smul.addr %s164, 4
        %s166 = scalar_lea.vmem %s0, %s165
        %s167 = smul.u32 32, %s16
      $region28: #{edgegan_forward.22} parent=23 // pred_fallthru
        _
    $region24: #{edgegan_forward.22} parent=5 // pred_fallthru
      _
    %p168 = scmp.le.s32.totalorder 1, %s9
    %p169 = scmp.lt.s32.totalorder %s9, 3
    %p170 = pnand %p168, %p169
    %p171 = pneg %p170
    // Predicated region
    $region29: #{edgegan_forward.22} parent=5 // pred_check
      _
    $region30: #{edgegan_forward.22} parent=5 // pred_check_branch
      %173 = sbr.rel (%p170) target = $region32
    $region31: #{edgegan_forward.22} parent=5 // pred_region
      %s174 = ssub.s32 %s9, 1
      %s175 = smul.u32 32, %s18
      %p176 = scmp.lt.s32.totalorder %s175, 63
      %s177 = scalar_select %p176, %s175, 63
      %s178 = smul.addr %s177, 4
      %s179 = scalar_lea.vmem %s0, %s178
      %p180 = pneg %p47
      %p181 = pneg %p44
      %p182 = scmp.lt.s32.totalorder %s19, 0
      %s183 = scalar_select %p182, %s19, 0
      %s184 = smul.addr %s183, 4
      %s185 = scalar_lea.vmem %s1, %s184
      %p186 = pneg %p73
      %p187 = pneg %p70
      %p188 = scmp.lt.s32.totalorder %s19, 0
      %s189 = scalar_select %p188, %s19, 0
      %s190 = scalar_lea.vmem %s2, %s189
      %p191 = pneg %p99
      %p192 = pneg %p96
      %p193 = pneg %p127
      %p194 = pneg %p124
      %s195 = smul.u32 32, %s18
      %p196 = scmp.lt.s32.totalorder %s195, 63
      %s197 = scalar_select %p196, %s195, 63
      %p198 = scmp.lt.s32.totalorder %s19, 0
      %s199 = scalar_select %p198, %s19, 0
      %s200 = sadd.s32 %s199, %s197
      %s201 = smul.addr %s200, 8
      %s202 = scalar_lea.vmem %s3, %s201
      %s203 = smul.u32 32, %s18
      %p204 = scmp.lt.s32.totalorder %s203, 63
      %s205 = scalar_select %p204, %s203, 63
      %s206 = smul.addr %s205, 4
      %s207 = scalar_lea.vmem %s0, %s206
      %s208 = smul.u32 32, %s18
      %p209 = scmp.lt.s32.totalorder %s19, 0
      %s210 = scalar_select %p209, %s19, 0
      %s211 = smul.addr %s210, 4
      %s212 = scalar_lea.vmem %s1, %s211
      %p213 = scmp.lt.s32.totalorder %s19, 0
      %s214 = scalar_select %p213, %s19, 0
      %s215 = scalar_lea.vmem %s2, %s214
      %s216 = smul.u32 32, %s18
      %p217 = scmp.lt.s32.totalorder %s216, 63
      %s218 = scalar_select %p217, %s216, 63
      %p219 = scmp.lt.s32.totalorder %s19, 0
      %s220 = scalar_select %p219, %s19, 0
      %s221 = sadd.s32 %s220, %s218
      %s222 = smul.addr %s221, 8
      %s223 = scalar_lea.vmem %s3, %s222
      %s224 = smul.u32 32, %s18
      %v226 = vld [vmem:[%s207] sm:$0xf]
      %v227 = vld [vmem:[%s207 + $0x4] sm:$0xf]
      %v228 = vld [vmem:[%s207 + $0x8] sm:$0xf]
      %v229 = vld [vmem:[%s207 + $0xc] sm:$0xf]
      %v230 = vld [vmem:[%s207 + $0x10] sm:$0xf]
      %v231 = vld [vmem:[%s207 + $0x14] sm:$0xf]
      %v232 = vld [vmem:[%s207 + $0x18] sm:$0xf]
      %v233 = vld [vmem:[%s207 + $0x1c] sm:$0xf]
      %v234 = vld [vmem:[%s207 + $0x20] sm:$0xf]
      %v235 = vld [vmem:[%s207 + $0x24] sm:$0xf]
      %v236 = vld [vmem:[%s207 + $0x28] sm:$0xf]
      %v237 = vld [vmem:[%s207 + $0x2c] sm:$0xf]
      %v238 = vld [vmem:[%s207 + $0x30] sm:$0xf]
      %v239 = vld [vmem:[%s207 + $0x34] sm:$0xf]
      %v240 = vld [vmem:[%s207 + $0x38] sm:$0xf]
      %v241 = vld [vmem:[%s207 + $0x3c] sm:$0xf]
      %v242 = vld [vmem:[%s207 + $0x40] sm:$0xf]
      %v243 = vld [vmem:[%s207 + $0x44] sm:$0xf]
      %v244 = vld [vmem:[%s207 + $0x48] sm:$0xf]
      %v245 = vld [vmem:[%s207 + $0x4c] sm:$0xf]
      %v246 = vld [vmem:[%s207 + $0x50] sm:$0xf]
      %v247 = vld [vmem:[%s207 + $0x54] sm:$0xf]
      %v248 = vld [vmem:[%s207 + $0x58] sm:$0xf]
      %v249 = vld [vmem:[%s207 + $0x5c] sm:$0xf]
      %v250 = vld [vmem:[%s207 + $0x60] sm:$0xf]
      %v251 = vld [vmem:[%s207 + $0x64] sm:$0xf]
      %v252 = vld [vmem:[%s207 + $0x68] sm:$0xf]
      %v253 = vld [vmem:[%s207 + $0x6c] sm:$0xf]
      %v254 = vld [vmem:[%s207 + $0x70] sm:$0xf]
      %v255 = vld [vmem:[%s207 + $0x74] sm:$0xf]
      %v256 = vld [vmem:[%s207 + $0x78] sm:$0xf]
      %v257 = vld [vmem:[%s207 + $0x7c] sm:$0xf]
      %v258 = vld [vmem:[%s212] sm:$0xf]
      %v259 = vld [vmem:[%s212 + $0x4] sm:$0xf]
      %v260 = vld [vmem:[%s212 + $0x8] sm:$0xf]
      %v261 = vld [vmem:[%s212 + $0xc] sm:$0xf]
      %v262 = vld [vmem:[%s212 + $0x10] sm:$0xf]
      %v263 = vld [vmem:[%s212 + $0x14] sm:$0xf]
      %v264 = vld [vmem:[%s212 + $0x18] sm:$0xf]
      %v265 = vld [vmem:[%s212 + $0x1c] sm:$0xf]
      %v266 = vld [vmem:[%s212 + $0x20] sm:$0xf]
      %v267 = vld [vmem:[%s212 + $0x24] sm:$0xf]
      %v268 = vld [vmem:[%s212 + $0x28] sm:$0xf]
      %v269 = vld [vmem:[%s212 + $0x2c] sm:$0xf]
      %v270 = vld [vmem:[%s212 + $0x30] sm:$0xf]
      %v271 = vld [vmem:[%s212 + $0x34] sm:$0xf]
      %v272 = vld [vmem:[%s212 + $0x38] sm:$0xf]
      %v273 = vld [vmem:[%s212 + $0x3c] sm:$0xf]
      %v274 = vld [vmem:[%s215] sm:$0x1]
      %v276 = vlaneseq
      %v277 = vshrl.u32 %v276, 7
      %v278 = vsub.s32 0, %v277
      %v279 = vrot.slane %v274, %v278
      %v313 = vunpack.c.l.b16 %v226
      %v314 = vunpack.c.l.b16 %v227
      %v315 = vunpack.c.l.b16 %v228
      %v316 = vunpack.c.l.b16 %v229
      %v317 = vunpack.c.l.b16 %v230
      %v318 = vunpack.c.l.b16 %v231
      %v319 = vunpack.c.l.b16 %v232
      %v320 = vunpack.c.l.b16 %v233
      %v321 = vunpack.c.l.b16 %v234
      %v322 = vunpack.c.l.b16 %v235
      %v323 = vunpack.c.l.b16 %v236
      %v324 = vunpack.c.l.b16 %v237
      %v325 = vunpack.c.l.b16 %v238
      %v326 = vunpack.c.l.b16 %v239
      %v327 = vunpack.c.l.b16 %v240
      %v328 = vunpack.c.l.b16 %v241
      %v329 = vunpack.c.l.b16 %v242
      %v330 = vunpack.c.l.b16 %v243
      %v331 = vunpack.c.l.b16 %v244
      %v332 = vunpack.c.l.b16 %v245
      %v333 = vunpack.c.l.b16 %v246
      %v334 = vunpack.c.l.b16 %v247
      %v335 = vunpack.c.l.b16 %v248
      %v336 = vunpack.c.l.b16 %v249
      %v337 = vunpack.c.l.b16 %v250
      %v338 = vunpack.c.l.b16 %v251
      %v339 = vunpack.c.l.b16 %v252
      %v340 = vunpack.c.l.b16 %v253
      %v341 = vunpack.c.l.b16 %v254
      %v342 = vunpack.c.l.b16 %v255
      %v343 = vunpack.c.l.b16 %v256
      %v344 = vunpack.c.l.b16 %v257
      %v345 = vpack.c.b16 %v314, %v313
      %v346 = vpack.c.b16 %v316, %v315
      %v347 = vpack.c.b16 %v318, %v317
      %v348 = vpack.c.b16 %v320, %v319
      %v349 = vpack.c.b16 %v322, %v321
      %v350 = vpack.c.b16 %v324, %v323
      %v351 = vpack.c.b16 %v326, %v325
      %v352 = vpack.c.b16 %v328, %v327
      %v353 = vpack.c.b16 %v330, %v329
      %v354 = vpack.c.b16 %v332, %v331
      %v355 = vpack.c.b16 %v334, %v333
      %v356 = vpack.c.b16 %v336, %v335
      %v357 = vpack.c.b16 %v338, %v337
      %v358 = vpack.c.b16 %v340, %v339
      %v359 = vpack.c.b16 %v342, %v341
      %v360 = vpack.c.b16 %v344, %v343
      %v393 = vunpack.c.l.b16 %v258
      %v394 = vunpack.c.l.b16 %v259
      %v395 = vunpack.c.l.b16 %v260
      %v396 = vunpack.c.l.b16 %v261
      %v397 = vunpack.c.l.b16 %v262
      %v398 = vunpack.c.l.b16 %v263
      %v399 = vunpack.c.l.b16 %v264
      %v400 = vunpack.c.l.b16 %v265
      %v401 = vunpack.c.l.b16 %v266
      %v402 = vunpack.c.l.b16 %v267
      %v403 = vunpack.c.l.b16 %v268
      %v404 = vunpack.c.l.b16 %v269
      %v405 = vunpack.c.l.b16 %v270
      %v406 = vunpack.c.l.b16 %v271
      %v407 = vunpack.c.l.b16 %v272
      %v408 = vunpack.c.l.b16 %v273
      %v409 = vpack.c.b16 %v394, %v393
      %v410 = vpack.c.b16 %v396, %v395
      %v411 = vpack.c.b16 %v398, %v397
      %v412 = vpack.c.b16 %v400, %v399
      %v413 = vpack.c.b16 %v402, %v401
      %v414 = vpack.c.b16 %v404, %v403
      %v415 = vpack.c.b16 %v406, %v405
      %v416 = vpack.c.b16 %v408, %v407
      %425 = vmatprep.subr.bf16.mxu0 0
      %426 = vmatpush1.bf16.msra.mxu0 %v416
      %427 = vmatprep.subr.bf16.mxu0 0
      %428 = vmatpush1.bf16.msra.mxu0 %v415
      %429 = vmatprep.subr.bf16.mxu0 0
      %430 = vmatpush1.bf16.msra.mxu0 %v414
      %431 = vmatprep.subr.bf16.mxu0 0
      %432 = vmatpush1.bf16.msra.mxu0 %v413
      %433 = vmatprep.subr.bf16.mxu0 0
      %434 = vmatpush1.bf16.msra.mxu0 %v412
      %435 = vmatprep.subr.bf16.mxu0 0
      %436 = vmatpush1.bf16.msra.mxu0 %v411
      %437 = vmatprep.subr.bf16.mxu0 0
      %438 = vmatpush1.bf16.msra.mxu0 %v410
      %439 = vmatprep.subr.bf16.mxu0 0
      %440 = vmatpush1.bf16.msra.mxu0 %v409
      %441 = vmatprep.subr.bf16.mxu0 0
      %442 = vmatpush2.bf16.msra.mxu0 0
      %443 = vmatprep.subr.bf16.mxu0 0
      %444 = vmatpush2.bf16.msra.mxu0 0
      %445 = vmatprep.subr.bf16.mxu0 0
      %446 = vmatpush2.bf16.msra.mxu0 0
      %447 = vmatprep.subr.bf16.mxu0 0
      %448 = vmatpush2.bf16.msra.mxu0 0
      %449 = vmatprep.subr.bf16.mxu0 0
      %450 = vmatpush2.bf16.msra.mxu0 0
      %451 = vmatprep.subr.bf16.mxu0 0
      %452 = vmatpush2.bf16.msra.mxu0 0
      %453 = vmatprep.subr.bf16.mxu0 0
      %454 = vmatpush2.bf16.msra.mxu0 0
      %455 = vmatprep.subr.bf16.mxu0 0
      %456 = vmatpush2.bf16.msra.mxu0 0
      %457 = vmatprep.mubr.bf16.mxu0 0
      %458 = vmatmul.mubr.bf16.gmra.mxu0 %v345
      %v459 = vpop.f32.mrf.mxu0
      %v460 = vadd.f32 %v279, %v459
      %v461 = vpop.f32.mrf.mxu0
      %v462 = vpop.f32.mrf.mxu0
      %v463 = vadd.f32 %v279, %v462
      %v464 = vpop.f32.mrf.mxu0
      %465 = vmatprep.mubr.bf16.mxu0 0
      %466 = vmatmul.mubr.bf16.gmra.mxu0 %v346
      %v467 = vpop.f32.mrf.mxu0
      %v468 = vadd.f32 %v279, %v467
      %v469 = vpop.f32.mrf.mxu0
      %v470 = vpop.f32.mrf.mxu0
      %v471 = vadd.f32 %v279, %v470
      %v472 = vpop.f32.mrf.mxu0
      %473 = vmatprep.mubr.bf16.mxu0 0
      %474 = vmatmul.mubr.bf16.gmra.mxu0 %v347
      %v475 = vpop.f32.mrf.mxu0
      %v476 = vadd.f32 %v279, %v475
      %v477 = vpop.f32.mrf.mxu0
      %v478 = vpop.f32.mrf.mxu0
      %v479 = vadd.f32 %v279, %v478
      %v480 = vpop.f32.mrf.mxu0
      %481 = vmatprep.mubr.bf16.mxu0 0
      %482 = vmatmul.mubr.bf16.gmra.mxu0 %v348
      %v483 = vpop.f32.mrf.mxu0
      %v484 = vadd.f32 %v279, %v483
      %v485 = vpop.f32.mrf.mxu0
      %v486 = vpop.f32.mrf.mxu0
      %v487 = vadd.f32 %v279, %v486
      %v488 = vpop.f32.mrf.mxu0
      %489 = vmatprep.mubr.bf16.mxu0 0
      %490 = vmatmul.mubr.bf16.gmra.mxu0 %v349
      %v491 = vpop.f32.mrf.mxu0
      %v492 = vadd.f32 %v279, %v491
      %v493 = vpop.f32.mrf.mxu0
      %v494 = vpop.f32.mrf.mxu0
      %v495 = vadd.f32 %v279, %v494
      %v496 = vpop.f32.mrf.mxu0
      %497 = vmatprep.mubr.bf16.mxu0 0
      %498 = vmatmul.mubr.bf16.gmra.mxu0 %v350
      %v499 = vpop.f32.mrf.mxu0
      %v500 = vadd.f32 %v279, %v499
      %v501 = vpop.f32.mrf.mxu0
      %v502 = vpop.f32.mrf.mxu0
      %v503 = vadd.f32 %v279, %v502
      %v504 = vpop.f32.mrf.mxu0
      %505 = vmatprep.mubr.bf16.mxu0 0
      %506 = vmatmul.mubr.bf16.gmra.mxu0 %v351
      %v507 = vpop.f32.mrf.mxu0
      %v508 = vadd.f32 %v279, %v507
      %v509 = vpop.f32.mrf.mxu0
      %v510 = vpop.f32.mrf.mxu0
      %v511 = vadd.f32 %v279, %v510
      %v512 = vpop.f32.mrf.mxu0
      %513 = vmatprep.mubr.bf16.mxu0 0
      %514 = vmatmul.mubr.bf16.gmra.mxu0 %v352
      %v515 = vpop.f32.mrf.mxu0
      %v516 = vadd.f32 %v279, %v515
      %v517 = vpop.f32.mrf.mxu0
      %v518 = vpop.f32.mrf.mxu0
      %v519 = vadd.f32 %v279, %v518
      %v520 = vpop.f32.mrf.mxu0
      %521 = vmatprep.mubr.bf16.mxu0 0
      %522 = vmatmul.mubr.bf16.gmra.mxu0 %v353
      %v523 = vpop.f32.mrf.mxu0
      %v524 = vadd.f32 %v279, %v523
      %v525 = vpop.f32.mrf.mxu0
      %v526 = vpop.f32.mrf.mxu0
      %v527 = vadd.f32 %v279, %v526
      %v528 = vpop.f32.mrf.mxu0
      %529 = vmatprep.mubr.bf16.mxu0 0
      %530 = vmatmul.mubr.bf16.gmra.mxu0 %v354
      %v531 = vpop.f32.mrf.mxu0
      %v532 = vadd.f32 %v279, %v531
      %v533 = vpop.f32.mrf.mxu0
      %v534 = vpop.f32.mrf.mxu0
      %v535 = vadd.f32 %v279, %v534
      %v536 = vpop.f32.mrf.mxu0
      %537 = vmatprep.mubr.bf16.mxu0 0
      %538 = vmatmul.mubr.bf16.gmra.mxu0 %v355
      %v539 = vpop.f32.mrf.mxu0
      %v540 = vadd.f32 %v279, %v539
      %v541 = vpop.f32.mrf.mxu0
      %v542 = vpop.f32.mrf.mxu0
      %v543 = vadd.f32 %v279, %v542
      %v544 = vpop.f32.mrf.mxu0
      %545 = vmatprep.mubr.bf16.mxu0 0
      %546 = vmatmul.mubr.bf16.gmra.mxu0 %v356
      %v547 = vpop.f32.mrf.mxu0
      %v548 = vadd.f32 %v279, %v547
      %v549 = vpop.f32.mrf.mxu0
      %v550 = vpop.f32.mrf.mxu0
      %v551 = vadd.f32 %v279, %v550
      %v552 = vpop.f32.mrf.mxu0
      %553 = vmatprep.mubr.bf16.mxu0 0
      %554 = vmatmul.mubr.bf16.gmra.mxu0 %v357
      %v555 = vpop.f32.mrf.mxu0
      %v556 = vadd.f32 %v279, %v555
      %v557 = vpop.f32.mrf.mxu0
      %v558 = vpop.f32.mrf.mxu0
      %v559 = vadd.f32 %v279, %v558
      %v560 = vpop.f32.mrf.mxu0
      %561 = vmatprep.mubr.bf16.mxu0 0
      %562 = vmatmul.mubr.bf16.gmra.mxu0 %v358
      %v563 = vpop.f32.mrf.mxu0
      %v564 = vadd.f32 %v279, %v563
      %v565 = vpop.f32.mrf.mxu0
      %v566 = vpop.f32.mrf.mxu0
      %v567 = vadd.f32 %v279, %v566
      %v568 = vpop.f32.mrf.mxu0
      %569 = vmatprep.mubr.bf16.mxu0 0
      %570 = vmatmul.mubr.bf16.gmra.mxu0 %v359
      %v571 = vpop.f32.mrf.mxu0
      %v572 = vadd.f32 %v279, %v571
      %v573 = vpop.f32.mrf.mxu0
      %v574 = vpop.f32.mrf.mxu0
      %v575 = vadd.f32 %v279, %v574
      %v576 = vpop.f32.mrf.mxu0
      %577 = vmatprep.mubr.bf16.mxu0 0
      %578 = vmatmul.mubr.bf16.gmra.mxu0 %v360
      %v579 = vpop.f32.mrf.mxu0
      %v580 = vadd.f32 %v279, %v579
      %v581 = vpop.f32.mrf.mxu0
      %v582 = vpop.f32.mrf.mxu0
      %v583 = vadd.f32 %v279, %v582
      %v584 = vpop.f32.mrf.mxu0
      %585 = vdwg.mxu0
      %vm586 = vcmp.gt.f32.partialorder %v460, 0.0
      %vm587 = vcmp.gt.f32.partialorder %v463, 0.0
      %vm588 = vcmp.gt.f32.partialorder %v468, 0.0
      %vm589 = vcmp.gt.f32.partialorder %v471, 0.0
      %vm590 = vcmp.gt.f32.partialorder %v476, 0.0
      %vm591 = vcmp.gt.f32.partialorder %v479, 0.0
      %vm592 = vcmp.gt.f32.partialorder %v484, 0.0
      %vm593 = vcmp.gt.f32.partialorder %v487, 0.0
      %vm594 = vcmp.gt.f32.partialorder %v492, 0.0
      %vm595 = vcmp.gt.f32.partialorder %v495, 0.0
      %vm596 = vcmp.gt.f32.partialorder %v500, 0.0
      %vm597 = vcmp.gt.f32.partialorder %v503, 0.0
      %vm598 = vcmp.gt.f32.partialorder %v508, 0.0
      %vm599 = vcmp.gt.f32.partialorder %v511, 0.0
      %vm600 = vcmp.gt.f32.partialorder %v516, 0.0
      %vm601 = vcmp.gt.f32.partialorder %v519, 0.0
      %vm602 = vcmp.gt.f32.partialorder %v524, 0.0
      %vm603 = vcmp.gt.f32.partialorder %v527, 0.0
      %vm604 = vcmp.gt.f32.partialorder %v532, 0.0
      %vm605 = vcmp.gt.f32.partialorder %v535, 0.0
      %vm606 = vcmp.gt.f32.partialorder %v540, 0.0
      %vm607 = vcmp.gt.f32.partialorder %v543, 0.0
      %vm608 = vcmp.gt.f32.partialorder %v548, 0.0
      %vm609 = vcmp.gt.f32.partialorder %v551, 0.0
      %vm610 = vcmp.gt.f32.partialorder %v556, 0.0
      %vm611 = vcmp.gt.f32.partialorder %v559, 0.0
      %vm612 = vcmp.gt.f32.partialorder %v564, 0.0
      %vm613 = vcmp.gt.f32.partialorder %v567, 0.0
      %vm614 = vcmp.gt.f32.partialorder %v572, 0.0
      %vm615 = vcmp.gt.f32.partialorder %v575, 0.0
      %vm616 = vcmp.gt.f32.partialorder %v580, 0.0
      %vm617 = vcmp.gt.f32.partialorder %v583, 0.0
      %v618 = vmul.f32 %v460, 0.2
      %v619 = vmul.f32 %v463, 0.2
      %v620 = vmul.f32 %v468, 0.2
      %v621 = vmul.f32 %v471, 0.2
      %v622 = vmul.f32 %v476, 0.2
      %v623 = vmul.f32 %v479, 0.2
      %v624 = vmul.f32 %v484, 0.2
      %v625 = vmul.f32 %v487, 0.2
      %v626 = vmul.f32 %v492, 0.2
      %v627 = vmul.f32 %v495, 0.2
      %v628 = vmul.f32 %v500, 0.2
      %v629 = vmul.f32 %v503, 0.2
      %v630 = vmul.f32 %v508, 0.2
      %v631 = vmul.f32 %v511, 0.2
      %v632 = vmul.f32 %v516, 0.2
      %v633 = vmul.f32 %v519, 0.2
      %v634 = vmul.f32 %v524, 0.2
      %v635 = vmul.f32 %v527, 0.2
      %v636 = vmul.f32 %v532, 0.2
      %v637 = vmul.f32 %v535, 0.2
      %v638 = vmul.f32 %v540, 0.2
      %v639 = vmul.f32 %v543, 0.2
      %v640 = vmul.f32 %v548, 0.2
      %v641 = vmul.f32 %v551, 0.2
      %v642 = vmul.f32 %v556, 0.2
      %v643 = vmul.f32 %v559, 0.2
      %v644 = vmul.f32 %v564, 0.2
      %v645 = vmul.f32 %v567, 0.2
      %v646 = vmul.f32 %v572, 0.2
      %v647 = vmul.f32 %v575, 0.2
      %v648 = vmul.f32 %v580, 0.2
      %v649 = vmul.f32 %v583, 0.2
      %v650 = vsel %vm586, %v460, %v618
      %v651 = vsel %vm587, %v463, %v619
      %v652 = vsel %vm588, %v468, %v620
      %v653 = vsel %vm589, %v471, %v621
      %v654 = vsel %vm590, %v476, %v622
      %v655 = vsel %vm591, %v479, %v623
      %v656 = vsel %vm592, %v484, %v624
      %v657 = vsel %vm593, %v487, %v625
      %v658 = vsel %vm594, %v492, %v626
      %v659 = vsel %vm595, %v495, %v627
      %v660 = vsel %vm596, %v500, %v628
      %v661 = vsel %vm597, %v503, %v629
      %v662 = vsel %vm598, %v508, %v630
      %v663 = vsel %vm599, %v511, %v631
      %v664 = vsel %vm600, %v516, %v632
      %v665 = vsel %vm601, %v519, %v633
      %v666 = vsel %vm602, %v524, %v634
      %v667 = vsel %vm603, %v527, %v635
      %v668 = vsel %vm604, %v532, %v636
      %v669 = vsel %vm605, %v535, %v637
      %v670 = vsel %vm606, %v540, %v638
      %v671 = vsel %vm607, %v543, %v639
      %v672 = vsel %vm608, %v548, %v640
      %v673 = vsel %vm609, %v551, %v641
      %v674 = vsel %vm610, %v556, %v642
      %v675 = vsel %vm611, %v559, %v643
      %v676 = vsel %vm612, %v564, %v644
      %v677 = vsel %vm613, %v567, %v645
      %v678 = vsel %vm614, %v572, %v646
      %v679 = vsel %vm615, %v575, %v647
      %v680 = vsel %vm616, %v580, %v648
      %v681 = vsel %vm617, %v583, %v649
      %682 = vst [vmem:[%s223] sm:$0xff] %v650
      %683 = vst [vmem:[%s223 + $0x8] sm:$0xff] %v651
      %684 = vst [vmem:[%s223 + $0x10] sm:$0xff] %v652
      %685 = vst [vmem:[%s223 + $0x18] sm:$0xff] %v653
      %686 = vst [vmem:[%s223 + $0x20] sm:$0xff] %v654
      %687 = vst [vmem:[%s223 + $0x28] sm:$0xff] %v655
      %688 = vst [vmem:[%s223 + $0x30] sm:$0xff] %v656
      %689 = vst [vmem:[%s223 + $0x38] sm:$0xff] %v657
      %690 = vst [vmem:[%s223 + $0x40] sm:$0xff] %v658
      %691 = vst [vmem:[%s223 + $0x48] sm:$0xff] %v659
      %692 = vst [vmem:[%s223 + $0x50] sm:$0xff] %v660
      %693 = vst [vmem:[%s223 + $0x58] sm:$0xff] %v661
      %694 = vst [vmem:[%s223 + $0x60] sm:$0xff] %v662
      %695 = vst [vmem:[%s223 + $0x68] sm:$0xff] %v663
      %696 = vst [vmem:[%s223 + $0x70] sm:$0xff] %v664
      %697 = vst [vmem:[%s223 + $0x78] sm:$0xff] %v665
      %698 = vst [vmem:[%s223 + $0x80] sm:$0xff] %v666
      %699 = vst [vmem:[%s223 + $0x88] sm:$0xff] %v667
      %700 = vst [vmem:[%s223 + $0x90] sm:$0xff] %v668
      %701 = vst [vmem:[%s223 + $0x98] sm:$0xff] %v669
      %702 = vst [vmem:[%s223 + $0xa0] sm:$0xff] %v670
      %703 = vst [vmem:[%s223 + $0xa8] sm:$0xff] %v671
      %704 = vst [vmem:[%s223 + $0xb0] sm:$0xff] %v672
      %705 = vst [vmem:[%s223 + $0xb8] sm:$0xff] %v673
      %706 = vst [vmem:[%s223 + $0xc0] sm:$0xff] %v674
      %707 = vst [vmem:[%s223 + $0xc8] sm:$0xff] %v675
      %708 = vst [vmem:[%s223 + $0xd0] sm:$0xff] %v676
      %709 = vst [vmem:[%s223 + $0xd8] sm:$0xff] %v677
      %710 = vst [vmem:[%s223 + $0xe0] sm:$0xff] %v678
      %711 = vst [vmem:[%s223 + $0xe8] sm:$0xff] %v679
      %712 = vst [vmem:[%s223 + $0xf0] sm:$0xff] %v680
      %713 = vst [vmem:[%s223 + $0xf8] sm:$0xff] %v681
      %s714 = smul.u32 32, %s18
      %p715 = scmp.lt.s32.totalorder %s714, 63
      %s716 = scalar_select %p715, %s714, 63
      %p717 = scmp.lt.s32.totalorder %s19, 0
      %s718 = scalar_select %p717, %s19, 0
      %s719 = sadd.s32 %s718, %s716
      %s720 = smul.addr %s719, 8
      %s721 = scalar_lea.vmem %s3, %s720
      // Predicated region
      $region33: #{edgegan_forward.22} parent=31 // pred_check
        %p722 = pneg %p124
      $region34: #{edgegan_forward.22} parent=31 // pred_check_branch
        %724 = sbr.rel (%p722) target = $region36
      $region35: #{edgegan_forward.22} parent=31 // pred_region
        %s725 = smul.u32 32, %s18
      $region36: #{edgegan_forward.22} parent=31 // pred_fallthru
        _
    $region32: #{edgegan_forward.22} parent=5 // pred_fallthru
      _
    %p726 = scmp.le.s32.totalorder 2, %s9
    // Predicated region
    $region37: #{edgegan_forward.22} parent=5 // pred_check
      %p727 = pneg %p726
    $region38: #{edgegan_forward.22} parent=5 // pred_check_branch
      %729 = sbr.rel (%p727) target = $region40
    $region39: #{edgegan_forward.22} parent=5 // pred_region
      %s730 = ssub.s32 %s9, 2
      // Predicated region
      $region41: #{edgegan_forward.22} parent=39 // pred_check
        %p731 = pneg %p130
      $region42: #{edgegan_forward.22} parent=39 // pred_check_branch
        %733 = sbr.rel (%p731) target = $region44
      $region43: #{edgegan_forward.22} parent=39 // pred_region
        %s734 = smul.u32 32, %s20
        %p735 = scmp.lt.s32.totalorder %s734, 63
        %s736 = scalar_select %p735, %s734, 63
        %p737 = scmp.lt.s32.totalorder %s21, 0
        %s738 = scalar_select %p737, %s21, 0
        %s739 = sadd.s32 %s738, %s736
        %s740 = smul.addr %s739, 8
        %s741 = scalar_lea.vmem %s3, %s740
      $region44: #{edgegan_forward.22} parent=39 // pred_fallthru
        _
    $region40: #{edgegan_forward.22} parent=5 // pred_fallthru
      _
  $region6: #{edgegan_forward.22} parent=0 // loop_footer
    %s13 = sadd.s32 1, %s9
  $region7: #{edgegan_forward.22} parent=0 // loop_footer_branch
    %8 = sbr.rel target = $region3
  $region8: #{edgegan_forward.22} parent=0 // loop_exit
    _

// kernel: edgegan_forward.24
$region0: #{edgegan_forward.24}
  #allocation0 [shape = 'u32[]', space=smem, size = 0x4, offset = 0x4, fixed_abs, tag = 'smem constant byte address 0x4 - core index']
  #allocation1 [shape = 'u32[144,128]{1,0:T(1,128)}', space=vmem, size = 0x12000, scoped, tag = 'internal scratch']
  %s0 = inlined_call_operand.vmem [shape: bf16[8,512], index: 0, kind: input, shape index: {}]
  %s1 = inlined_call_operand.vmem [shape: bf16[512,128], index: 1, kind: input, shape index: {}]
  %s2 = inlined_call_operand.vmem [shape: f32[1,128], index: 2, kind: input, shape index: {}]
  %s3 = inlined_call_operand.vmem [shape: f32[8,128], index: 3, kind: output, shape index: {}]
  %s4 = sld [smem:[#allocation0]]
  $region22: #{edgegan_forward.24} parent=0
    _
  %s6 = ssub.s32 1, %s4
  %s7 = scalar_select 0, %s6, %s4
  // Predicated region
  $region2: #{edgegan_forward.24} parent=0 // pred_check
    _
  $region3: #{edgegan_forward.24} parent=0 // pred_check_branch
    %9 = sbr.rel (0) target = $region5
  $region4: #{edgegan_forward.24} parent=0 // pred_region
    _
  $region5: #{edgegan_forward.24} parent=0 // pred_fallthru
    _
  // Predicated region
  $region6: #{edgegan_forward.24} parent=0 // pred_check
    _
  $region7: #{edgegan_forward.24} parent=0 // pred_check_branch
    %11 = sbr.rel (0) target = $region9
  $region8: #{edgegan_forward.24} parent=0 // pred_region
    _
  $region9: #{edgegan_forward.24} parent=0 // pred_fallthru
    _
  // Predicated region
  $region10: #{edgegan_forward.24} parent=0 // pred_check
    _
  $region11: #{edgegan_forward.24} parent=0 // pred_check_branch
    %13 = sbr.rel (0) target = $region13
  $region12: #{edgegan_forward.24} parent=0 // pred_region
    _
  $region13: #{edgegan_forward.24} parent=0 // pred_fallthru
    _
  %v15 = vld [vmem:[%s0] sm:$0xff]
  %v16 = vld [vmem:[%s0 + $0x8] sm:$0xff]
  %v17 = vld [vmem:[%s1] sm:$0xf]
  %v18 = vld [vmem:[%s1 + $0x4] sm:$0xf]
  %v19 = vld [vmem:[%s1 + $0x8] sm:$0xf]
  %v20 = vld [vmem:[%s1 + $0xc] sm:$0xf]
  %v21 = vld [vmem:[%s1 + $0x10] sm:$0xf]
  %v22 = vld [vmem:[%s1 + $0x14] sm:$0xf]
  %v23 = vld [vmem:[%s1 + $0x18] sm:$0xf]
  %v24 = vld [vmem:[%s1 + $0x1c] sm:$0xf]
  %v25 = vld [vmem:[%s1 + $0x20] sm:$0xf]
  %v26 = vld [vmem:[%s1 + $0x24] sm:$0xf]
  %v27 = vld [vmem:[%s1 + $0x28] sm:$0xf]
  %v28 = vld [vmem:[%s1 + $0x2c] sm:$0xf]
  %v29 = vld [vmem:[%s1 + $0x30] sm:$0xf]
  %v30 = vld [vmem:[%s1 + $0x34] sm:$0xf]
  %v31 = vld [vmem:[%s1 + $0x38] sm:$0xf]
  %v32 = vld [vmem:[%s1 + $0x3c] sm:$0xf]
  %v33 = vld [vmem:[%s1 + $0x40] sm:$0xf]
  %v34 = vld [vmem:[%s1 + $0x44] sm:$0xf]
  %v35 = vld [vmem:[%s1 + $0x48] sm:$0xf]
  %v36 = vld [vmem:[%s1 + $0x4c] sm:$0xf]
  %v37 = vld [vmem:[%s1 + $0x50] sm:$0xf]
  %v38 = vld [vmem:[%s1 + $0x54] sm:$0xf]
  %v39 = vld [vmem:[%s1 + $0x58] sm:$0xf]
  %v40 = vld [vmem:[%s1 + $0x5c] sm:$0xf]
  %v41 = vld [vmem:[%s1 + $0x60] sm:$0xf]
  %v42 = vld [vmem:[%s1 + $0x64] sm:$0xf]
  %v43 = vld [vmem:[%s1 + $0x68] sm:$0xf]
  %v44 = vld [vmem:[%s1 + $0x6c] sm:$0xf]
  %v45 = vld [vmem:[%s1 + $0x70] sm:$0xf]
  %v46 = vld [vmem:[%s1 + $0x74] sm:$0xf]
  %v47 = vld [vmem:[%s1 + $0x78] sm:$0xf]
  %v48 = vld [vmem:[%s1 + $0x7c] sm:$0xf]
  %v49 = vld [vmem:[%s1 + $0x80] sm:$0xf]
  %v50 = vld [vmem:[%s1 + $0x84] sm:$0xf]
  %v51 = vld [vmem:[%s1 + $0x88] sm:$0xf]
  %v52 = vld [vmem:[%s1 + $0x8c] sm:$0xf]
  %v53 = vld [vmem:[%s1 + $0x90] sm:$0xf]
  %v54 = vld [vmem:[%s1 + $0x94] sm:$0xf]
  %v55 = vld [vmem:[%s1 + $0x98] sm:$0xf]
  %v56 = vld [vmem:[%s1 + $0x9c] sm:$0xf]
  %v57 = vld [vmem:[%s1 + $0xa0] sm:$0xf]
  %v58 = vld [vmem:[%s1 + $0xa4] sm:$0xf]
  %v59 = vld [vmem:[%s1 + $0xa8] sm:$0xf]
  %v60 = vld [vmem:[%s1 + $0xac] sm:$0xf]
  %v61 = vld [vmem:[%s1 + $0xb0] sm:$0xf]
  %v62 = vld [vmem:[%s1 + $0xb4] sm:$0xf]
  %v63 = vld [vmem:[%s1 + $0xb8] sm:$0xf]
  %v64 = vld [vmem:[%s1 + $0xbc] sm:$0xf]
  %v65 = vld [vmem:[%s1 + $0xc0] sm:$0xf]
  %v66 = vld [vmem:[%s1 + $0xc4] sm:$0xf]
  %v67 = vld [vmem:[%s1 + $0xc8] sm:$0xf]
  %v68 = vld [vmem:[%s1 + $0xcc] sm:$0xf]
  %v69 = vld [vmem:[%s1 + $0xd0] sm:$0xf]
  %v70 = vld [vmem:[%s1 + $0xd4] sm:$0xf]
  %v71 = vld [vmem:[%s1 + $0xd8] sm:$0xf]
  %v72 = vld [vmem:[%s1 + $0xdc] sm:$0xf]
  %v73 = vld [vmem:[%s1 + $0xe0] sm:$0xf]
  %v74 = vld [vmem:[%s1 + $0xe4] sm:$0xf]
  %v75 = vld [vmem:[%s1 + $0xe8] sm:$0xf]
  %v76 = vld [vmem:[%s1 + $0xec] sm:$0xf]
  %v77 = vld [vmem:[%s1 + $0xf0] sm:$0xf]
  %v78 = vld [vmem:[%s1 + $0xf4] sm:$0xf]
  %v79 = vld [vmem:[%s1 + $0xf8] sm:$0xf]
  %v80 = vld [vmem:[%s1 + $0xfc] sm:$0xf]
  %v81 = vld [vmem:[%s2] sm:$0x1]
  %v83 = vlaneseq
  %v84 = vshrl.u32 %v83, 7
  %v85 = vsub.s32 0, %v84
  %v86 = vrot.slane %v81, %v85
  %v90 = vunpack.c.l.b16 %v15
  %v91 = vunpack.c.h.b16 %v15
  %v92 = vunpack.c.l.b16 %v16
  %v93 = vunpack.c.h.b16 %v16
  %v94 = vpack.c.b16 %v90, %v90
  %v95 = vpack.c.b16 %v91, %v91
  %v96 = vpack.c.b16 %v92, %v92
  %v97 = vpack.c.b16 %v93, %v93
  %v166 = vunpack.c.l.b16 %v17
  %v167 = vunpack.c.l.b16 %v18
  %v168 = vunpack.c.l.b16 %v19
  %v169 = vunpack.c.l.b16 %v20
  %v170 = vunpack.c.l.b16 %v21
  %v171 = vunpack.c.l.b16 %v22
  %v172 = vunpack.c.l.b16 %v23
  %v173 = vunpack.c.l.b16 %v24
  %v174 = vunpack.c.l.b16 %v25
  %v175 = vunpack.c.l.b16 %v26
  %v176 = vunpack.c.l.b16 %v27
  %v177 = vunpack.c.l.b16 %v28
  %v178 = vunpack.c.l.b16 %v29
  %v179 = vunpack.c.l.b16 %v30
  %v180 = vunpack.c.l.b16 %v31
  %v181 = vunpack.c.l.b16 %v32
  %v182 = vunpack.c.l.b16 %v33
  %v183 = vunpack.c.l.b16 %v34
  %v184 = vunpack.c.l.b16 %v35
  %v185 = vunpack.c.l.b16 %v36
  %v186 = vunpack.c.l.b16 %v37
  %v187 = vunpack.c.l.b16 %v38
  %v188 = vunpack.c.l.b16 %v39
  %v189 = vunpack.c.l.b16 %v40
  %v190 = vunpack.c.l.b16 %v41
  %v191 = vunpack.c.l.b16 %v42
  %v192 = vunpack.c.l.b16 %v43
  %v193 = vunpack.c.l.b16 %v44
  %v194 = vunpack.c.l.b16 %v45
  %v195 = vunpack.c.l.b16 %v46
  %v196 = vunpack.c.l.b16 %v47
  %v197 = vunpack.c.l.b16 %v48
  %v198 = vunpack.c.l.b16 %v49
  %v199 = vunpack.c.l.b16 %v50
  %v200 = vunpack.c.l.b16 %v51
  %v201 = vunpack.c.l.b16 %v52
  %v202 = vunpack.c.l.b16 %v53
  %v203 = vunpack.c.l.b16 %v54
  %v204 = vunpack.c.l.b16 %v55
  %v205 = vunpack.c.l.b16 %v56
  %v206 = vunpack.c.l.b16 %v57
  %v207 = vunpack.c.l.b16 %v58
  %v208 = vunpack.c.l.b16 %v59
  %v209 = vunpack.c.l.b16 %v60
  %v210 = vunpack.c.l.b16 %v61
  %v211 = vunpack.c.l.b16 %v62
  %v212 = vunpack.c.l.b16 %v63
  %v213 = vunpack.c.l.b16 %v64
  %v214 = vunpack.c.l.b16 %v65
  %v215 = vunpack.c.l.b16 %v66
  %v216 = vunpack.c.l.b16 %v67
  %v217 = vunpack.c.l.b16 %v68
  %v218 = vunpack.c.l.b16 %v69
  %v219 = vunpack.c.l.b16 %v70
  %v220 = vunpack.c.l.b16 %v71
  %v221 = vunpack.c.l.b16 %v72
  %v222 = vunpack.c.l.b16 %v73
  %v223 = vunpack.c.l.b16 %v74
  %v224 = vunpack.c.l.b16 %v75
  %v225 = vunpack.c.l.b16 %v76
  %v226 = vunpack.c.l.b16 %v77
  %v227 = vunpack.c.l.b16 %v78
  %v228 = vunpack.c.l.b16 %v79
  %v229 = vunpack.c.l.b16 %v80
  %v230 = vpack.c.b16 %v167, %v166
  %v231 = vpack.c.b16 %v169, %v168
  %v232 = vpack.c.b16 %v171, %v170
  %v233 = vpack.c.b16 %v173, %v172
  %v234 = vpack.c.b16 %v175, %v174
  %v235 = vpack.c.b16 %v177, %v176
  %v236 = vpack.c.b16 %v179, %v178
  %v237 = vpack.c.b16 %v181, %v180
  %v238 = vpack.c.b16 %v183, %v182
  %v239 = vpack.c.b16 %v185, %v184
  %v240 = vpack.c.b16 %v187, %v186
  %v241 = vpack.c.b16 %v189, %v188
  %v242 = vpack.c.b16 %v191, %v190
  %v243 = vpack.c.b16 %v193, %v192
  %v244 = vpack.c.b16 %v195, %v194
  %v245 = vpack.c.b16 %v197, %v196
  %v246 = vpack.c.b16 %v199, %v198
  %v247 = vpack.c.b16 %v201, %v200
  %v248 = vpack.c.b16 %v203, %v202
  %v249 = vpack.c.b16 %v205, %v204
  %v250 = vpack.c.b16 %v207, %v206
  %v251 = vpack.c.b16 %v209, %v208
  %v252 = vpack.c.b16 %v211, %v210
  %v253 = vpack.c.b16 %v213, %v212
  %v254 = vpack.c.b16 %v215, %v214
  %v255 = vpack.c.b16 %v217, %v216
  %v256 = vpack.c.b16 %v219, %v218
  %v257 = vpack.c.b16 %v221, %v220
  %v258 = vpack.c.b16 %v223, %v222
  %v259 = vpack.c.b16 %v225, %v224
  %v260 = vpack.c.b16 %v227, %v226
  %v261 = vpack.c.b16 %v229, %v228
  %294 = vmatprep.subr.bf16.mxu0 0
  %295 = vmatpush1.bf16.msra.mxu0 %v237
  %296 = vmatprep.subr.bf16.mxu0 0
  %297 = vmatpush1.bf16.msra.mxu0 %v236
  %298 = vmatprep.subr.bf16.mxu0 0
  %299 = vmatpush1.bf16.msra.mxu0 %v235
  %300 = vmatprep.subr.bf16.mxu0 0
  %301 = vmatpush1.bf16.msra.mxu0 %v234
  %302 = vmatprep.subr.bf16.mxu0 0
  %303 = vmatpush1.bf16.msra.mxu0 %v233
  %304 = vmatprep.subr.bf16.mxu0 0
  %305 = vmatpush1.bf16.msra.mxu0 %v232
  %306 = vmatprep.subr.bf16.mxu0 0
  %307 = vmatpush1.bf16.msra.mxu0 %v231
  %308 = vmatprep.subr.bf16.mxu0 0
  %309 = vmatpush1.bf16.msra.mxu0 %v230
  %310 = vmatprep.subr.bf16.mxu0 0
  %311 = vmatpush2.bf16.msra.mxu0 %v245
  %312 = vmatprep.subr.bf16.mxu0 0
  %313 = vmatpush2.bf16.msra.mxu0 %v244
  %314 = vmatprep.subr.bf16.mxu0 0
  %315 = vmatpush2.bf16.msra.mxu0 %v243
  %316 = vmatprep.subr.bf16.mxu0 0
  %317 = vmatpush2.bf16.msra.mxu0 %v242
  %318 = vmatprep.subr.bf16.mxu0 0
  %319 = vmatpush2.bf16.msra.mxu0 %v241
  %320 = vmatprep.subr.bf16.mxu0 0
  %321 = vmatpush2.bf16.msra.mxu0 %v240
  %322 = vmatprep.subr.bf16.mxu0 0
  %323 = vmatpush2.bf16.msra.mxu0 %v239
  %324 = vmatprep.subr.bf16.mxu0 0
  %325 = vmatpush2.bf16.msra.mxu0 %v238
  %326 = vmatprep.mubr.bf16.mxu0 %v95
  %327 = vmatmul.mubr.bf16.gmra.mxu0 %v94
  %v328 = vpop.f32.mrf.mxu0
  %v329 = vadd.f32 %v86, %v328
  %v330 = vpop.f32.mrf.mxu0
  %v331 = vpop.f32.mrf.mxu0
  %v332 = vpop.f32.mrf.mxu0
  %333 = vdwg.mxu0
  %334 = vmatprep.subr.bf16.mxu0 0
  %335 = vmatpush1.bf16.msra.mxu0 %v253
  %336 = vmatprep.subr.bf16.mxu0 0
  %337 = vmatpush1.bf16.msra.mxu0 %v252
  %338 = vmatprep.subr.bf16.mxu0 0
  %339 = vmatpush1.bf16.msra.mxu0 %v251
  %340 = vmatprep.subr.bf16.mxu0 0
  %341 = vmatpush1.bf16.msra.mxu0 %v250
  %342 = vmatprep.subr.bf16.mxu0 0
  %343 = vmatpush1.bf16.msra.mxu0 %v249
  %344 = vmatprep.subr.bf16.mxu0 0
  %345 = vmatpush1.bf16.msra.mxu0 %v248
  %346 = vmatprep.subr.bf16.mxu0 0
  %347 = vmatpush1.bf16.msra.mxu0 %v247
  %348 = vmatprep.subr.bf16.mxu0 0
  %349 = vmatpush1.bf16.msra.mxu0 %v246
  %350 = vmatprep.subr.bf16.mxu0 0
  %351 = vmatpush2.bf16.msra.mxu0 %v261
  %352 = vmatprep.subr.bf16.mxu0 0
  %353 = vmatpush2.bf16.msra.mxu0 %v260
  %354 = vmatprep.subr.bf16.mxu0 0
  %355 = vmatpush2.bf16.msra.mxu0 %v259
  %356 = vmatprep.subr.bf16.mxu0 0
  %357 = vmatpush2.bf16.msra.mxu0 %v258
  %358 = vmatprep.subr.bf16.mxu0 0
  %359 = vmatpush2.bf16.msra.mxu0 %v257
  %360 = vmatprep.subr.bf16.mxu0 0
  %361 = vmatpush2.bf16.msra.mxu0 %v256
  %362 = vmatprep.subr.bf16.mxu0 0
  %363 = vmatpush2.bf16.msra.mxu0 %v255
  %364 = vmatprep.subr.bf16.mxu0 0
  %365 = vmatpush2.bf16.msra.mxu0 %v254
  %366 = vmatprep.mubr.bf16.mxu0 %v97
  %367 = vmatmul.mubr.bf16.gmra.mxu0 %v96
  %v368 = vpop.f32.mrf.mxu0
  %v369 = vadd.f32 %v329, %v368
  %v370 = vpop.f32.mrf.mxu0
  %v371 = vpop.f32.mrf.mxu0
  %v372 = vpop.f32.mrf.mxu0
  %373 = vdwg.mxu0
  %374 = vst [vmem:[%s3] sm:$0xff] %v369
  // Predicated region
  $region14: #{edgegan_forward.24} parent=0 // pred_check
    _
  $region15: #{edgegan_forward.24} parent=0 // pred_check_branch
    %376 = sbr.rel (0) target = $region17
  $region16: #{edgegan_forward.24} parent=0 // pred_region
    _
  $region17: #{edgegan_forward.24} parent=0 // pred_fallthru
    _
  // Predicated region
  $region18: #{edgegan_forward.24} parent=0 // pred_check
    _
  $region19: #{edgegan_forward.24} parent=0 // pred_check_branch
    %378 = sbr.rel (0) target = $region21
  $region20: #{edgegan_forward.24} parent=0 // pred_region
    _
  $region21: #{edgegan_forward.24} parent=0 // pred_fallthru
    _

</llo_original>
